<compile_context>
chip_gen: v6e
topology: v6e:2x2x1
jax: 0.10.0
libtpu: 0.0.40
codegen_flags: <defaults>
</compile_context>

<pallas_src>
import math
from functools import partial

import jax
import jax.numpy as jnp
from jax.experimental import pallas as pl
from jax.experimental.pallas import tpu as pltpu


# ----------------------------- in-kernel helpers -----------------------------

def _layernorm(x, g, b, eps=1e-5):
    mu = jnp.mean(x, axis=-1, keepdims=True)
    var = jnp.mean((x - mu) ** 2, axis=-1, keepdims=True)
    return (x - mu) * jax.lax.rsqrt(var + eps) * g + b


def _gelu(x):
    # TODO(synk): tanh-approximate GELU; the pretrained tower may use exact
    # GELU / QuickGELU, which differs by a small systematic amount.
    return 0.5 * x * (1.0 + jnp.tanh(0.7978845608028654 * (x + 0.044715 * x * x * x)))


def _dot_bf16(a, b):
    """(M,K) @ (K,N) on the MXU with bf16 operands, f32 accumulation."""
    return jnp.dot(a.astype(jnp.bfloat16), b.astype(jnp.bfloat16),
                   preferred_element_type=jnp.float32)


def _dot_nt_bf16(a, b):
    """(M,K) x (N,K) -> (M,N): contraction on last axis of both (no explicit .T)."""
    return jax.lax.dot_general(
        a.astype(jnp.bfloat16), b.astype(jnp.bfloat16),
        dimension_numbers=(((1,), (1,)), ((), ())),
        preferred_element_type=jnp.float32)


def _vmem_limit_bytes():
    """Per-generation VMEM budget with ~25% headroom (64 MiB v7x, 128 MiB v5e/v6e)."""
    cap = 64 * 1024 * 1024
    try:
        info = pltpu.get_tpu_info()
        cap = int(getattr(info, "vmem_capacity_bytes", cap))
    except Exception:
        pass
    return min((cap * 3) // 4, 100 * 1024 * 1024)


# ------------------------- fused text-tower kernel ---------------------------
# grid = (B//BT, L); axis 0 (batch blocks) is "parallel", axis 1 (layers) is
# "arbitrary".  The flattened (BT*SP, D) activation lives in a VMEM scratch
# across the whole layer axis; weights are streamed once per batch block.

def fused_tower_kernel(x_ref,
                       ln1g_ref, ln1b_ref, wqkv_ref, bqkv_ref, wo_ref, bo_ref,
                       ln2g_ref, ln2b_ref, w1_ref, b1_ref, w2_ref, b2_ref,
                       lnfg_ref, lnfb_ref, proj_ref,
                       out_ref,
                       act_ref, qkv_ref, mask_ref,
                       *, num_heads, cls_pos, bt, sp):
    l = pl.program_id(1)
    num_layers = pl.num_programs(1)
    M, D = act_ref.shape                               # M = bt * sp
    H = num_heads
    dh = D // H

    @pl.when(l == 0)
    def _():
        # Load the batch block's activations once and build the causal additive
        # mask once (reused by every layer); padding rows are inert under it.
        act_ref[...] = x_ref[...]
        row = jax.lax.broadcasted_iota(jnp.int32, (sp, sp), 0)
        col = jax.lax.broadcasted_iota(jnp.int32, (sp, sp), 1)
        mask_ref[...] = jnp.where(col <= row, 0.0, -1e30).astype(jnp.float32)

    x = act_ref[...]                                   # (M, D) f32

    # ---------------- pre-LN causal multi-head self-attention ----------------
    # One big QKV GEMM over the flattened batch block (M = bt*sp rows), staged
    # to a bf16 VMEM scratch (bounds live ranges; MXU feeds are bf16 anyway).
    # The 1/sqrt(dh) scale is already folded into the Q weights/bias.
    h = _layernorm(x, ln1g_ref[0, 0], ln1b_ref[0, 0])
    qkv_ref[...] = (_dot_bf16(h, wqkv_ref[0]) + bqkv_ref[0, 0]).astype(jnp.bfloat16)

    mask = mask_ref[...]
    bo = bo_ref[0, 0]
    for t in range(bt):                                # per-sequence attention
        r0 = t * sp
        acc = jnp.zeros((sp, D), jnp.float32)          # W_O-projected accumulator
        for hi in range(H):
            # TODO(synk): per-head lane slices (dh < 128) are masked VMEM loads
            # from the qkv scratch; a single aligned head-major relayout per
            # layer would remove the remaining lane shuffles.
            q_h = qkv_ref[r0:r0 + sp, hi * dh:(hi + 1) * dh]                # (sp, dh)
            k_h = qkv_ref[r0:r0 + sp, D + hi * dh:D + (hi + 1) * dh]
            v_h = qkv_ref[r0:r0 + sp, 2 * D + hi * dh:2 * D + (hi + 1) * dh]

            s = _dot_nt_bf16(q_h, k_h) + mask                               # (sp, sp)
            s = s - jnp.max(s, axis=-1, keepdims=True)
            p = jnp.exp(s)
            p = p * pl.reciprocal(jnp.sum(p, axis=-1, keepdims=True), approx=True)
            o_h = _dot_bf16(p, v_h)                                         # (sp, dh)
            # Accumulate through the matching rows of W_O: no head concat, no
            # H live head outputs.
            acc = acc + _dot_bf16(o_h, wo_ref[0, hi * dh:(hi + 1) * dh, :])
        act_ref[r0:r0 + sp, :] = x[r0:r0 + sp, :] + acc + bo                # residual 1

    # ------------------------------ pre-LN MLP --------------------------------
    x = act_ref[...]
    h = _layernorm(x, ln2g_ref[0, 0], ln2b_ref[0, 0])
    h = _dot_bf16(h, w1_ref[0]) + b1_ref[0, 0]
    h = _gelu(h)
    h = _dot_bf16(h, w2_ref[0]) + b2_ref[0, 0]
    x = x + h                                          # residual 2

    @pl.when(l < num_layers - 1)
    def _():
        act_ref[...] = x                               # skip store on last layer

    # --------------- fused pool + final LN + projection + L2 ------------------
    @pl.when(l == num_layers - 1)
    def _():
        for t in range(bt):
            pooled = x[t * sp + cls_pos: t * sp + cls_pos + 1, :]   # CLS row (1, D)
            hh = _layernorm(pooled, lnfg_ref[...], lnfb_ref[...])
            y = _dot_bf16(hh, proj_ref[...])                        # (1, E)
            y = y * jax.lax.rsqrt(jnp.sum(y * y, axis=-1, keepdims=True) + 1e-12)
            out_ref[t] = y


def conch_text_tower(x, lp, head, *, heads, cls_pos, batch_block=None):
    """x: (B, SP, D) f32 padded activations; lp: stacked per-layer params."""
    B, SP, D = x.shape
    L = lp['wqkv'].shape[0]
    F = lp['w1'].shape[2]
    E = head['proj'].shape[1]
    dh = D // heads

    # Batch blocking: amortize weight streaming over BT sequences and raise the
    # GEMM M dimension toward 256 (fills v6e/v7x's 256-row MXU).
    if batch_block is None:
        batch_block = max(1, 256 // SP)
    BT = max(1, min(batch_block, B))
    Bp = pl.cdiv(B, BT) * BT
    if Bp > B:
        x = jnp.pad(x, ((0, Bp - B), (0, 0), (0, 0)))
    xf = x.reshape(Bp * SP, D)                         # flattened residual stream

    # Fold the 1/sqrt(dh) attention scale into the Q columns of the QKV
    # weights/bias (saves per-layer SP*SP score scaling in the kernel).
    scale = 1.0 / math.sqrt(dh)
    wqkv = lp['wqkv'].at[:, :, :D].multiply(scale)
    bqkv = lp['bqkv'].at[:, :, :D].multiply(scale)

    vmem_limit = _vmem_limit_bytes()
    wdepth = 3 if vmem_limit >= 90 * 1024 * 1024 else 2   # deeper prefetch on v5e/v6e

    lmap = lambda b, l: (l, 0, 0)      # per-layer stacked weights
    cmap = lambda b, l: (0, 0)         # layer-invariant head weights

    def mat_spec(m, n, depth=2):
        if depth > 2:
            try:
                return pl.BlockSpec((1, m, n), lmap, pipeline_mode=pl.Buffered(depth))
            except Exception:
                pass
        return pl.BlockSpec((1, m, n), lmap)

    vec_spec = lambda n: pl.BlockSpec((1, 1, n), lmap)

    out = pl.pallas_call(
        partial(fused_tower_kernel, num_heads=heads, cls_pos=cls_pos, bt=BT, sp=SP),
        out_shape=jax.ShapeDtypeStruct((Bp, 1, E), jnp.float32),
        grid=(Bp // BT, L),
        in_specs=[
            pl.BlockSpec((BT * SP, D), lambda b, l: (b, 0)),    # activations (flat)
            vec_spec(D), vec_spec(D),                           # ln1 gamma/beta
            mat_spec(D, 3 * D, wdepth), vec_spec(3 * D),        # qkv
            mat_spec(D, D), vec_spec(D),                        # out proj
            vec_spec(D), vec_spec(D),                           # ln2 gamma/beta
            mat_spec(D, F, wdepth), vec_spec(F),                # mlp fc
            mat_spec(F, D, wdepth), vec_spec(D),                # mlp proj
            pl.BlockSpec((1, D), cmap),                         # final ln gamma
            pl.BlockSpec((1, D), cmap),                         # final ln beta
            pl.BlockSpec((D, E), cmap),                         # text projection
        ],
        out_specs=pl.BlockSpec((BT, 1, E), lambda b, l: (b, 0, 0)),
        scratch_shapes=[pltpu.VMEM((BT * SP, D), jnp.float32),      # residual stream
                        pltpu.VMEM((BT * SP, 3 * D), jnp.bfloat16), # staged qkv
                        pltpu.VMEM((SP, SP), jnp.float32)],         # causal mask bias
        compiler_params=pltpu.CompilerParams(
            dimension_semantics=("parallel", "arbitrary"),
            vmem_limit_bytes=vmem_limit),
    )(xf,
      lp['ln1_g'], lp['ln1_b'], wqkv, bqkv, lp['wo'], lp['bo'],
      lp['ln2_g'], lp['ln2_b'], lp['w1'], lp['b1'], lp['w2'], lp['b2'],
      head['lnf_g'], head['lnf_b'], head['proj'])
    return out[:B, 0, :]


# ------------------------------ full text encoder -----------------------------

def init_params(key, *, vocab, ctx, D, layers, mlp, E):
    ks = iter(jax.random.split(key, 16))
    def nrm(k, shape, s, dt=jnp.float32):
        return (jax.random.normal(k, shape, jnp.float32) * s).astype(dt)
    return {
        'tok_emb': nrm(next(ks), (vocab, D), 0.02),
        'pos_emb': nrm(next(ks), (ctx, D), 0.01),
        'cls_emb': nrm(next(ks), (1, 1, D), 0.02),
        'head': {
            'lnf_g': jnp.ones((1, D), jnp.float32),
            'lnf_b': jnp.zeros((1, D), jnp.float32),
            'proj': nrm(next(ks), (D, E), D ** -0.5, jnp.bfloat16),
        },
        # per-layer weights stacked along a leading [L] axis; matrices in bf16
        'layers': {
            'ln1_g': jnp.ones((layers, 1, D), jnp.float32),
            'ln1_b': jnp.zeros((layers, 1, D), jnp.float32),
            'wqkv':  nrm(next(ks), (layers, D, 3 * D), D ** -0.5, jnp.bfloat16),
            'bqkv':  jnp.zeros((layers, 1, 3 * D), jnp.float32),
            'wo':    nrm(next(ks), (layers, D, D), D ** -0.5, jnp.bfloat16),
            'bo':    jnp.zeros((layers, 1, D), jnp.float32),
            'ln2_g': jnp.ones((layers, 1, D), jnp.float32),
            'ln2_b': jnp.zeros((layers, 1, D), jnp.float32),
            'w1':    nrm(next(ks), (layers, D, mlp), D ** -0.5, jnp.bfloat16),
            'b1':    jnp.zeros((layers, 1, mlp), jnp.float32),
            'w2':    nrm(next(ks), (layers, mlp, D), mlp ** -0.5, jnp.bfloat16),
            'b2':    jnp.zeros((layers, 1, D), jnp.float32),
        },
    }


def conch_encode_text(tokens, params, *, heads, batch_block=None):
    """tokens: [B, S] int32 token ids  ->  [B, E] L2-normalized text embedding."""
    B, S = tokens.shape
    D = params['tok_emb'].shape[1]
    # Glue (pure JAX): embedding gather + positional add + append learned CLS.
    x = jnp.take(params['tok_emb'], tokens, axis=0)            # (B, S, D)
    x = x + params['pos_emb'][None, :S, :]
    cls = jnp.broadcast_to(params['cls_emb'], (B, 1, D))
    # NOTE: CLS is appended after the positional add (matches the reference
    # CoCa-style tower wrapped by ConchEmbedder); pooling takes the CLS row.
    x = jnp.concatenate([x, cls], axis=1).astype(jnp.float32)  # (B, S+1, D)
    cls_pos = S                                                # CLS row index
    # Pad sequence to a multiple of 16 (bf16 sublane packing); the causal mask
    # keeps padding rows from influencing valid positions.
    SP = ((S + 1 + 15) // 16) * 16
    if SP > S + 1:
        x = jnp.pad(x, ((0, 0), (0, SP - (S + 1)), (0, 0)))
    return conch_text_tower(x, params['layers'], params['head'],
                            heads=heads, cls_pos=cls_pos, batch_block=batch_block)


# ------------------------------------ main ------------------------------------

if __name__ == "__main__":
    # Small, CONCH-consistent (but scaled-down) config.
    B, S = 4, 8          # batch of texts, token context length
    VOCAB = 64
    D, HEADS, LAYERS = 128, 4, 2
    MLP = 4 * D
    E = 64               # projected text-embedding dim

    key = jax.random.PRNGKey(0)
    kp, kt = jax.random.split(key)
    params = init_params(kp, vocab=VOCAB, ctx=S, D=D, layers=LAYERS, mlp=MLP, E=E)
    tokens = jax.random.randint(kt, (B, S), 0, VOCAB, dtype=jnp.int32)

    # batch_block=2 -> 2 sequences share each streamed weight block, and the
    # "parallel" batch-block axis still has 2 iterations (both v7x TCs busy).
    encode = jax.jit(lambda t: conch_encode_text(t, params, heads=HEADS, batch_block=2))
    emb = jax.block_until_ready(encode(tokens))

    assert emb.shape == (B, E) and emb.dtype == jnp.float32
    norms = jnp.linalg.norm(emb, axis=-1)
    assert bool(jnp.all(jnp.abs(norms - 1.0) < 1e-4))   # L2-normalized output
    print("KERNEL_OK")
</pallas_src>

<mosaic_0001>
module attributes {stable_mosaic.version = 11 : i64} {
  func.func @fused_tower_kernel(%arg0: i32, %arg1: i32, %arg2: memref<32x128xf32, #tpu.memory_space<vmem>>, %arg3: memref<1x1x128xf32, #tpu.memory_space<vmem>>, %arg4: memref<1x1x128xf32, #tpu.memory_space<vmem>>, %arg5: memref<1x128x384xbf16, #tpu.memory_space<vmem>>, %arg6: memref<1x1x384xf32, #tpu.memory_space<vmem>>, %arg7: memref<1x128x128xbf16, #tpu.memory_space<vmem>>, %arg8: memref<1x1x128xf32, #tpu.memory_space<vmem>>, %arg9: memref<1x1x128xf32, #tpu.memory_space<vmem>>, %arg10: memref<1x1x128xf32, #tpu.memory_space<vmem>>, %arg11: memref<1x128x512xbf16, #tpu.memory_space<vmem>>, %arg12: memref<1x1x512xf32, #tpu.memory_space<vmem>>, %arg13: memref<1x512x128xbf16, #tpu.memory_space<vmem>>, %arg14: memref<1x1x128xf32, #tpu.memory_space<vmem>>, %arg15: memref<1x128xf32, #tpu.memory_space<vmem>>, %arg16: memref<1x128xf32, #tpu.memory_space<vmem>>, %arg17: memref<128x64xbf16, #tpu.memory_space<vmem>>, %arg18: memref<2x1x64xf32, #tpu.memory_space<vmem>>, %arg19: memref<32x128xf32, #tpu.memory_space<vmem>>, %arg20: memref<32x384xbf16, #tpu.memory_space<vmem>>, %arg21: memref<16x16xf32, #tpu.memory_space<vmem>>) attributes {dimension_semantics = [#tpu.dimension_semantics<parallel>, #tpu.dimension_semantics<arbitrary>], iteration_bounds = array<i64: 2, 2>, scalar_prefetch = 0 : i64, scratch_operands = 3 : i64, tpu.core_type = #tpu.core_type<tc>, window_params = [{transform_indices = @transform_0, window_bounds = array<i64: 32, 128>}, {transform_indices = @transform_1, window_bounds = array<i64: 1, 1, 128>}, {transform_indices = @transform_2, window_bounds = array<i64: 1, 1, 128>}, {transform_indices = @transform_3, window_bounds = array<i64: 1, 128, 384>}, {transform_indices = @transform_4, window_bounds = array<i64: 1, 1, 384>}, {transform_indices = @transform_5, window_bounds = array<i64: 1, 128, 128>}, {transform_indices = @transform_6, window_bounds = array<i64: 1, 1, 128>}, {transform_indices = @transform_7, window_bounds = array<i64: 1, 1, 128>}, {transform_indices = @transform_8, window_bounds = array<i64: 1, 1, 128>}, {transform_indices = @transform_9, window_bounds = array<i64: 1, 128, 512>}, {transform_indices = @transform_10, window_bounds = array<i64: 1, 1, 512>}, {transform_indices = @transform_11, window_bounds = array<i64: 1, 512, 128>}, {transform_indices = @transform_12, window_bounds = array<i64: 1, 1, 128>}, {pipeline_mode = #tpu.pipeline_mode<synchronous>, transform_indices = @transform_13, window_bounds = array<i64: 1, 128>}, {pipeline_mode = #tpu.pipeline_mode<synchronous>, transform_indices = @transform_14, window_bounds = array<i64: 1, 128>}, {pipeline_mode = #tpu.pipeline_mode<synchronous>, transform_indices = @transform_15, window_bounds = array<i64: 128, 64>}, {transform_indices = @transform_16, window_bounds = array<i64: 2, 1, 64>}]} {
    %c0_i32 = arith.constant 0 : i32
    %0 = arith.cmpi eq, %arg1, %c0_i32 : i32
    %1 = arith.extui %0 : i1 to i32
    %c0_i32_0 = arith.constant 0 : i32
    %2 = arith.cmpi ne, %1, %c0_i32_0 : i32
    scf.if %2 {
      %c0_166 = arith.constant 0 : index
      %c0_167 = arith.constant 0 : index
      %303 = vector.load %arg2[%c0_166, %c0_167] : memref<32x128xf32, #tpu.memory_space<vmem>>, vector<32x128xf32>
      %c0_168 = arith.constant 0 : index
      %c0_169 = arith.constant 0 : index
      %304 = vector.load %arg19[%c0_168, %c0_169] : memref<32x128xf32, #tpu.memory_space<vmem>>, vector<32x128xf32>
      tpu.vector_store %arg19[%c0_168, %c0_169], %303 {strides = array<i32>} : memref<32x128xf32, #tpu.memory_space<vmem>>, vector<32x128xf32>,
      %305 = tpu.iota {dimensions = array<i32: 0>} : vector<16x16xi32>
      %306 = tpu.iota {dimensions = array<i32: 1>} : vector<16x16xi32>
      %307 = arith.cmpi sle, %306, %305 : vector<16x16xi32>
      %cst_170 = arith.constant 0.000000e+00 : f32
      %cst_171 = arith.constant -1.000000e+30 : f32
      %308 = vector.broadcast %cst_170 : f32 to vector<16x16xf32>
      %309 = vector.broadcast %cst_171 : f32 to vector<16x16xf32>
      %310 = arith.select %307, %308, %309 : vector<16x16xi1>, vector<16x16xf32>
      %c0_172 = arith.constant 0 : index
      %c0_173 = arith.constant 0 : index
      %311 = vector.load %arg21[%c0_172, %c0_173] : memref<16x16xf32, #tpu.memory_space<vmem>>, vector<16x16xf32>
      tpu.vector_store %arg21[%c0_172, %c0_173], %310 {strides = array<i32>} : memref<16x16xf32, #tpu.memory_space<vmem>>, vector<16x16xf32>,
    } else {
    }
    %c0 = arith.constant 0 : index
    %c0_1 = arith.constant 0 : index
    %3 = vector.load %arg19[%c0, %c0_1] : memref<32x128xf32, #tpu.memory_space<vmem>>, vector<32x128xf32>
    %c0_2 = arith.constant 0 : index
    %c0_3 = arith.constant 0 : index
    %c0_4 = arith.constant 0 : index
    %4 = vector.load %arg3[%c0_2, %c0_3, %c0_4] : memref<1x1x128xf32, #tpu.memory_space<vmem>>, vector<1x1x128xf32>
    %5 = vector.shape_cast %4 : vector<1x1x128xf32> to vector<128xf32>
    %c0_5 = arith.constant 0 : index
    %c0_6 = arith.constant 0 : index
    %c0_7 = arith.constant 0 : index
    %6 = vector.load %arg4[%c0_5, %c0_6, %c0_7] : memref<1x1x128xf32, #tpu.memory_space<vmem>>, vector<1x1x128xf32>
    %7 = vector.shape_cast %6 : vector<1x1x128xf32> to vector<128xf32>
    %cst = arith.constant dense<0.000000e+00> : vector<32xf32>
    %8 = vector.multi_reduction <add>, %3, %cst [1] : vector<32x128xf32> to vector<32xf32>
    %9 = vector.shape_cast %8 : vector<32xf32> to vector<32x1xf32>
    %cst_8 = arith.constant 1.280000e+02 : f32
    %10 = vector.broadcast %cst_8 : f32 to vector<32x1xf32>
    %11 = arith.divf %9, %10 : vector<32x1xf32>
    %12 = vector.broadcast %11 : vector<32x1xf32> to vector<32x128xf32>
    %13 = arith.subf %3, %12 : vector<32x128xf32>
    %14 = arith.mulf %13, %13 : vector<32x128xf32>
    %cst_9 = arith.constant dense<0.000000e+00> : vector<32xf32>
    %15 = vector.multi_reduction <add>, %14, %cst_9 [1] : vector<32x128xf32> to vector<32xf32>
    %16 = vector.shape_cast %15 : vector<32xf32> to vector<32x1xf32>
    %cst_10 = arith.constant 1.280000e+02 : f32
    %17 = vector.broadcast %cst_10 : f32 to vector<32x1xf32>
    %18 = arith.divf %16, %17 : vector<32x1xf32>
    %19 = vector.broadcast %11 : vector<32x1xf32> to vector<32x128xf32>
    %20 = arith.subf %3, %19 : vector<32x128xf32>
    %cst_11 = arith.constant 9.99999974E-6 : f32
    %21 = vector.broadcast %cst_11 : f32 to vector<32x1xf32>
    %22 = arith.addf %18, %21 : vector<32x1xf32>
    %23 = math.rsqrt %22 : vector<32x1xf32>
    %24 = vector.broadcast %23 : vector<32x1xf32> to vector<32x128xf32>
    %25 = arith.mulf %20, %24 : vector<32x128xf32>
    %26 = vector.shape_cast %5 : vector<128xf32> to vector<1x128xf32>
    %27 = vector.broadcast %26 : vector<1x128xf32> to vector<32x128xf32>
    %28 = arith.mulf %25, %27 : vector<32x128xf32>
    %29 = vector.shape_cast %7 : vector<128xf32> to vector<1x128xf32>
    %30 = vector.broadcast %29 : vector<1x128xf32> to vector<32x128xf32>
    %31 = arith.addf %28, %30 : vector<32x128xf32>
    %c0_12 = arith.constant 0 : index
    %c0_13 = arith.constant 0 : index
    %c0_14 = arith.constant 0 : index
    %32 = vector.load %arg5[%c0_12, %c0_13, %c0_14] : memref<1x128x384xbf16, #tpu.memory_space<vmem>>, vector<1x128x384xbf16>
    %33 = vector.shape_cast %32 : vector<1x128x384xbf16> to vector<128x384xbf16>
    %34 = arith.truncf %31 : vector<32x128xf32> to vector<32x128xbf16>
    %cst_15 = arith.constant dense<0.000000e+00> : vector<32x384xf32>
    %35 = tpu.matmul %34, %33, %cst_15 {dimension_numbers = #tpu.dot_dimension_numbers<[1], [0], [0], [1], [0, 0, 1, 1], [], []>} : vector<32x128xbf16>, vector<128x384xbf16>, vector<32x384xf32> -> vector<32x384xf32>
    %c0_16 = arith.constant 0 : index
    %c0_17 = arith.constant 0 : index
    %c0_18 = arith.constant 0 : index
    %36 = vector.load %arg6[%c0_16, %c0_17, %c0_18] : memref<1x1x384xf32, #tpu.memory_space<vmem>>, vector<1x1x384xf32>
    %37 = vector.shape_cast %36 : vector<1x1x384xf32> to vector<384xf32>
    %38 = vector.shape_cast %37 : vector<384xf32> to vector<1x384xf32>
    %39 = vector.broadcast %38 : vector<1x384xf32> to vector<32x384xf32>
    %40 = arith.addf %35, %39 : vector<32x384xf32>
    %41 = arith.truncf %40 : vector<32x384xf32> to vector<32x384xbf16>
    %c0_19 = arith.constant 0 : index
    %c0_20 = arith.constant 0 : index
    %42 = vector.load %arg20[%c0_19, %c0_20] : memref<32x384xbf16, #tpu.memory_space<vmem>>, vector<32x384xbf16>
    tpu.vector_store %arg20[%c0_19, %c0_20], %41 {strides = array<i32>} : memref<32x384xbf16, #tpu.memory_space<vmem>>, vector<32x384xbf16>,
    %c0_21 = arith.constant 0 : index
    %c0_22 = arith.constant 0 : index
    %43 = vector.load %arg21[%c0_21, %c0_22] : memref<16x16xf32, #tpu.memory_space<vmem>>, vector<16x16xf32>
    %c0_23 = arith.constant 0 : index
    %c0_24 = arith.constant 0 : index
    %c0_25 = arith.constant 0 : index
    %44 = vector.load %arg8[%c0_23, %c0_24, %c0_25] : memref<1x1x128xf32, #tpu.memory_space<vmem>>, vector<1x1x128xf32>
    %45 = vector.shape_cast %44 : vector<1x1x128xf32> to vector<128xf32>
    %cst_26 = arith.constant 0.000000e+00 : f32
    %46 = vector.broadcast %cst_26 : f32 to vector<16x128xf32>
    %c0_27 = arith.constant 0 : index
    %c0_28 = arith.constant 0 : index
    %47 = vector.load %arg20[%c0_27, %c0_28] : memref<32x384xbf16, #tpu.memory_space<vmem>>, vector<16x32xbf16>
    %c0_29 = arith.constant 0 : index
    %c128 = arith.constant 128 : index
    %48 = vector.load %arg20[%c0_29, %c128] : memref<32x384xbf16, #tpu.memory_space<vmem>>, vector<16x32xbf16>
    %c0_30 = arith.constant 0 : index
    %c256 = arith.constant 256 : index
    %49 = vector.load %arg20[%c0_30, %c256] : memref<32x384xbf16, #tpu.memory_space<vmem>>, vector<16x32xbf16>
    %cst_31 = arith.constant dense<0.000000e+00> : vector<16x16xf32>
    %50 = tpu.matmul %47, %48, %cst_31 {dimension_numbers = #tpu.dot_dimension_numbers<[1], [1], [0], [0], [0, 0, 1, 0], [], []>} : vector<16x32xbf16>, vector<16x32xbf16>, vector<16x16xf32> -> vector<16x16xf32>
    %51 = arith.addf %50, %43 : vector<16x16xf32>
    %cst_32 = arith.constant dense<0xFF800000> : vector<16xf32>
    %52 = vector.multi_reduction <maximumf>, %51, %cst_32 [1] : vector<16x16xf32> to vector<16xf32>
    %53 = vector.shape_cast %52 : vector<16xf32> to vector<16x1xf32>
    %54 = vector.broadcast %53 : vector<16x1xf32> to vector<16x16xf32>
    %55 = arith.subf %51, %54 : vector<16x16xf32>
    %56 = math.exp %55 : vector<16x16xf32>
    %cst_33 = arith.constant dense<0.000000e+00> : vector<16xf32>
    %57 = vector.multi_reduction <add>, %56, %cst_33 [1] : vector<16x16xf32> to vector<16xf32>
    %58 = vector.shape_cast %57 : vector<16xf32> to vector<16x1xf32>
    %59 = tpu.reciprocal %58 {approx = true} : vector<16x1xf32> -> vector<16x1xf32>
    %60 = vector.broadcast %59 : vector<16x1xf32> to vector<16x16xf32>
    %61 = arith.mulf %56, %60 : vector<16x16xf32>
    %62 = arith.truncf %61 : vector<16x16xf32> to vector<16x16xbf16>
    %cst_34 = arith.constant dense<0.000000e+00> : vector<16x32xf32>
    %63 = tpu.matmul %62, %49, %cst_34 {dimension_numbers = #tpu.dot_dimension_numbers<[1], [0], [0], [1], [0, 0, 1, 1], [], []>} : vector<16x16xbf16>, vector<16x32xbf16>, vector<16x32xf32> -> vector<16x32xf32>
    %c0_35 = arith.constant 0 : index
    %c0_36 = arith.constant 0 : index
    %c0_37 = arith.constant 0 : index
    %64 = vector.load %arg7[%c0_35, %c0_36, %c0_37] : memref<1x128x128xbf16, #tpu.memory_space<vmem>>, vector<1x32x128xbf16>
    %65 = vector.shape_cast %64 : vector<1x32x128xbf16> to vector<32x128xbf16>
    %66 = arith.truncf %63 : vector<16x32xf32> to vector<16x32xbf16>
    %cst_38 = arith.constant dense<0.000000e+00> : vector<16x128xf32>
    %67 = tpu.matmul %66, %65, %cst_38 {dimension_numbers = #tpu.dot_dimension_numbers<[1], [0], [0], [1], [0, 0, 1, 1], [], []>} : vector<16x32xbf16>, vector<32x128xbf16>, vector<16x128xf32> -> vector<16x128xf32>
    %68 = arith.addf %46, %67 : vector<16x128xf32>
    %c0_39 = arith.constant 0 : index
    %c32 = arith.constant 32 : index
    %69 = vector.load %arg20[%c0_39, %c32] : memref<32x384xbf16, #tpu.memory_space<vmem>>, vector<16x32xbf16>
    %c0_40 = arith.constant 0 : index
    %c160 = arith.constant 160 : index
    %70 = vector.load %arg20[%c0_40, %c160] : memref<32x384xbf16, #tpu.memory_space<vmem>>, vector<16x32xbf16>
    %c0_41 = arith.constant 0 : index
    %c288 = arith.constant 288 : index
    %71 = vector.load %arg20[%c0_41, %c288] : memref<32x384xbf16, #tpu.memory_space<vmem>>, vector<16x32xbf16>
    %cst_42 = arith.constant dense<0.000000e+00> : vector<16x16xf32>
    %72 = tpu.matmul %69, %70, %cst_42 {dimension_numbers = #tpu.dot_dimension_numbers<[1], [1], [0], [0], [0, 0, 1, 0], [], []>} : vector<16x32xbf16>, vector<16x32xbf16>, vector<16x16xf32> -> vector<16x16xf32>
    %73 = arith.addf %72, %43 : vector<16x16xf32>
    %cst_43 = arith.constant dense<0xFF800000> : vector<16xf32>
    %74 = vector.multi_reduction <maximumf>, %73, %cst_43 [1] : vector<16x16xf32> to vector<16xf32>
    %75 = vector.shape_cast %74 : vector<16xf32> to vector<16x1xf32>
    %76 = vector.broadcast %75 : vector<16x1xf32> to vector<16x16xf32>
    %77 = arith.subf %73, %76 : vector<16x16xf32>
    %78 = math.exp %77 : vector<16x16xf32>
    %cst_44 = arith.constant dense<0.000000e+00> : vector<16xf32>
    %79 = vector.multi_reduction <add>, %78, %cst_44 [1] : vector<16x16xf32> to vector<16xf32>
    %80 = vector.shape_cast %79 : vector<16xf32> to vector<16x1xf32>
    %81 = tpu.reciprocal %80 {approx = true} : vector<16x1xf32> -> vector<16x1xf32>
    %82 = vector.broadcast %81 : vector<16x1xf32> to vector<16x16xf32>
    %83 = arith.mulf %78, %82 : vector<16x16xf32>
    %84 = arith.truncf %83 : vector<16x16xf32> to vector<16x16xbf16>
    %cst_45 = arith.constant dense<0.000000e+00> : vector<16x32xf32>
    %85 = tpu.matmul %84, %71, %cst_45 {dimension_numbers = #tpu.dot_dimension_numbers<[1], [0], [0], [1], [0, 0, 1, 1], [], []>} : vector<16x16xbf16>, vector<16x32xbf16>, vector<16x32xf32> -> vector<16x32xf32>
    %c0_46 = arith.constant 0 : index
    %c32_47 = arith.constant 32 : index
    %c0_48 = arith.constant 0 : index
    %86 = vector.load %arg7[%c0_46, %c32_47, %c0_48] : memref<1x128x128xbf16, #tpu.memory_space<vmem>>, vector<1x32x128xbf16>
    %87 = vector.shape_cast %86 : vector<1x32x128xbf16> to vector<32x128xbf16>
    %88 = arith.truncf %85 : vector<16x32xf32> to vector<16x32xbf16>
    %cst_49 = arith.constant dense<0.000000e+00> : vector<16x128xf32>
    %89 = tpu.matmul %88, %87, %cst_49 {dimension_numbers = #tpu.dot_dimension_numbers<[1], [0], [0], [1], [0, 0, 1, 1], [], []>} : vector<16x32xbf16>, vector<32x128xbf16>, vector<16x128xf32> -> vector<16x128xf32>
    %90 = arith.addf %68, %89 : vector<16x128xf32>
    %c0_50 = arith.constant 0 : index
    %c64 = arith.constant 64 : index
    %91 = vector.load %arg20[%c0_50, %c64] : memref<32x384xbf16, #tpu.memory_space<vmem>>, vector<16x32xbf16>
    %c0_51 = arith.constant 0 : index
    %c192 = arith.constant 192 : index
    %92 = vector.load %arg20[%c0_51, %c192] : memref<32x384xbf16, #tpu.memory_space<vmem>>, vector<16x32xbf16>
    %c0_52 = arith.constant 0 : index
    %c320 = arith.constant 320 : index
    %93 = vector.load %arg20[%c0_52, %c320] : memref<32x384xbf16, #tpu.memory_space<vmem>>, vector<16x32xbf16>
    %cst_53 = arith.constant dense<0.000000e+00> : vector<16x16xf32>
    %94 = tpu.matmul %91, %92, %cst_53 {dimension_numbers = #tpu.dot_dimension_numbers<[1], [1], [0], [0], [0, 0, 1, 0], [], []>} : vector<16x32xbf16>, vector<16x32xbf16>, vector<16x16xf32> -> vector<16x16xf32>
    %95 = arith.addf %94, %43 : vector<16x16xf32>
    %cst_54 = arith.constant dense<0xFF800000> : vector<16xf32>
    %96 = vector.multi_reduction <maximumf>, %95, %cst_54 [1] : vector<16x16xf32> to vector<16xf32>
    %97 = vector.shape_cast %96 : vector<16xf32> to vector<16x1xf32>
    %98 = vector.broadcast %97 : vector<16x1xf32> to vector<16x16xf32>
    %99 = arith.subf %95, %98 : vector<16x16xf32>
    %100 = math.exp %99 : vector<16x16xf32>
    %cst_55 = arith.constant dense<0.000000e+00> : vector<16xf32>
    %101 = vector.multi_reduction <add>, %100, %cst_55 [1] : vector<16x16xf32> to vector<16xf32>
    %102 = vector.shape_cast %101 : vector<16xf32> to vector<16x1xf32>
    %103 = tpu.reciprocal %102 {approx = true} : vector<16x1xf32> -> vector<16x1xf32>
    %104 = vector.broadcast %103 : vector<16x1xf32> to vector<16x16xf32>
    %105 = arith.mulf %100, %104 : vector<16x16xf32>
    %106 = arith.truncf %105 : vector<16x16xf32> to vector<16x16xbf16>
    %cst_56 = arith.constant dense<0.000000e+00> : vector<16x32xf32>
    %107 = tpu.matmul %106, %93, %cst_56 {dimension_numbers = #tpu.dot_dimension_numbers<[1], [0], [0], [1], [0, 0, 1, 1], [], []>} : vector<16x16xbf16>, vector<16x32xbf16>, vector<16x32xf32> -> vector<16x32xf32>
    %c0_57 = arith.constant 0 : index
    %c64_58 = arith.constant 64 : index
    %c0_59 = arith.constant 0 : index
    %108 = vector.load %arg7[%c0_57, %c64_58, %c0_59] : memref<1x128x128xbf16, #tpu.memory_space<vmem>>, vector<1x32x128xbf16>
    %109 = vector.shape_cast %108 : vector<1x32x128xbf16> to vector<32x128xbf16>
    %110 = arith.truncf %107 : vector<16x32xf32> to vector<16x32xbf16>
    %cst_60 = arith.constant dense<0.000000e+00> : vector<16x128xf32>
    %111 = tpu.matmul %110, %109, %cst_60 {dimension_numbers = #tpu.dot_dimension_numbers<[1], [0], [0], [1], [0, 0, 1, 1], [], []>} : vector<16x32xbf16>, vector<32x128xbf16>, vector<16x128xf32> -> vector<16x128xf32>
    %112 = arith.addf %90, %111 : vector<16x128xf32>
    %c0_61 = arith.constant 0 : index
    %c96 = arith.constant 96 : index
    %113 = vector.load %arg20[%c0_61, %c96] : memref<32x384xbf16, #tpu.memory_space<vmem>>, vector<16x32xbf16>
    %c0_62 = arith.constant 0 : index
    %c224 = arith.constant 224 : index
    %114 = vector.load %arg20[%c0_62, %c224] : memref<32x384xbf16, #tpu.memory_space<vmem>>, vector<16x32xbf16>
    %c0_63 = arith.constant 0 : index
    %c352 = arith.constant 352 : index
    %115 = vector.load %arg20[%c0_63, %c352] : memref<32x384xbf16, #tpu.memory_space<vmem>>, vector<16x32xbf16>
    %cst_64 = arith.constant dense<0.000000e+00> : vector<16x16xf32>
    %116 = tpu.matmul %113, %114, %cst_64 {dimension_numbers = #tpu.dot_dimension_numbers<[1], [1], [0], [0], [0, 0, 1, 0], [], []>} : vector<16x32xbf16>, vector<16x32xbf16>, vector<16x16xf32> -> vector<16x16xf32>
    %117 = arith.addf %116, %43 : vector<16x16xf32>
    %cst_65 = arith.constant dense<0xFF800000> : vector<16xf32>
    %118 = vector.multi_reduction <maximumf>, %117, %cst_65 [1] : vector<16x16xf32> to vector<16xf32>
    %119 = vector.shape_cast %118 : vector<16xf32> to vector<16x1xf32>
    %120 = vector.broadcast %119 : vector<16x1xf32> to vector<16x16xf32>
    %121 = arith.subf %117, %120 : vector<16x16xf32>
    %122 = math.exp %121 : vector<16x16xf32>
    %cst_66 = arith.constant dense<0.000000e+00> : vector<16xf32>
    %123 = vector.multi_reduction <add>, %122, %cst_66 [1] : vector<16x16xf32> to vector<16xf32>
    %124 = vector.shape_cast %123 : vector<16xf32> to vector<16x1xf32>
    %125 = tpu.reciprocal %124 {approx = true} : vector<16x1xf32> -> vector<16x1xf32>
    %126 = vector.broadcast %125 : vector<16x1xf32> to vector<16x16xf32>
    %127 = arith.mulf %122, %126 : vector<16x16xf32>
    %128 = arith.truncf %127 : vector<16x16xf32> to vector<16x16xbf16>
    %cst_67 = arith.constant dense<0.000000e+00> : vector<16x32xf32>
    %129 = tpu.matmul %128, %115, %cst_67 {dimension_numbers = #tpu.dot_dimension_numbers<[1], [0], [0], [1], [0, 0, 1, 1], [], []>} : vector<16x16xbf16>, vector<16x32xbf16>, vector<16x32xf32> -> vector<16x32xf32>
    %c0_68 = arith.constant 0 : index
    %c96_69 = arith.constant 96 : index
    %c0_70 = arith.constant 0 : index
    %130 = vector.load %arg7[%c0_68, %c96_69, %c0_70] : memref<1x128x128xbf16, #tpu.memory_space<vmem>>, vector<1x32x128xbf16>
    %131 = vector.shape_cast %130 : vector<1x32x128xbf16> to vector<32x128xbf16>
    %132 = arith.truncf %129 : vector<16x32xf32> to vector<16x32xbf16>
    %cst_71 = arith.constant dense<0.000000e+00> : vector<16x128xf32>
    %133 = tpu.matmul %132, %131, %cst_71 {dimension_numbers = #tpu.dot_dimension_numbers<[1], [0], [0], [1], [0, 0, 1, 1], [], []>} : vector<16x32xbf16>, vector<32x128xbf16>, vector<16x128xf32> -> vector<16x128xf32>
    %134 = arith.addf %112, %133 : vector<16x128xf32>
    %135 = vector.extract_strided_slice %3 {offsets = [0, 0], sizes = [16, 128], strides = [1, 1]} : vector<32x128xf32> to vector<16x128xf32>
    %136 = arith.addf %135, %134 : vector<16x128xf32>
    %137 = vector.shape_cast %45 : vector<128xf32> to vector<1x128xf32>
    %138 = vector.broadcast %137 : vector<1x128xf32> to vector<16x128xf32>
    %139 = arith.addf %136, %138 : vector<16x128xf32>
    %c0_72 = arith.constant 0 : index
    %c0_73 = arith.constant 0 : index
    %140 = vector.load %arg19[%c0_72, %c0_73] : memref<32x128xf32, #tpu.memory_space<vmem>>, vector<16x128xf32>
    tpu.vector_store %arg19[%c0_72, %c0_73], %139 {strides = array<i32>} : memref<32x128xf32, #tpu.memory_space<vmem>>, vector<16x128xf32>,
    %cst_74 = arith.constant 0.000000e+00 : f32
    %141 = vector.broadcast %cst_74 : f32 to vector<16x128xf32>
    %c16 = arith.constant 16 : index
    %c0_75 = arith.constant 0 : index
    %142 = vector.load %arg20[%c16, %c0_75] : memref<32x384xbf16, #tpu.memory_space<vmem>>, vector<16x32xbf16>
    %c16_76 = arith.constant 16 : index
    %c128_77 = arith.constant 128 : index
    %143 = vector.load %arg20[%c16_76, %c128_77] : memref<32x384xbf16, #tpu.memory_space<vmem>>, vector<16x32xbf16>
    %c16_78 = arith.constant 16 : index
    %c256_79 = arith.constant 256 : index
    %144 = vector.load %arg20[%c16_78, %c256_79] : memref<32x384xbf16, #tpu.memory_space<vmem>>, vector<16x32xbf16>
    %cst_80 = arith.constant dense<0.000000e+00> : vector<16x16xf32>
    %145 = tpu.matmul %142, %143, %cst_80 {dimension_numbers = #tpu.dot_dimension_numbers<[1], [1], [0], [0], [0, 0, 1, 0], [], []>} : vector<16x32xbf16>, vector<16x32xbf16>, vector<16x16xf32> -> vector<16x16xf32>
    %146 = arith.addf %145, %43 : vector<16x16xf32>
    %cst_81 = arith.constant dense<0xFF800000> : vector<16xf32>
    %147 = vector.multi_reduction <maximumf>, %146, %cst_81 [1] : vector<16x16xf32> to vector<16xf32>
    %148 = vector.shape_cast %147 : vector<16xf32> to vector<16x1xf32>
    %149 = vector.broadcast %148 : vector<16x1xf32> to vector<16x16xf32>
    %150 = arith.subf %146, %149 : vector<16x16xf32>
    %151 = math.exp %150 : vector<16x16xf32>
    %cst_82 = arith.constant dense<0.000000e+00> : vector<16xf32>
    %152 = vector.multi_reduction <add>, %151, %cst_82 [1] : vector<16x16xf32> to vector<16xf32>
    %153 = vector.shape_cast %152 : vector<16xf32> to vector<16x1xf32>
    %154 = tpu.reciprocal %153 {approx = true} : vector<16x1xf32> -> vector<16x1xf32>
    %155 = vector.broadcast %154 : vector<16x1xf32> to vector<16x16xf32>
    %156 = arith.mulf %151, %155 : vector<16x16xf32>
    %157 = arith.truncf %156 : vector<16x16xf32> to vector<16x16xbf16>
    %cst_83 = arith.constant dense<0.000000e+00> : vector<16x32xf32>
    %158 = tpu.matmul %157, %144, %cst_83 {dimension_numbers = #tpu.dot_dimension_numbers<[1], [0], [0], [1], [0, 0, 1, 1], [], []>} : vector<16x16xbf16>, vector<16x32xbf16>, vector<16x32xf32> -> vector<16x32xf32>
    %c0_84 = arith.constant 0 : index
    %c0_85 = arith.constant 0 : index
    %c0_86 = arith.constant 0 : index
    %159 = vector.load %arg7[%c0_84, %c0_85, %c0_86] : memref<1x128x128xbf16, #tpu.memory_space<vmem>>, vector<1x32x128xbf16>
    %160 = vector.shape_cast %159 : vector<1x32x128xbf16> to vector<32x128xbf16>
    %161 = arith.truncf %158 : vector<16x32xf32> to vector<16x32xbf16>
    %cst_87 = arith.constant dense<0.000000e+00> : vector<16x128xf32>
    %162 = tpu.matmul %161, %160, %cst_87 {dimension_numbers = #tpu.dot_dimension_numbers<[1], [0], [0], [1], [0, 0, 1, 1], [], []>} : vector<16x32xbf16>, vector<32x128xbf16>, vector<16x128xf32> -> vector<16x128xf32>
    %163 = arith.addf %141, %162 : vector<16x128xf32>
    %c16_88 = arith.constant 16 : index
    %c32_89 = arith.constant 32 : index
    %164 = vector.load %arg20[%c16_88, %c32_89] : memref<32x384xbf16, #tpu.memory_space<vmem>>, vector<16x32xbf16>
    %c16_90 = arith.constant 16 : index
    %c160_91 = arith.constant 160 : index
    %165 = vector.load %arg20[%c16_90, %c160_91] : memref<32x384xbf16, #tpu.memory_space<vmem>>, vector<16x32xbf16>
    %c16_92 = arith.constant 16 : index
    %c288_93 = arith.constant 288 : index
    %166 = vector.load %arg20[%c16_92, %c288_93] : memref<32x384xbf16, #tpu.memory_space<vmem>>, vector<16x32xbf16>
    %cst_94 = arith.constant dense<0.000000e+00> : vector<16x16xf32>
    %167 = tpu.matmul %164, %165, %cst_94 {dimension_numbers = #tpu.dot_dimension_numbers<[1], [1], [0], [0], [0, 0, 1, 0], [], []>} : vector<16x32xbf16>, vector<16x32xbf16>, vector<16x16xf32> -> vector<16x16xf32>
    %168 = arith.addf %167, %43 : vector<16x16xf32>
    %cst_95 = arith.constant dense<0xFF800000> : vector<16xf32>
    %169 = vector.multi_reduction <maximumf>, %168, %cst_95 [1] : vector<16x16xf32> to vector<16xf32>
    %170 = vector.shape_cast %169 : vector<16xf32> to vector<16x1xf32>
    %171 = vector.broadcast %170 : vector<16x1xf32> to vector<16x16xf32>
    %172 = arith.subf %168, %171 : vector<16x16xf32>
    %173 = math.exp %172 : vector<16x16xf32>
    %cst_96 = arith.constant dense<0.000000e+00> : vector<16xf32>
    %174 = vector.multi_reduction <add>, %173, %cst_96 [1] : vector<16x16xf32> to vector<16xf32>
    %175 = vector.shape_cast %174 : vector<16xf32> to vector<16x1xf32>
    %176 = tpu.reciprocal %175 {approx = true} : vector<16x1xf32> -> vector<16x1xf32>
    %177 = vector.broadcast %176 : vector<16x1xf32> to vector<16x16xf32>
    %178 = arith.mulf %173, %177 : vector<16x16xf32>
    %179 = arith.truncf %178 : vector<16x16xf32> to vector<16x16xbf16>
    %cst_97 = arith.constant dense<0.000000e+00> : vector<16x32xf32>
    %180 = tpu.matmul %179, %166, %cst_97 {dimension_numbers = #tpu.dot_dimension_numbers<[1], [0], [0], [1], [0, 0, 1, 1], [], []>} : vector<16x16xbf16>, vector<16x32xbf16>, vector<16x32xf32> -> vector<16x32xf32>
    %c0_98 = arith.constant 0 : index
    %c32_99 = arith.constant 32 : index
    %c0_100 = arith.constant 0 : index
    %181 = vector.load %arg7[%c0_98, %c32_99, %c0_100] : memref<1x128x128xbf16, #tpu.memory_space<vmem>>, vector<1x32x128xbf16>
    %182 = vector.shape_cast %181 : vector<1x32x128xbf16> to vector<32x128xbf16>
    %183 = arith.truncf %180 : vector<16x32xf32> to vector<16x32xbf16>
    %cst_101 = arith.constant dense<0.000000e+00> : vector<16x128xf32>
    %184 = tpu.matmul %183, %182, %cst_101 {dimension_numbers = #tpu.dot_dimension_numbers<[1], [0], [0], [1], [0, 0, 1, 1], [], []>} : vector<16x32xbf16>, vector<32x128xbf16>, vector<16x128xf32> -> vector<16x128xf32>
    %185 = arith.addf %163, %184 : vector<16x128xf32>
    %c16_102 = arith.constant 16 : index
    %c64_103 = arith.constant 64 : index
    %186 = vector.load %arg20[%c16_102, %c64_103] : memref<32x384xbf16, #tpu.memory_space<vmem>>, vector<16x32xbf16>
    %c16_104 = arith.constant 16 : index
    %c192_105 = arith.constant 192 : index
    %187 = vector.load %arg20[%c16_104, %c192_105] : memref<32x384xbf16, #tpu.memory_space<vmem>>, vector<16x32xbf16>
    %c16_106 = arith.constant 16 : index
    %c320_107 = arith.constant 320 : index
    %188 = vector.load %arg20[%c16_106, %c320_107] : memref<32x384xbf16, #tpu.memory_space<vmem>>, vector<16x32xbf16>
    %cst_108 = arith.constant dense<0.000000e+00> : vector<16x16xf32>
    %189 = tpu.matmul %186, %187, %cst_108 {dimension_numbers = #tpu.dot_dimension_numbers<[1], [1], [0], [0], [0, 0, 1, 0], [], []>} : vector<16x32xbf16>, vector<16x32xbf16>, vector<16x16xf32> -> vector<16x16xf32>
    %190 = arith.addf %189, %43 : vector<16x16xf32>
    %cst_109 = arith.constant dense<0xFF800000> : vector<16xf32>
    %191 = vector.multi_reduction <maximumf>, %190, %cst_109 [1] : vector<16x16xf32> to vector<16xf32>
    %192 = vector.shape_cast %191 : vector<16xf32> to vector<16x1xf32>
    %193 = vector.broadcast %192 : vector<16x1xf32> to vector<16x16xf32>
    %194 = arith.subf %190, %193 : vector<16x16xf32>
    %195 = math.exp %194 : vector<16x16xf32>
    %cst_110 = arith.constant dense<0.000000e+00> : vector<16xf32>
    %196 = vector.multi_reduction <add>, %195, %cst_110 [1] : vector<16x16xf32> to vector<16xf32>
    %197 = vector.shape_cast %196 : vector<16xf32> to vector<16x1xf32>
    %198 = tpu.reciprocal %197 {approx = true} : vector<16x1xf32> -> vector<16x1xf32>
    %199 = vector.broadcast %198 : vector<16x1xf32> to vector<16x16xf32>
    %200 = arith.mulf %195, %199 : vector<16x16xf32>
    %201 = arith.truncf %200 : vector<16x16xf32> to vector<16x16xbf16>
    %cst_111 = arith.constant dense<0.000000e+00> : vector<16x32xf32>
    %202 = tpu.matmul %201, %188, %cst_111 {dimension_numbers = #tpu.dot_dimension_numbers<[1], [0], [0], [1], [0, 0, 1, 1], [], []>} : vector<16x16xbf16>, vector<16x32xbf16>, vector<16x32xf32> -> vector<16x32xf32>
    %c0_112 = arith.constant 0 : index
    %c64_113 = arith.constant 64 : index
    %c0_114 = arith.constant 0 : index
    %203 = vector.load %arg7[%c0_112, %c64_113, %c0_114] : memref<1x128x128xbf16, #tpu.memory_space<vmem>>, vector<1x32x128xbf16>
    %204 = vector.shape_cast %203 : vector<1x32x128xbf16> to vector<32x128xbf16>
    %205 = arith.truncf %202 : vector<16x32xf32> to vector<16x32xbf16>
    %cst_115 = arith.constant dense<0.000000e+00> : vector<16x128xf32>
    %206 = tpu.matmul %205, %204, %cst_115 {dimension_numbers = #tpu.dot_dimension_numbers<[1], [0], [0], [1], [0, 0, 1, 1], [], []>} : vector<16x32xbf16>, vector<32x128xbf16>, vector<16x128xf32> -> vector<16x128xf32>
    %207 = arith.addf %185, %206 : vector<16x128xf32>
    %c16_116 = arith.constant 16 : index
    %c96_117 = arith.constant 96 : index
    %208 = vector.load %arg20[%c16_116, %c96_117] : memref<32x384xbf16, #tpu.memory_space<vmem>>, vector<16x32xbf16>
    %c16_118 = arith.constant 16 : index
    %c224_119 = arith.constant 224 : index
    %209 = vector.load %arg20[%c16_118, %c224_119] : memref<32x384xbf16, #tpu.memory_space<vmem>>, vector<16x32xbf16>
    %c16_120 = arith.constant 16 : index
    %c352_121 = arith.constant 352 : index
    %210 = vector.load %arg20[%c16_120, %c352_121] : memref<32x384xbf16, #tpu.memory_space<vmem>>, vector<16x32xbf16>
    %cst_122 = arith.constant dense<0.000000e+00> : vector<16x16xf32>
    %211 = tpu.matmul %208, %209, %cst_122 {dimension_numbers = #tpu.dot_dimension_numbers<[1], [1], [0], [0], [0, 0, 1, 0], [], []>} : vector<16x32xbf16>, vector<16x32xbf16>, vector<16x16xf32> -> vector<16x16xf32>
    %212 = arith.addf %211, %43 : vector<16x16xf32>
    %cst_123 = arith.constant dense<0xFF800000> : vector<16xf32>
    %213 = vector.multi_reduction <maximumf>, %212, %cst_123 [1] : vector<16x16xf32> to vector<16xf32>
    %214 = vector.shape_cast %213 : vector<16xf32> to vector<16x1xf32>
    %215 = vector.broadcast %214 : vector<16x1xf32> to vector<16x16xf32>
    %216 = arith.subf %212, %215 : vector<16x16xf32>
    %217 = math.exp %216 : vector<16x16xf32>
    %cst_124 = arith.constant dense<0.000000e+00> : vector<16xf32>
    %218 = vector.multi_reduction <add>, %217, %cst_124 [1] : vector<16x16xf32> to vector<16xf32>
    %219 = vector.shape_cast %218 : vector<16xf32> to vector<16x1xf32>
    %220 = tpu.reciprocal %219 {approx = true} : vector<16x1xf32> -> vector<16x1xf32>
    %221 = vector.broadcast %220 : vector<16x1xf32> to vector<16x16xf32>
    %222 = arith.mulf %217, %221 : vector<16x16xf32>
    %223 = arith.truncf %222 : vector<16x16xf32> to vector<16x16xbf16>
    %cst_125 = arith.constant dense<0.000000e+00> : vector<16x32xf32>
    %224 = tpu.matmul %223, %210, %cst_125 {dimension_numbers = #tpu.dot_dimension_numbers<[1], [0], [0], [1], [0, 0, 1, 1], [], []>} : vector<16x16xbf16>, vector<16x32xbf16>, vector<16x32xf32> -> vector<16x32xf32>
    %c0_126 = arith.constant 0 : index
    %c96_127 = arith.constant 96 : index
    %c0_128 = arith.constant 0 : index
    %225 = vector.load %arg7[%c0_126, %c96_127, %c0_128] : memref<1x128x128xbf16, #tpu.memory_space<vmem>>, vector<1x32x128xbf16>
    %226 = vector.shape_cast %225 : vector<1x32x128xbf16> to vector<32x128xbf16>
    %227 = arith.truncf %224 : vector<16x32xf32> to vector<16x32xbf16>
    %cst_129 = arith.constant dense<0.000000e+00> : vector<16x128xf32>
    %228 = tpu.matmul %227, %226, %cst_129 {dimension_numbers = #tpu.dot_dimension_numbers<[1], [0], [0], [1], [0, 0, 1, 1], [], []>} : vector<16x32xbf16>, vector<32x128xbf16>, vector<16x128xf32> -> vector<16x128xf32>
    %229 = arith.addf %207, %228 : vector<16x128xf32>
    %230 = vector.extract_strided_slice %3 {offsets = [16, 0], sizes = [16, 128], strides = [1, 1]} : vector<32x128xf32> to vector<16x128xf32>
    %231 = arith.addf %230, %229 : vector<16x128xf32>
    %232 = vector.shape_cast %45 : vector<128xf32> to vector<1x128xf32>
    %233 = vector.broadcast %232 : vector<1x128xf32> to vector<16x128xf32>
    %234 = arith.addf %231, %233 : vector<16x128xf32>
    %c16_130 = arith.constant 16 : index
    %c0_131 = arith.constant 0 : index
    %235 = vector.load %arg19[%c16_130, %c0_131] : memref<32x128xf32, #tpu.memory_space<vmem>>, vector<16x128xf32>
    tpu.vector_store %arg19[%c16_130, %c0_131], %234 {strides = array<i32>} : memref<32x128xf32, #tpu.memory_space<vmem>>, vector<16x128xf32>,
    %c0_132 = arith.constant 0 : index
    %c0_133 = arith.constant 0 : index
    %236 = vector.load %arg19[%c0_132, %c0_133] : memref<32x128xf32, #tpu.memory_space<vmem>>, vector<32x128xf32>
    %c0_134 = arith.constant 0 : index
    %c0_135 = arith.constant 0 : index
    %c0_136 = arith.constant 0 : index
    %237 = vector.load %arg9[%c0_134, %c0_135, %c0_136] : memref<1x1x128xf32, #tpu.memory_space<vmem>>, vector<1x1x128xf32>
    %238 = vector.shape_cast %237 : vector<1x1x128xf32> to vector<128xf32>
    %c0_137 = arith.constant 0 : index
    %c0_138 = arith.constant 0 : index
    %c0_139 = arith.constant 0 : index
    %239 = vector.load %arg10[%c0_137, %c0_138, %c0_139] : memref<1x1x128xf32, #tpu.memory_space<vmem>>, vector<1x1x128xf32>
    %240 = vector.shape_cast %239 : vector<1x1x128xf32> to vector<128xf32>
    %cst_140 = arith.constant dense<0.000000e+00> : vector<32xf32>
    %241 = vector.multi_reduction <add>, %236, %cst_140 [1] : vector<32x128xf32> to vector<32xf32>
    %242 = vector.shape_cast %241 : vector<32xf32> to vector<32x1xf32>
    %cst_141 = arith.constant 1.280000e+02 : f32
    %243 = vector.broadcast %cst_141 : f32 to vector<32x1xf32>
    %244 = arith.divf %242, %243 : vector<32x1xf32>
    %245 = vector.broadcast %244 : vector<32x1xf32> to vector<32x128xf32>
    %246 = arith.subf %236, %245 : vector<32x128xf32>
    %247 = arith.mulf %246, %246 : vector<32x128xf32>
    %cst_142 = arith.constant dense<0.000000e+00> : vector<32xf32>
    %248 = vector.multi_reduction <add>, %247, %cst_142 [1] : vector<32x128xf32> to vector<32xf32>
    %249 = vector.shape_cast %248 : vector<32xf32> to vector<32x1xf32>
    %cst_143 = arith.constant 1.280000e+02 : f32
    %250 = vector.broadcast %cst_143 : f32 to vector<32x1xf32>
    %251 = arith.divf %249, %250 : vector<32x1xf32>
    %252 = vector.broadcast %244 : vector<32x1xf32> to vector<32x128xf32>
    %253 = arith.subf %236, %252 : vector<32x128xf32>
    %cst_144 = arith.constant 9.99999974E-6 : f32
    %254 = vector.broadcast %cst_144 : f32 to vector<32x1xf32>
    %255 = arith.addf %251, %254 : vector<32x1xf32>
    %256 = math.rsqrt %255 : vector<32x1xf32>
    %257 = vector.broadcast %256 : vector<32x1xf32> to vector<32x128xf32>
    %258 = arith.mulf %253, %257 : vector<32x128xf32>
    %259 = vector.shape_cast %238 : vector<128xf32> to vector<1x128xf32>
    %260 = vector.broadcast %259 : vector<1x128xf32> to vector<32x128xf32>
    %261 = arith.mulf %258, %260 : vector<32x128xf32>
    %262 = vector.shape_cast %240 : vector<128xf32> to vector<1x128xf32>
    %263 = vector.broadcast %262 : vector<1x128xf32> to vector<32x128xf32>
    %264 = arith.addf %261, %263 : vector<32x128xf32>
    %c0_145 = arith.constant 0 : index
    %c0_146 = arith.constant 0 : index
    %c0_147 = arith.constant 0 : index
    %265 = vector.load %arg11[%c0_145, %c0_146, %c0_147] : memref<1x128x512xbf16, #tpu.memory_space<vmem>>, vector<1x128x512xbf16>
    %266 = vector.shape_cast %265 : vector<1x128x512xbf16> to vector<128x512xbf16>
    %267 = arith.truncf %264 : vector<32x128xf32> to vector<32x128xbf16>
    %cst_148 = arith.constant dense<0.000000e+00> : vector<32x512xf32>
    %268 = tpu.matmul %267, %266, %cst_148 {dimension_numbers = #tpu.dot_dimension_numbers<[1], [0], [0], [1], [0, 0, 1, 1], [], []>} : vector<32x128xbf16>, vector<128x512xbf16>, vector<32x512xf32> -> vector<32x512xf32>
    %c0_149 = arith.constant 0 : index
    %c0_150 = arith.constant 0 : index
    %c0_151 = arith.constant 0 : index
    %269 = vector.load %arg12[%c0_149, %c0_150, %c0_151] : memref<1x1x512xf32, #tpu.memory_space<vmem>>, vector<1x1x512xf32>
    %270 = vector.shape_cast %269 : vector<1x1x512xf32> to vector<512xf32>
    %271 = vector.shape_cast %270 : vector<512xf32> to vector<1x512xf32>
    %272 = vector.broadcast %271 : vector<1x512xf32> to vector<32x512xf32>
    %273 = arith.addf %268, %272 : vector<32x512xf32>
    %cst_152 = arith.constant 5.000000e-01 : f32
    %274 = vector.broadcast %cst_152 : f32 to vector<32x512xf32>
    %275 = arith.mulf %274, %273 : vector<32x512xf32>
    %cst_153 = arith.constant 4.471500e-02 : f32
    %276 = vector.broadcast %cst_153 : f32 to vector<32x512xf32>
    %277 = arith.mulf %276, %273 : vector<32x512xf32>
    %278 = arith.mulf %277, %273 : vector<32x512xf32>
    %279 = arith.mulf %278, %273 : vector<32x512xf32>
    %280 = arith.addf %273, %279 : vector<32x512xf32>
    %cst_154 = arith.constant 0.797884583 : f32
    %281 = vector.broadcast %cst_154 : f32 to vector<32x512xf32>
    %282 = arith.mulf %281, %280 : vector<32x512xf32>
    %283 = math.tanh %282 : vector<32x512xf32>
    %cst_155 = arith.constant 1.000000e+00 : f32
    %284 = vector.broadcast %cst_155 : f32 to vector<32x512xf32>
    %285 = arith.addf %284, %283 : vector<32x512xf32>
    %286 = arith.mulf %275, %285 : vector<32x512xf32>
    %c0_156 = arith.constant 0 : index
    %c0_157 = arith.constant 0 : index
    %c0_158 = arith.constant 0 : index
    %287 = vector.load %arg13[%c0_156, %c0_157, %c0_158] : memref<1x512x128xbf16, #tpu.memory_space<vmem>>, vector<1x512x128xbf16>
    %288 = vector.shape_cast %287 : vector<1x512x128xbf16> to vector<512x128xbf16>
    %289 = arith.truncf %286 : vector<32x512xf32> to vector<32x512xbf16>
    %cst_159 = arith.constant dense<0.000000e+00> : vector<32x128xf32>
    %290 = tpu.matmul %289, %288, %cst_159 {dimension_numbers = #tpu.dot_dimension_numbers<[1], [0], [0], [1], [0, 0, 1, 1], [], []>} : vector<32x512xbf16>, vector<512x128xbf16>, vector<32x128xf32> -> vector<32x128xf32>
    %c0_160 = arith.constant 0 : index
    %c0_161 = arith.constant 0 : index
    %c0_162 = arith.constant 0 : index
    %291 = vector.load %arg14[%c0_160, %c0_161, %c0_162] : memref<1x1x128xf32, #tpu.memory_space<vmem>>, vector<1x1x128xf32>
    %292 = vector.shape_cast %291 : vector<1x1x128xf32> to vector<128xf32>
    %293 = vector.shape_cast %292 : vector<128xf32> to vector<1x128xf32>
    %294 = vector.broadcast %293 : vector<1x128xf32> to vector<32x128xf32>
    %295 = arith.addf %290, %294 : vector<32x128xf32>
    %296 = arith.addf %236, %295 : vector<32x128xf32>
    %c1_i32 = arith.constant 1 : i32
    %297 = arith.cmpi slt, %arg1, %c1_i32 : i32
    %298 = arith.extui %297 : i1 to i32
    %c0_i32_163 = arith.constant 0 : i32
    %299 = arith.cmpi ne, %298, %c0_i32_163 : i32
    scf.if %299 {
      %c0_166 = arith.constant 0 : index
      %c0_167 = arith.constant 0 : index
      %303 = vector.load %arg19[%c0_166, %c0_167] : memref<32x128xf32, #tpu.memory_space<vmem>>, vector<32x128xf32>
      tpu.vector_store %arg19[%c0_166, %c0_167], %296 {strides = array<i32>} : memref<32x128xf32, #tpu.memory_space<vmem>>, vector<32x128xf32>,
    } else {
    }
    %c1_i32_164 = arith.constant 1 : i32
    %300 = arith.cmpi eq, %arg1, %c1_i32_164 : i32
    %301 = arith.extui %300 : i1 to i32
    %c0_i32_165 = arith.constant 0 : i32
    %302 = arith.cmpi ne, %301, %c0_i32_165 : i32
    scf.if %302 {
      %303 = vector.extract_strided_slice %296 {offsets = [8, 0], sizes = [1, 128], strides = [1, 1]} : vector<32x128xf32> to vector<1x128xf32>
      %c0_166 = arith.constant 0 : index
      %c0_167 = arith.constant 0 : index
      %304 = vector.load %arg15[%c0_166, %c0_167] : memref<1x128xf32, #tpu.memory_space<vmem>>, vector<1x128xf32>
      %c0_168 = arith.constant 0 : index
      %c0_169 = arith.constant 0 : index
      %305 = vector.load %arg16[%c0_168, %c0_169] : memref<1x128xf32, #tpu.memory_space<vmem>>, vector<1x128xf32>
      %cst_170 = arith.constant dense<0.000000e+00> : vector<1xf32>
      %306 = vector.multi_reduction <add>, %303, %cst_170 [1] : vector<1x128xf32> to vector<1xf32>
      %307 = vector.shape_cast %306 : vector<1xf32> to vector<1x1xf32>
      %cst_171 = arith.constant 1.280000e+02 : f32
      %308 = vector.broadcast %cst_171 : f32 to vector<1x1xf32>
      %309 = arith.divf %307, %308 : vector<1x1xf32>
      %310 = vector.broadcast %309 : vector<1x1xf32> to vector<1x128xf32>
      %311 = arith.subf %303, %310 : vector<1x128xf32>
      %312 = arith.mulf %311, %311 : vector<1x128xf32>
      %cst_172 = arith.constant dense<0.000000e+00> : vector<1xf32>
      %313 = vector.multi_reduction <add>, %312, %cst_172 [1] : vector<1x128xf32> to vector<1xf32>
      %314 = vector.shape_cast %313 : vector<1xf32> to vector<1x1xf32>
      %cst_173 = arith.constant 1.280000e+02 : f32
      %315 = vector.broadcast %cst_173 : f32 to vector<1x1xf32>
      %316 = arith.divf %314, %315 : vector<1x1xf32>
      %317 = vector.broadcast %309 : vector<1x1xf32> to vector<1x128xf32>
      %318 = arith.subf %303, %317 : vector<1x128xf32>
      %cst_174 = arith.constant 9.99999974E-6 : f32
      %319 = vector.broadcast %cst_174 : f32 to vector<1x1xf32>
      %320 = arith.addf %316, %319 : vector<1x1xf32>
      %321 = math.rsqrt %320 : vector<1x1xf32>
      %322 = vector.broadcast %321 : vector<1x1xf32> to vector<1x128xf32>
      %323 = arith.mulf %318, %322 : vector<1x128xf32>
      %324 = arith.mulf %323, %304 : vector<1x128xf32>
      %325 = arith.addf %324, %305 : vector<1x128xf32>
      %c0_175 = arith.constant 0 : index
      %c0_176 = arith.constant 0 : index
      %326 = vector.load %arg17[%c0_175, %c0_176] : memref<128x64xbf16, #tpu.memory_space<vmem>>, vector<128x64xbf16>
      %327 = arith.truncf %325 : vector<1x128xf32> to vector<1x128xbf16>
      %cst_177 = arith.constant dense<0.000000e+00> : vector<1x64xf32>
      %328 = tpu.matmul %327, %326, %cst_177 {dimension_numbers = #tpu.dot_dimension_numbers<[1], [0], [0], [1], [0, 0, 1, 1], [], []>} : vector<1x128xbf16>, vector<128x64xbf16>, vector<1x64xf32> -> vector<1x64xf32>
      %329 = arith.mulf %328, %328 : vector<1x64xf32>
      %cst_178 = arith.constant dense<0.000000e+00> : vector<1xf32>
      %330 = vector.multi_reduction <add>, %329, %cst_178 [1] : vector<1x64xf32> to vector<1xf32>
      %331 = vector.shape_cast %330 : vector<1xf32> to vector<1x1xf32>
      %cst_179 = arith.constant 9.99999996E-13 : f32
      %332 = vector.broadcast %cst_179 : f32 to vector<1x1xf32>
      %333 = arith.addf %331, %332 : vector<1x1xf32>
      %334 = math.rsqrt %333 : vector<1x1xf32>
      %335 = vector.broadcast %334 : vector<1x1xf32> to vector<1x64xf32>
      %336 = arith.mulf %328, %335 : vector<1x64xf32>
      %c0_180 = arith.constant 0 : index
      %c0_181 = arith.constant 0 : index
      %c0_182 = arith.constant 0 : index
      %337 = vector.load %arg18[%c0_180, %c0_181, %c0_182] : memref<2x1x64xf32, #tpu.memory_space<vmem>>, vector<1x1x64xf32>
      %338 = vector.shape_cast %337 : vector<1x1x64xf32> to vector<1x64xf32>
      %339 = vector.shape_cast %336 : vector<1x64xf32> to vector<1x1x64xf32>
      tpu.vector_store %arg18[%c0_180, %c0_181, %c0_182], %339 {strides = array<i32>} : memref<2x1x64xf32, #tpu.memory_space<vmem>>, vector<1x1x64xf32>,
      %340 = vector.extract_strided_slice %296 {offsets = [24, 0], sizes = [1, 128], strides = [1, 1]} : vector<32x128xf32> to vector<1x128xf32>
      %c0_183 = arith.constant 0 : index
      %c0_184 = arith.constant 0 : index
      %341 = vector.load %arg15[%c0_183, %c0_184] : memref<1x128xf32, #tpu.memory_space<vmem>>, vector<1x128xf32>
      %c0_185 = arith.constant 0 : index
      %c0_186 = arith.constant 0 : index
      %342 = vector.load %arg16[%c0_185, %c0_186] : memref<1x128xf32, #tpu.memory_space<vmem>>, vector<1x128xf32>
      %cst_187 = arith.constant dense<0.000000e+00> : vector<1xf32>
      %343 = vector.multi_reduction <add>, %340, %cst_187 [1] : vector<1x128xf32> to vector<1xf32>
      %344 = vector.shape_cast %343 : vector<1xf32> to vector<1x1xf32>
      %cst_188 = arith.constant 1.280000e+02 : f32
      %345 = vector.broadcast %cst_188 : f32 to vector<1x1xf32>
      %346 = arith.divf %344, %345 : vector<1x1xf32>
      %347 = vector.broadcast %346 : vector<1x1xf32> to vector<1x128xf32>
      %348 = arith.subf %340, %347 : vector<1x128xf32>
      %349 = arith.mulf %348, %348 : vector<1x128xf32>
      %cst_189 = arith.constant dense<0.000000e+00> : vector<1xf32>
      %350 = vector.multi_reduction <add>, %349, %cst_189 [1] : vector<1x128xf32> to vector<1xf32>
      %351 = vector.shape_cast %350 : vector<1xf32> to vector<1x1xf32>
      %cst_190 = arith.constant 1.280000e+02 : f32
      %352 = vector.broadcast %cst_190 : f32 to vector<1x1xf32>
      %353 = arith.divf %351, %352 : vector<1x1xf32>
      %354 = vector.broadcast %346 : vector<1x1xf32> to vector<1x128xf32>
      %355 = arith.subf %340, %354 : vector<1x128xf32>
      %cst_191 = arith.constant 9.99999974E-6 : f32
      %356 = vector.broadcast %cst_191 : f32 to vector<1x1xf32>
      %357 = arith.addf %353, %356 : vector<1x1xf32>
      %358 = math.rsqrt %357 : vector<1x1xf32>
      %359 = vector.broadcast %358 : vector<1x1xf32> to vector<1x128xf32>
      %360 = arith.mulf %355, %359 : vector<1x128xf32>
      %361 = arith.mulf %360, %341 : vector<1x128xf32>
      %362 = arith.addf %361, %342 : vector<1x128xf32>
      %c0_192 = arith.constant 0 : index
      %c0_193 = arith.constant 0 : index
      %363 = vector.load %arg17[%c0_192, %c0_193] : memref<128x64xbf16, #tpu.memory_space<vmem>>, vector<128x64xbf16>
      %364 = arith.truncf %362 : vector<1x128xf32> to vector<1x128xbf16>
      %cst_194 = arith.constant dense<0.000000e+00> : vector<1x64xf32>
      %365 = tpu.matmul %364, %363, %cst_194 {dimension_numbers = #tpu.dot_dimension_numbers<[1], [0], [0], [1], [0, 0, 1, 1], [], []>} : vector<1x128xbf16>, vector<128x64xbf16>, vector<1x64xf32> -> vector<1x64xf32>
      %366 = arith.mulf %365, %365 : vector<1x64xf32>
      %cst_195 = arith.constant dense<0.000000e+00> : vector<1xf32>
      %367 = vector.multi_reduction <add>, %366, %cst_195 [1] : vector<1x64xf32> to vector<1xf32>
      %368 = vector.shape_cast %367 : vector<1xf32> to vector<1x1xf32>
      %cst_196 = arith.constant 9.99999996E-13 : f32
      %369 = vector.broadcast %cst_196 : f32 to vector<1x1xf32>
      %370 = arith.addf %368, %369 : vector<1x1xf32>
      %371 = math.rsqrt %370 : vector<1x1xf32>
      %372 = vector.broadcast %371 : vector<1x1xf32> to vector<1x64xf32>
      %373 = arith.mulf %365, %372 : vector<1x64xf32>
      %c1 = arith.constant 1 : index
      %c0_197 = arith.constant 0 : index
      %c0_198 = arith.constant 0 : index
      %374 = vector.load %arg18[%c1, %c0_197, %c0_198] : memref<2x1x64xf32, #tpu.memory_space<vmem>>, vector<1x1x64xf32>
      %375 = vector.shape_cast %374 : vector<1x1x64xf32> to vector<1x64xf32>
      %376 = vector.shape_cast %373 : vector<1x64xf32> to vector<1x1x64xf32>
      tpu.vector_store %arg18[%c1, %c0_197, %c0_198], %376 {strides = array<i32>} : memref<2x1x64xf32, #tpu.memory_space<vmem>>, vector<1x1x64xf32>,
    } else {
    }
    return
  }
  func.func @transform_0(%arg0: i32, %arg1: i32) -> (i32, i32) {
    %c0_i32 = arith.constant 0 : i32
    %c0_i32_0 = arith.constant 0 : i32
    return %arg0, %c0_i32 : i32, i32
  }
  func.func @transform_1(%arg0: i32, %arg1: i32) -> (i32, i32, i32) {
    %c0_i32 = arith.constant 0 : i32
    %c0_i32_0 = arith.constant 0 : i32
    %c0_i32_1 = arith.constant 0 : i32
    return %arg1, %c0_i32, %c0_i32_0 : i32, i32, i32
  }
  func.func @transform_2(%arg0: i32, %arg1: i32) -> (i32, i32, i32) {
    %c0_i32 = arith.constant 0 : i32
    %c0_i32_0 = arith.constant 0 : i32
    %c0_i32_1 = arith.constant 0 : i32
    return %arg1, %c0_i32, %c0_i32_0 : i32, i32, i32
  }
  func.func @transform_3(%arg0: i32, %arg1: i32) -> (i32, i32, i32) {
    %c0_i32 = arith.constant 0 : i32
    %c0_i32_0 = arith.constant 0 : i32
    %c0_i32_1 = arith.constant 0 : i32
    return %arg1, %c0_i32, %c0_i32_0 : i32, i32, i32
  }
  func.func @transform_4(%arg0: i32, %arg1: i32) -> (i32, i32, i32) {
    %c0_i32 = arith.constant 0 : i32
    %c0_i32_0 = arith.constant 0 : i32
    %c0_i32_1 = arith.constant 0 : i32
    return %arg1, %c0_i32, %c0_i32_0 : i32, i32, i32
  }
  func.func @transform_5(%arg0: i32, %arg1: i32) -> (i32, i32, i32) {
    %c0_i32 = arith.constant 0 : i32
    %c0_i32_0 = arith.constant 0 : i32
    %c0_i32_1 = arith.constant 0 : i32
    return %arg1, %c0_i32, %c0_i32_0 : i32, i32, i32
  }
  func.func @transform_6(%arg0: i32, %arg1: i32) -> (i32, i32, i32) {
    %c0_i32 = arith.constant 0 : i32
    %c0_i32_0 = arith.constant 0 : i32
    %c0_i32_1 = arith.constant 0 : i32
    return %arg1, %c0_i32, %c0_i32_0 : i32, i32, i32
  }
  func.func @transform_7(%arg0: i32, %arg1: i32) -> (i32, i32, i32) {
    %c0_i32 = arith.constant 0 : i32
    %c0_i32_0 = arith.constant 0 : i32
    %c0_i32_1 = arith.constant 0 : i32
    return %arg1, %c0_i32, %c0_i32_0 : i32, i32, i32
  }
  func.func @transform_8(%arg0: i32, %arg1: i32) -> (i32, i32, i32) {
    %c0_i32 = arith.constant 0 : i32
    %c0_i32_0 = arith.constant 0 : i32
    %c0_i32_1 = arith.constant 0 : i32
    return %arg1, %c0_i32, %c0_i32_0 : i32, i32, i32
  }
  func.func @transform_9(%arg0: i32, %arg1: i32) -> (i32, i32, i32) {
    %c0_i32 = arith.constant 0 : i32
    %c0_i32_0 = arith.constant 0 : i32
    %c0_i32_1 = arith.constant 0 : i32
    return %arg1, %c0_i32, %c0_i32_0 : i32, i32, i32
  }
  func.func @transform_10(%arg0: i32, %arg1: i32) -> (i32, i32, i32) {
    %c0_i32 = arith.constant 0 : i32
    %c0_i32_0 = arith.constant 0 : i32
    %c0_i32_1 = arith.constant 0 : i32
    return %arg1, %c0_i32, %c0_i32_0 : i32, i32, i32
  }
  func.func @transform_11(%arg0: i32, %arg1: i32) -> (i32, i32, i32) {
    %c0_i32 = arith.constant 0 : i32
    %c0_i32_0 = arith.constant 0 : i32
    %c0_i32_1 = arith.constant 0 : i32
    return %arg1, %c0_i32, %c0_i32_0 : i32, i32, i32
  }
  func.func @transform_12(%arg0: i32, %arg1: i32) -> (i32, i32, i32) {
    %c0_i32 = arith.constant 0 : i32
    %c0_i32_0 = arith.constant 0 : i32
    %c0_i32_1 = arith.constant 0 : i32
    return %arg1, %c0_i32, %c0_i32_0 : i32, i32, i32
  }
  func.func @transform_13(%arg0: i32, %arg1: i32) -> (i32, i32) {
    %c0_i32 = arith.constant 0 : i32
    %c0_i32_0 = arith.constant 0 : i32
    %c0_i32_1 = arith.constant 0 : i32
    return %c0_i32, %c0_i32_0 : i32, i32
  }
  func.func @transform_14(%arg0: i32, %arg1: i32) -> (i32, i32) {
    %c0_i32 = arith.constant 0 : i32
    %c0_i32_0 = arith.constant 0 : i32
    %c0_i32_1 = arith.constant 0 : i32
    return %c0_i32, %c0_i32_0 : i32, i32
  }
  func.func @transform_15(%arg0: i32, %arg1: i32) -> (i32, i32) {
    %c0_i32 = arith.constant 0 : i32
    %c0_i32_0 = arith.constant 0 : i32
    %c0_i32_1 = arith.constant 0 : i32
    return %c0_i32, %c0_i32_0 : i32, i32
  }
  func.func @transform_16(%arg0: i32, %arg1: i32) -> (i32, i32, i32) {
    %c0_i32 = arith.constant 0 : i32
    %c0_i32_0 = arith.constant 0 : i32
    %c0_i32_1 = arith.constant 0 : i32
    return %arg0, %c0_i32, %c0_i32_0 : i32, i32, i32
  }
}

</mosaic_0001>

<llo_original>
// kernel: _lambda_.1
$region0: #{_lambda_.1}
  #allocation0 [shape = 'u32[]', space=smem, size = 0x4, offset = 0x4, fixed_abs, tag = 'smem constant byte address 0x4 - core index']
  #allocation1 [shape = 'u32[144,128]{1,0:T(1,128)}', space=vmem, size = 0x12000, scoped, tag = 'internal scratch']
  #allocation2 [shape = 'f32[32,128]{1,0:T(8,128)}', space=vmem, size = 0x4000, scoped, tag = 'scratch operand']
  #allocation3 [shape = 'bf16[32,384]{1,0:T(8,128)(2,1)}', space=vmem, size = 0x6000, scoped, tag = 'scratch operand']
  #allocation4 [shape = 'f32[16,16]{1,0:T(8,128)}', space=vmem, size = 0x2000, scoped, tag = 'scratch operand']
  %s0 = inlined_call_operand.vmem [shape: f32[64,128], index: 0, kind: input, shape index: {}]
  %s1 = inlined_call_operand.vmem [shape: f32[2,1,128], index: 1, kind: input, shape index: {}, may-alias: {1,7}]
  %s2 = inlined_call_operand.vmem [shape: f32[2,1,128], index: 2, kind: input, shape index: {}, may-alias: {2,6,8,12}]
  %s3 = inlined_call_operand.hbm [shape: bf16[2,128,384], index: 3, kind: input, shape index: {}]
  %s4 = inlined_call_operand.vmem [shape: f32[2,1,384], index: 4, kind: input, shape index: {}]
  %s5 = inlined_call_operand.hbm [shape: bf16[2,128,128], index: 5, kind: input, shape index: {}]
  %s6 = inlined_call_operand.vmem [shape: f32[2,1,128], index: 6, kind: input, shape index: {}, may-alias: {2,6,8,12}]
  %s7 = inlined_call_operand.vmem [shape: f32[2,1,128], index: 7, kind: input, shape index: {}, may-alias: {1,7}]
  %s8 = inlined_call_operand.vmem [shape: f32[2,1,128], index: 8, kind: input, shape index: {}, may-alias: {2,6,8,12}]
  %s9 = inlined_call_operand.vmem [shape: bf16[2,128,512], index: 9, kind: input, shape index: {}]
  %s10 = inlined_call_operand.vmem [shape: f32[2,1,512], index: 10, kind: input, shape index: {}]
  %s11 = inlined_call_operand.hbm [shape: bf16[2,512,128], index: 11, kind: input, shape index: {}]
  %s12 = inlined_call_operand.vmem [shape: f32[2,1,128], index: 12, kind: input, shape index: {}, may-alias: {2,6,8,12}]
  %s13 = inlined_call_operand.vmem [shape: f32[1,128], index: 13, kind: input, shape index: {}]
  %s14 = inlined_call_operand.vmem [shape: f32[1,128], index: 14, kind: input, shape index: {}]
  %s15 = inlined_call_operand.hbm [shape: bf16[128,64], index: 15, kind: input, shape index: {}]
  %s16 = inlined_call_operand.hbm [shape: f32[4,1,64], index: 16, kind: output, shape index: {}]
  %s17 = sld [smem:[#allocation0]]
  $region125: #{_lambda_.1} parent=0
    _
  %s19 = ssub.s32 1, %s17
  %s20 = scalar_select 0, %s19, %s17
  $region1: #{_lambda_.1} parent=0
    #allocation5 [shape = 'u8[196608]{0}', space=vmem, size = 0x30000, scoped, tag = 'input window, operand 3']
    #allocation6 [shape = 's32[2]{0}', space=sflag, size = 0x8, scoped, tag = 'scoped memory for _lambda_.1']
    #allocation7 [shape = 's32[2]{0}', space=sflag, size = 0x8, scoped, tag = 'scoped memory for _lambda_.1']
    #allocation8 [shape = 'u8[65536]{0}', space=vmem, size = 0x10000, scoped, tag = 'input window, operand 5']
    #allocation9 [shape = 's32[2]{0}', space=sflag, size = 0x8, scoped, tag = 'scoped memory for _lambda_.1']
    #allocation10 [shape = 'u8[262144]{0}', space=vmem, size = 0x40000, scoped, tag = 'input window, operand 11']
    #allocation11 [shape = 'u8[32768]{0}', space=vmem, size = 0x8000, scoped, tag = 'input window, operand 15, single buffered']
    #allocation12 [shape = 's32[1]{0}', space=sflag, size = 0x4, scoped, tag = 'scoped memory for _lambda_.1']
    #allocation13 [shape = 'u8[2048]{0}', space=vmem, size = 0x800, scoped, tag = 'output window, operand 0']
    %21 = vsyncpa [#allocation6], 0
    %s22 = scalar_lea.sflag [#allocation6], 1
    %23 = vsyncpa %s22, 0
    %24 = vsyncpa [#allocation9], 0
    %s25 = scalar_lea.sflag [#allocation9], 1
    %26 = vsyncpa %s25, 0
    %27 = vsyncpa [#allocation12], 0
    %28 = vsyncpa [#allocation7], 0
    %s29 = scalar_lea.sflag [#allocation7], 1
    %30 = vsyncpa %s29, 0
    loop: start=0, step=1, limit=6
    $region2: #{_lambda_.1} parent=1 // loop_pre_header
      _
    $region3: #{_lambda_.1} parent=1 // loop_header
      %s32 = sphi 0, %s36
      %p33 = scmp.ge.s32.totalorder %s32, 6
      %s39 = sphi 0, %s51
      %s40 = sphi 0, %s47
      %s41 = sphi 0, %s39
      %s42 = sphi 0, %s40
      %s43 = sphi 0, %s41
      %s44 = sphi 0, %s42
      %s54 = sphi 0, %s56
      %s57 = sphi 0, %s54
      %s58 = sphi 0, %s57
      %s74 = sphi 0, %s58
      %s80 = sphi 0, %s82
      %s83 = sphi 0, %s80
      %s84 = sphi 0, %s83
      %s100 = sphi 0, %s84
      %s106 = sphi 0, %s108
      %s109 = sphi 0, %s106
      %s110 = sphi 0, %s109
      %s126 = sphi 0, %s110
      %s132 = sphi 0, %s134
      %s135 = sphi 0, %s132
      %s136 = sphi 0, %s135
      %s152 = sphi 0, %s136
      %s158 = sphi 0, %s160
      %s161 = sphi 0, %s158
      %s162 = sphi 0, %s161
      %s178 = sphi 0, %s162
      %s184 = sphi 0, %s186
      %s187 = sphi 0, %s184
      %s188 = sphi 0, %s187
      %s204 = sphi 0, %s188
      %s210 = sphi 0, %s212
      %s213 = sphi 0, %s210
      %s214 = sphi 0, %s213
      %s230 = sphi 0, %s214
      %s236 = sphi 0, %s238
      %s239 = sphi 0, %s236
      %s240 = sphi 0, %s239
      %s256 = sphi 0, %s240
      %s262 = sphi 0, %s264
      %s265 = sphi 0, %s262
      %s266 = sphi 0, %s265
      %s282 = sphi 0, %s266
      %s288 = sphi 0, %s290
      %s291 = sphi 0, %s288
      %s292 = sphi 0, %s291
      %s308 = sphi 0, %s292
      %s314 = sphi 0, %s316
      %s317 = sphi 0, %s314
      %s318 = sphi 0, %s317
      %s334 = sphi 0, %s318
      %s340 = sphi 0, %s342
      %s343 = sphi 0, %s340
      %s344 = sphi 0, %s343
      %s360 = sphi 0, %s344
      %s366 = sphi 0, %s368
      %s369 = sphi 0, %s366
      %s370 = sphi 0, %s369
      %s386 = sphi 0, %s370
      %s390 = sphi 0, %s390
      %s392 = sphi 0, %s390
      %s393 = sphi 0, %s392
      %s407 = sphi 0, %s393
      %s411 = sphi 0, %s411
      %s413 = sphi 0, %s411
      %s414 = sphi 0, %s413
      %s428 = sphi 0, %s414
      %s432 = sphi 0, %s432
      %s434 = sphi 0, %s432
      %s435 = sphi 0, %s434
      %s449 = sphi 0, %s435
      %s455 = sphi 0, %s457
      %s458 = sphi 0, %s455
      %s459 = sphi 0, %s458
      %s475 = sphi 0, %s459
    $region4: #{_lambda_.1} parent=1 // loop_header_branch
      %35 = sbr.rel (%p33) target = $region8
    $region5: #{_lambda_.1} parent=1 // loop_body
      %s37 = ssub.s32 %s32, 1
      %s38 = ssub.s32 %s32, 2
      %s45 = sadd.s32 1, %s40
      %p46 = scmp.ge.s32.totalorder %s45, 2
      %s47 = scalar_select %p46, 0, %s45
      %s48 = sadd.s32 1, %s39
      %s49 = scalar_select %p46, %s48, %s39
      %p50 = scmp.ge.s32.totalorder %s49, 2
      %s51 = scalar_select %p50, 0, %s49
      %s52 = ssub.s32 %s39, %s51
      %p53 = scmp.eq.s32.totalorder %s52, 0
      %s55 = sadd.s32 %s54, 1
      %s56 = scalar_select %p53, %s54, %s55
      %p59 = pneg %p53
      %p60 = scmp.eq.s32.totalorder %s32, 3
      %p61 = por %p59, %p60
      %p62 = scmp.ne.s32.totalorder %s54, %s57
      %p63 = scmp.eq.s32.totalorder %s32, 0
      %p64 = por %p62, %p63
      %p65 = scmp.ne.s32.totalorder %s54, %s57
      %p66 = scmp.eq.s32.totalorder %s37, 3
      %p67 = por %p65, %p66
      %p68 = scmp.ne.s32.totalorder %s57, %s58
      %p69 = scmp.eq.s32.totalorder %s37, 0
      %p70 = por %p68, %p69
      %p71 = scmp.ne.s32.totalorder %s57, %s58
      %p72 = scmp.eq.s32.totalorder %s38, 3
      %p73 = por %p71, %p72
      %p75 = scmp.ne.s32.totalorder %s58, %s74
      %p76 = scmp.eq.s32.totalorder %s38, 0
      %p77 = por %p75, %p76
      %s78 = ssub.s32 %s40, %s47
      %p79 = scmp.eq.s32.totalorder %s78, 0
      %s81 = sadd.s32 %s80, 1
      %s82 = scalar_select %p79, %s80, %s81
      %p85 = pneg %p79
      %p86 = scmp.eq.s32.totalorder %s32, 3
      %p87 = por %p85, %p86
      %p88 = scmp.ne.s32.totalorder %s80, %s83
      %p89 = scmp.eq.s32.totalorder %s32, 0
      %p90 = por %p88, %p89
      %p91 = scmp.ne.s32.totalorder %s80, %s83
      %p92 = scmp.eq.s32.totalorder %s37, 3
      %p93 = por %p91, %p92
      %p94 = scmp.ne.s32.totalorder %s83, %s84
      %p95 = scmp.eq.s32.totalorder %s37, 0
      %p96 = por %p94, %p95
      %p97 = scmp.ne.s32.totalorder %s83, %s84
      %p98 = scmp.eq.s32.totalorder %s38, 3
      %p99 = por %p97, %p98
      %p101 = scmp.ne.s32.totalorder %s84, %s100
      %p102 = scmp.eq.s32.totalorder %s38, 0
      %p103 = por %p101, %p102
      %s104 = ssub.s32 %s40, %s47
      %p105 = scmp.eq.s32.totalorder %s104, 0
      %s107 = sadd.s32 %s106, 1
      %s108 = scalar_select %p105, %s106, %s107
      %p111 = pneg %p105
      %p112 = scmp.eq.s32.totalorder %s32, 3
      %p113 = por %p111, %p112
      %p114 = scmp.ne.s32.totalorder %s106, %s109
      %p115 = scmp.eq.s32.totalorder %s32, 0
      %p116 = por %p114, %p115
      %p117 = scmp.ne.s32.totalorder %s106, %s109
      %p118 = scmp.eq.s32.totalorder %s37, 3
      %p119 = por %p117, %p118
      %p120 = scmp.ne.s32.totalorder %s109, %s110
      %p121 = scmp.eq.s32.totalorder %s37, 0
      %p122 = por %p120, %p121
      %p123 = scmp.ne.s32.totalorder %s109, %s110
      %p124 = scmp.eq.s32.totalorder %s38, 3
      %p125 = por %p123, %p124
      %p127 = scmp.ne.s32.totalorder %s110, %s126
      %p128 = scmp.eq.s32.totalorder %s38, 0
      %p129 = por %p127, %p128
      %s130 = ssub.s32 %s40, %s47
      %p131 = scmp.eq.s32.totalorder %s130, 0
      %s133 = sadd.s32 %s132, 1
      %s134 = scalar_select %p131, %s132, %s133
      %p137 = pneg %p131
      %p138 = scmp.eq.s32.totalorder %s32, 3
      %p139 = por %p137, %p138
      %p140 = scmp.ne.s32.totalorder %s132, %s135
      %p141 = scmp.eq.s32.totalorder %s32, 0
      %p142 = por %p140, %p141
      %p143 = scmp.ne.s32.totalorder %s132, %s135
      %p144 = scmp.eq.s32.totalorder %s37, 3
      %p145 = por %p143, %p144
      %p146 = scmp.ne.s32.totalorder %s135, %s136
      %p147 = scmp.eq.s32.totalorder %s37, 0
      %p148 = por %p146, %p147
      %p149 = scmp.ne.s32.totalorder %s135, %s136
      %p150 = scmp.eq.s32.totalorder %s38, 3
      %p151 = por %p149, %p150
      %p153 = scmp.ne.s32.totalorder %s136, %s152
      %p154 = scmp.eq.s32.totalorder %s38, 0
      %p155 = por %p153, %p154
      %s156 = ssub.s32 %s40, %s47
      %p157 = scmp.eq.s32.totalorder %s156, 0
      %s159 = sadd.s32 %s158, 1
      %s160 = scalar_select %p157, %s158, %s159
      %p163 = pneg %p157
      %p164 = scmp.eq.s32.totalorder %s32, 3
      %p165 = por %p163, %p164
      %p166 = scmp.ne.s32.totalorder %s158, %s161
      %p167 = scmp.eq.s32.totalorder %s32, 0
      %p168 = por %p166, %p167
      %p169 = scmp.ne.s32.totalorder %s158, %s161
      %p170 = scmp.eq.s32.totalorder %s37, 3
      %p171 = por %p169, %p170
      %p172 = scmp.ne.s32.totalorder %s161, %s162
      %p173 = scmp.eq.s32.totalorder %s37, 0
      %p174 = por %p172, %p173
      %p175 = scmp.ne.s32.totalorder %s161, %s162
      %p176 = scmp.eq.s32.totalorder %s38, 3
      %p177 = por %p175, %p176
      %p179 = scmp.ne.s32.totalorder %s162, %s178
      %p180 = scmp.eq.s32.totalorder %s38, 0
      %p181 = por %p179, %p180
      %s182 = ssub.s32 %s40, %s47
      %p183 = scmp.eq.s32.totalorder %s182, 0
      %s185 = sadd.s32 %s184, 1
      %s186 = scalar_select %p183, %s184, %s185
      %p189 = pneg %p183
      %p190 = scmp.eq.s32.totalorder %s32, 3
      %p191 = por %p189, %p190
      %p192 = scmp.ne.s32.totalorder %s184, %s187
      %p193 = scmp.eq.s32.totalorder %s32, 0
      %p194 = por %p192, %p193
      %p195 = scmp.ne.s32.totalorder %s184, %s187
      %p196 = scmp.eq.s32.totalorder %s37, 3
      %p197 = por %p195, %p196
      %p198 = scmp.ne.s32.totalorder %s187, %s188
      %p199 = scmp.eq.s32.totalorder %s37, 0
      %p200 = por %p198, %p199
      %p201 = scmp.ne.s32.totalorder %s187, %s188
      %p202 = scmp.eq.s32.totalorder %s38, 3
      %p203 = por %p201, %p202
      %p205 = scmp.ne.s32.totalorder %s188, %s204
      %p206 = scmp.eq.s32.totalorder %s38, 0
      %p207 = por %p205, %p206
      %s208 = ssub.s32 %s40, %s47
      %p209 = scmp.eq.s32.totalorder %s208, 0
      %s211 = sadd.s32 %s210, 1
      %s212 = scalar_select %p209, %s210, %s211
      %p215 = pneg %p209
      %p216 = scmp.eq.s32.totalorder %s32, 3
      %p217 = por %p215, %p216
      %p218 = scmp.ne.s32.totalorder %s210, %s213
      %p219 = scmp.eq.s32.totalorder %s32, 0
      %p220 = por %p218, %p219
      %p221 = scmp.ne.s32.totalorder %s210, %s213
      %p222 = scmp.eq.s32.totalorder %s37, 3
      %p223 = por %p221, %p222
      %p224 = scmp.ne.s32.totalorder %s213, %s214
      %p225 = scmp.eq.s32.totalorder %s37, 0
      %p226 = por %p224, %p225
      %p227 = scmp.ne.s32.totalorder %s213, %s214
      %p228 = scmp.eq.s32.totalorder %s38, 3
      %p229 = por %p227, %p228
      %p231 = scmp.ne.s32.totalorder %s214, %s230
      %p232 = scmp.eq.s32.totalorder %s38, 0
      %p233 = por %p231, %p232
      %s234 = ssub.s32 %s40, %s47
      %p235 = scmp.eq.s32.totalorder %s234, 0
      %s237 = sadd.s32 %s236, 1
      %s238 = scalar_select %p235, %s236, %s237
      %p241 = pneg %p235
      %p242 = scmp.eq.s32.totalorder %s32, 3
      %p243 = por %p241, %p242
      %p244 = scmp.ne.s32.totalorder %s236, %s239
      %p245 = scmp.eq.s32.totalorder %s32, 0
      %p246 = por %p244, %p245
      %p247 = scmp.ne.s32.totalorder %s236, %s239
      %p248 = scmp.eq.s32.totalorder %s37, 3
      %p249 = por %p247, %p248
      %p250 = scmp.ne.s32.totalorder %s239, %s240
      %p251 = scmp.eq.s32.totalorder %s37, 0
      %p252 = por %p250, %p251
      %p253 = scmp.ne.s32.totalorder %s239, %s240
      %p254 = scmp.eq.s32.totalorder %s38, 3
      %p255 = por %p253, %p254
      %p257 = scmp.ne.s32.totalorder %s240, %s256
      %p258 = scmp.eq.s32.totalorder %s38, 0
      %p259 = por %p257, %p258
      %s260 = ssub.s32 %s40, %s47
      %p261 = scmp.eq.s32.totalorder %s260, 0
      %s263 = sadd.s32 %s262, 1
      %s264 = scalar_select %p261, %s262, %s263
      %p267 = pneg %p261
      %p268 = scmp.eq.s32.totalorder %s32, 3
      %p269 = por %p267, %p268
      %p270 = scmp.ne.s32.totalorder %s262, %s265
      %p271 = scmp.eq.s32.totalorder %s32, 0
      %p272 = por %p270, %p271
      %p273 = scmp.ne.s32.totalorder %s262, %s265
      %p274 = scmp.eq.s32.totalorder %s37, 3
      %p275 = por %p273, %p274
      %p276 = scmp.ne.s32.totalorder %s265, %s266
      %p277 = scmp.eq.s32.totalorder %s37, 0
      %p278 = por %p276, %p277
      %p279 = scmp.ne.s32.totalorder %s265, %s266
      %p280 = scmp.eq.s32.totalorder %s38, 3
      %p281 = por %p279, %p280
      %p283 = scmp.ne.s32.totalorder %s266, %s282
      %p284 = scmp.eq.s32.totalorder %s38, 0
      %p285 = por %p283, %p284
      %s286 = ssub.s32 %s40, %s47
      %p287 = scmp.eq.s32.totalorder %s286, 0
      %s289 = sadd.s32 %s288, 1
      %s290 = scalar_select %p287, %s288, %s289
      %p293 = pneg %p287
      %p294 = scmp.eq.s32.totalorder %s32, 3
      %p295 = por %p293, %p294
      %p296 = scmp.ne.s32.totalorder %s288, %s291
      %p297 = scmp.eq.s32.totalorder %s32, 0
      %p298 = por %p296, %p297
      %p299 = scmp.ne.s32.totalorder %s288, %s291
      %p300 = scmp.eq.s32.totalorder %s37, 3
      %p301 = por %p299, %p300
      %p302 = scmp.ne.s32.totalorder %s291, %s292
      %p303 = scmp.eq.s32.totalorder %s37, 0
      %p304 = por %p302, %p303
      %p305 = scmp.ne.s32.totalorder %s291, %s292
      %p306 = scmp.eq.s32.totalorder %s38, 3
      %p307 = por %p305, %p306
      %p309 = scmp.ne.s32.totalorder %s292, %s308
      %p310 = scmp.eq.s32.totalorder %s38, 0
      %p311 = por %p309, %p310
      %s312 = ssub.s32 %s40, %s47
      %p313 = scmp.eq.s32.totalorder %s312, 0
      %s315 = sadd.s32 %s314, 1
      %s316 = scalar_select %p313, %s314, %s315
      %p319 = pneg %p313
      %p320 = scmp.eq.s32.totalorder %s32, 3
      %p321 = por %p319, %p320
      %p322 = scmp.ne.s32.totalorder %s314, %s317
      %p323 = scmp.eq.s32.totalorder %s32, 0
      %p324 = por %p322, %p323
      %p325 = scmp.ne.s32.totalorder %s314, %s317
      %p326 = scmp.eq.s32.totalorder %s37, 3
      %p327 = por %p325, %p326
      %p328 = scmp.ne.s32.totalorder %s317, %s318
      %p329 = scmp.eq.s32.totalorder %s37, 0
      %p330 = por %p328, %p329
      %p331 = scmp.ne.s32.totalorder %s317, %s318
      %p332 = scmp.eq.s32.totalorder %s38, 3
      %p333 = por %p331, %p332
      %p335 = scmp.ne.s32.totalorder %s318, %s334
      %p336 = scmp.eq.s32.totalorder %s38, 0
      %p337 = por %p335, %p336
      %s338 = ssub.s32 %s40, %s47
      %p339 = scmp.eq.s32.totalorder %s338, 0
      %s341 = sadd.s32 %s340, 1
      %s342 = scalar_select %p339, %s340, %s341
      %p345 = pneg %p339
      %p346 = scmp.eq.s32.totalorder %s32, 3
      %p347 = por %p345, %p346
      %p348 = scmp.ne.s32.totalorder %s340, %s343
      %p349 = scmp.eq.s32.totalorder %s32, 0
      %p350 = por %p348, %p349
      %p351 = scmp.ne.s32.totalorder %s340, %s343
      %p352 = scmp.eq.s32.totalorder %s37, 3
      %p353 = por %p351, %p352
      %p354 = scmp.ne.s32.totalorder %s343, %s344
      %p355 = scmp.eq.s32.totalorder %s37, 0
      %p356 = por %p354, %p355
      %p357 = scmp.ne.s32.totalorder %s343, %s344
      %p358 = scmp.eq.s32.totalorder %s38, 3
      %p359 = por %p357, %p358
      %p361 = scmp.ne.s32.totalorder %s344, %s360
      %p362 = scmp.eq.s32.totalorder %s38, 0
      %p363 = por %p361, %p362
      %s364 = ssub.s32 %s40, %s47
      %p365 = scmp.eq.s32.totalorder %s364, 0
      %s367 = sadd.s32 %s366, 1
      %s368 = scalar_select %p365, %s366, %s367
      %p371 = pneg %p365
      %p372 = scmp.eq.s32.totalorder %s32, 3
      %p373 = por %p371, %p372
      %p374 = scmp.ne.s32.totalorder %s366, %s369
      %p375 = scmp.eq.s32.totalorder %s32, 0
      %p376 = por %p374, %p375
      %p377 = scmp.ne.s32.totalorder %s366, %s369
      %p378 = scmp.eq.s32.totalorder %s37, 3
      %p379 = por %p377, %p378
      %p380 = scmp.ne.s32.totalorder %s369, %s370
      %p381 = scmp.eq.s32.totalorder %s37, 0
      %p382 = por %p380, %p381
      %p383 = scmp.ne.s32.totalorder %s369, %s370
      %p384 = scmp.eq.s32.totalorder %s38, 3
      %p385 = por %p383, %p384
      %p387 = scmp.ne.s32.totalorder %s370, %s386
      %p388 = scmp.eq.s32.totalorder %s38, 0
      %p389 = por %p387, %p388
      %s391 = sadd.s32 %s390, 1
      %p394 = scmp.eq.s32.totalorder %s32, 3
      %p395 = scmp.ne.s32.totalorder %s390, %s392
      %p396 = scmp.eq.s32.totalorder %s32, 0
      %p397 = por %p395, %p396
      %p398 = scmp.ne.s32.totalorder %s390, %s392
      %p399 = scmp.eq.s32.totalorder %s37, 3
      %p400 = por %p398, %p399
      %p401 = scmp.ne.s32.totalorder %s392, %s393
      %p402 = scmp.eq.s32.totalorder %s37, 0
      %p403 = por %p401, %p402
      %p404 = scmp.ne.s32.totalorder %s392, %s393
      %p405 = scmp.eq.s32.totalorder %s38, 3
      %p406 = por %p404, %p405
      %p408 = scmp.ne.s32.totalorder %s393, %s407
      %p409 = scmp.eq.s32.totalorder %s38, 0
      %p410 = por %p408, %p409
      %s412 = sadd.s32 %s411, 1
      %p415 = scmp.eq.s32.totalorder %s32, 3
      %p416 = scmp.ne.s32.totalorder %s411, %s413
      %p417 = scmp.eq.s32.totalorder %s32, 0
      %p418 = por %p416, %p417
      %p419 = scmp.ne.s32.totalorder %s411, %s413
      %p420 = scmp.eq.s32.totalorder %s37, 3
      %p421 = por %p419, %p420
      %p422 = scmp.ne.s32.totalorder %s413, %s414
      %p423 = scmp.eq.s32.totalorder %s37, 0
      %p424 = por %p422, %p423
      %p425 = scmp.ne.s32.totalorder %s413, %s414
      %p426 = scmp.eq.s32.totalorder %s38, 3
      %p427 = por %p425, %p426
      %p429 = scmp.ne.s32.totalorder %s414, %s428
      %p430 = scmp.eq.s32.totalorder %s38, 0
      %p431 = por %p429, %p430
      %s433 = sadd.s32 %s432, 1
      %p436 = scmp.eq.s32.totalorder %s32, 3
      %p437 = scmp.ne.s32.totalorder %s432, %s434
      %p438 = scmp.eq.s32.totalorder %s32, 0
      %p439 = por %p437, %p438
      %p440 = scmp.ne.s32.totalorder %s432, %s434
      %p441 = scmp.eq.s32.totalorder %s37, 3
      %p442 = por %p440, %p441
      %p443 = scmp.ne.s32.totalorder %s434, %s435
      %p444 = scmp.eq.s32.totalorder %s37, 0
      %p445 = por %p443, %p444
      %p446 = scmp.ne.s32.totalorder %s434, %s435
      %p447 = scmp.eq.s32.totalorder %s38, 3
      %p448 = por %p446, %p447
      %p450 = scmp.ne.s32.totalorder %s435, %s449
      %p451 = scmp.eq.s32.totalorder %s38, 0
      %p452 = por %p450, %p451
      %s453 = ssub.s32 %s39, %s51
      %p454 = scmp.eq.s32.totalorder %s453, 0
      %s456 = sadd.s32 %s455, 1
      %s457 = scalar_select %p454, %s455, %s456
      %p460 = pneg %p454
      %p461 = scmp.eq.s32.totalorder %s32, 3
      %p462 = por %p460, %p461
      %p463 = scmp.ne.s32.totalorder %s455, %s458
      %p464 = scmp.eq.s32.totalorder %s32, 0
      %p465 = por %p463, %p464
      %p466 = scmp.ne.s32.totalorder %s455, %s458
      %p467 = scmp.eq.s32.totalorder %s37, 3
      %p468 = por %p466, %p467
      %p469 = scmp.ne.s32.totalorder %s458, %s459
      %p470 = scmp.eq.s32.totalorder %s37, 0
      %p471 = por %p469, %p470
      %p472 = scmp.ne.s32.totalorder %s458, %s459
      %p473 = scmp.eq.s32.totalorder %s38, 3
      %p474 = por %p472, %p473
      %p476 = scmp.ne.s32.totalorder %s459, %s475
      %p477 = scmp.eq.s32.totalorder %s38, 0
      %p478 = por %p476, %p477
      %p479 = scmp.le.s32.totalorder 1, %s32
      %p480 = scmp.lt.s32.totalorder %s32, 5
      %p481 = pnand %p479, %p480
      %p482 = pneg %p481
      // Predicated region
      $region9: #{_lambda_.1} parent=5 // pred_check
        _
      $region10: #{_lambda_.1} parent=5 // pred_check_branch
        %484 = sbr.rel (%p481) target = $region12
      $region11: #{_lambda_.1} parent=5 // pred_region
        %s485 = ssub.s32 %s32, 1
        // Predicated region
        $region13: #{_lambda_.1} parent=11 // pred_check
          %p486 = pneg %p403
        $region14: #{_lambda_.1} parent=11 // pred_check_branch
          %488 = sbr.rel (%p486) target = $region16
        $region15: #{_lambda_.1} parent=11 // pred_region
          _
        $region16: #{_lambda_.1} parent=11 // pred_fallthru
          _
        // Predicated region
        $region17: #{_lambda_.1} parent=11 // pred_check
          %p489 = pneg %p424
        $region18: #{_lambda_.1} parent=11 // pred_check_branch
          %491 = sbr.rel (%p489) target = $region20
        $region19: #{_lambda_.1} parent=11 // pred_region
          _
        $region20: #{_lambda_.1} parent=11 // pred_fallthru
          _
        // Predicated region
        $region21: #{_lambda_.1} parent=11 // pred_check
          %p492 = pneg %p445
        $region22: #{_lambda_.1} parent=11 // pred_check_branch
          %494 = sbr.rel (%p492) target = $region24
        $region23: #{_lambda_.1} parent=11 // pred_region
          %s496 = ssub.s32 1024, 1024
          %497 = vsyncadd [#allocation12], %s496
          %s498 = sshll.u32 [#allocation11], 4
          %s499 = int_to_ptr.vmem [resolvable:$true] %s498
          %504 = dma.hbm_to_vmem [thread:$0]  %s15, 1024, %s499, [#allocation12], 64, 64, 4
        $region24: #{_lambda_.1} parent=11 // pred_fallthru
          _
      $region12: #{_lambda_.1} parent=5 // pred_fallthru
        _
      %p505 = scmp.lt.s32.totalorder %s32, 4
      // Predicated region
      $region25: #{_lambda_.1} parent=5 // pred_check
        %p506 = pneg %p505
      $region26: #{_lambda_.1} parent=5 // pred_check_branch
        %508 = sbr.rel (%p506) target = $region28
      $region27: #{_lambda_.1} parent=5 // pred_region
        // Predicated region
        $region29: #{_lambda_.1} parent=27 // pred_check
          %p509 = pneg %p64
        $region30: #{_lambda_.1} parent=27 // pred_check_branch
          %511 = sbr.rel (%p509) target = $region32
        $region31: #{_lambda_.1} parent=27 // pred_region
          %s512 = smul.u32 4, %s39
          %p513 = scmp.lt.s32.totalorder %s512, 7
          %s514 = scalar_select %p513, %s512, 7
          %s515 = smul.addr %s514, 8
          %s516 = scalar_lea.vmem %s0, %s515
          %s517 = smul.u32 4, %s39
        $region32: #{_lambda_.1} parent=27 // pred_fallthru
          _
        // Predicated region
        $region33: #{_lambda_.1} parent=27 // pred_check
          %p518 = pneg %p90
        $region34: #{_lambda_.1} parent=27 // pred_check_branch
          %520 = sbr.rel (%p518) target = $region36
        $region35: #{_lambda_.1} parent=27 // pred_region
          %p521 = scmp.lt.s32.totalorder %s40, 1
          %s522 = scalar_select %p521, %s40, 1
          %s523 = scalar_lea.vmem %s1, %s522
        $region36: #{_lambda_.1} parent=27 // pred_fallthru
          _
        // Predicated region
        $region37: #{_lambda_.1} parent=27 // pred_check
          %p524 = pneg %p116
        $region38: #{_lambda_.1} parent=27 // pred_check_branch
          %526 = sbr.rel (%p524) target = $region40
        $region39: #{_lambda_.1} parent=27 // pred_region
          %p527 = scmp.lt.s32.totalorder %s40, 1
          %s528 = scalar_select %p527, %s40, 1
          %s529 = scalar_lea.vmem %s2, %s528
        $region40: #{_lambda_.1} parent=27 // pred_fallthru
          _
        // Predicated region
        $region41: #{_lambda_.1} parent=27 // pred_check
          %p530 = pneg %p142
        $region42: #{_lambda_.1} parent=27 // pred_check_branch
          %532 = sbr.rel (%p530) target = $region44
        $region43: #{_lambda_.1} parent=27 // pred_region
          %s533 = sand.u32 %s132, 1
          %s534 = scalar_lea.sflag [#allocation6], %s533
          %s535 = sand.u32 %s132, 1
          %s536 = smul.addr %s535, 192
          %s537 = scalar_lea.vmem [#allocation5], %s536
          %s539 = ssub.s32 3072, 3072
          %540 = vsyncadd %s534, %s539
          %s541 = smul.addr %s40, 48
          %s542 = smul.addr %s541, 64
          %s543 = scalar_lea.hbm %s3, %s542
          %s544 = sshll.u32 %s537, 4
          %s545 = int_to_ptr.vmem [resolvable:$true] %s544
          %550 = dma.hbm_to_vmem [thread:$0]  %s543, 3072, %s545, %s534, 192, 192, 12
        $region44: #{_lambda_.1} parent=27 // pred_fallthru
          _
        // Predicated region
        $region45: #{_lambda_.1} parent=27 // pred_check
          %p551 = pneg %p168
        $region46: #{_lambda_.1} parent=27 // pred_check_branch
          %553 = sbr.rel (%p551) target = $region48
        $region47: #{_lambda_.1} parent=27 // pred_region
          %p554 = scmp.lt.s32.totalorder %s40, 1
          %s555 = scalar_select %p554, %s40, 1
          %s556 = smul.addr %s555, 3
          %s557 = scalar_lea.vmem %s4, %s556
        $region48: #{_lambda_.1} parent=27 // pred_fallthru
          _
        // Predicated region
        $region49: #{_lambda_.1} parent=27 // pred_check
          %p558 = pneg %p194
        $region50: #{_lambda_.1} parent=27 // pred_check_branch
          %560 = sbr.rel (%p558) target = $region52
        $region51: #{_lambda_.1} parent=27 // pred_region
          %s561 = sand.u32 %s32, 1
          %s562 = scalar_lea.sflag [#allocation9], %s561
          %s563 = sand.u32 %s184, 1
          %s564 = smul.addr %s563, 64
          %s565 = scalar_lea.vmem [#allocation8], %s564
          %s567 = ssub.s32 1024, 1024
          %568 = vsyncadd %s562, %s567
          %s569 = smul.addr %s40, 16
          %s570 = smul.addr %s569, 64
          %s571 = scalar_lea.hbm %s5, %s570
          %s572 = sshll.u32 %s565, 4
          %s573 = int_to_ptr.vmem [resolvable:$true] %s572
          %578 = dma.hbm_to_vmem [thread:$0]  %s571, 1024, %s573, %s562, 64, 64, 4
        $region52: #{_lambda_.1} parent=27 // pred_fallthru
          _
        // Predicated region
        $region53: #{_lambda_.1} parent=27 // pred_check
          %p579 = pneg %p220
        $region54: #{_lambda_.1} parent=27 // pred_check_branch
          %581 = sbr.rel (%p579) target = $region56
        $region55: #{_lambda_.1} parent=27 // pred_region
          %p582 = scmp.lt.s32.totalorder %s40, 1
          %s583 = scalar_select %p582, %s40, 1
          %s584 = scalar_lea.vmem %s6, %s583
        $region56: #{_lambda_.1} parent=27 // pred_fallthru
          _
        // Predicated region
        $region57: #{_lambda_.1} parent=27 // pred_check
          %p585 = pneg %p246
        $region58: #{_lambda_.1} parent=27 // pred_check_branch
          %587 = sbr.rel (%p585) target = $region60
        $region59: #{_lambda_.1} parent=27 // pred_region
          %p588 = scmp.lt.s32.totalorder %s40, 1
          %s589 = scalar_select %p588, %s40, 1
          %s590 = scalar_lea.vmem %s7, %s589
        $region60: #{_lambda_.1} parent=27 // pred_fallthru
          _
        // Predicated region
        $region61: #{_lambda_.1} parent=27 // pred_check
          %p591 = pneg %p272
        $region62: #{_lambda_.1} parent=27 // pred_check_branch
          %593 = sbr.rel (%p591) target = $region64
        $region63: #{_lambda_.1} parent=27 // pred_region
          %p594 = scmp.lt.s32.totalorder %s40, 1
          %s595 = scalar_select %p594, %s40, 1
          %s596 = scalar_lea.vmem %s8, %s595
        $region64: #{_lambda_.1} parent=27 // pred_fallthru
          _
        // Predicated region
        $region65: #{_lambda_.1} parent=27 // pred_check
          %p597 = pneg %p298
        $region66: #{_lambda_.1} parent=27 // pred_check_branch
          %599 = sbr.rel (%p597) target = $region68
        $region67: #{_lambda_.1} parent=27 // pred_region
          %p600 = scmp.lt.s32.totalorder %s40, 1
          %s601 = scalar_select %p600, %s40, 1
          %s602 = smul.addr %s601, 64
          %s603 = smul.addr %s602, 4
          %s604 = scalar_lea.vmem %s9, %s603
        $region68: #{_lambda_.1} parent=27 // pred_fallthru
          _
        // Predicated region
        $region69: #{_lambda_.1} parent=27 // pred_check
          %p605 = pneg %p324
        $region70: #{_lambda_.1} parent=27 // pred_check_branch
          %607 = sbr.rel (%p605) target = $region72
        $region71: #{_lambda_.1} parent=27 // pred_region
          %p608 = scmp.lt.s32.totalorder %s40, 1
          %s609 = scalar_select %p608, %s40, 1
          %s610 = smul.addr %s609, 4
          %s611 = scalar_lea.vmem %s10, %s610
        $region72: #{_lambda_.1} parent=27 // pred_fallthru
          _
        // Predicated region
        $region73: #{_lambda_.1} parent=27 // pred_check
          %p612 = pneg %p350
        $region74: #{_lambda_.1} parent=27 // pred_check_branch
          %614 = sbr.rel (%p612) target = $region76
        $region75: #{_lambda_.1} parent=27 // pred_region
          %s615 = sand.u32 %s32, 1
          %s616 = scalar_lea.sflag [#allocation9], %s615
          %s617 = sand.u32 %s340, 1
          %s618 = smul.addr %s617, 256
          %s619 = scalar_lea.vmem [#allocation10], %s618
          %s621 = ssub.s32 4096, 4096
          %622 = vsyncadd %s616, %s621
          %s623 = smul.addr %s40, 64
          %s624 = smul.addr %s623, 64
          %s625 = scalar_lea.hbm %s11, %s624
          %s626 = sshll.u32 %s619, 4
          %s627 = int_to_ptr.vmem [resolvable:$true] %s626
          %632 = dma.hbm_to_vmem [thread:$0]  %s625, 4096, %s627, %s616, 64, 64, 4
        $region76: #{_lambda_.1} parent=27 // pred_fallthru
          _
        // Predicated region
        $region77: #{_lambda_.1} parent=27 // pred_check
          %p633 = pneg %p376
        $region78: #{_lambda_.1} parent=27 // pred_check_branch
          %635 = sbr.rel (%p633) target = $region80
        $region79: #{_lambda_.1} parent=27 // pred_region
          %p636 = scmp.lt.s32.totalorder %s40, 1
          %s637 = scalar_select %p636, %s40, 1
          %s638 = scalar_lea.vmem %s12, %s637
        $region80: #{_lambda_.1} parent=27 // pred_fallthru
          _
      $region28: #{_lambda_.1} parent=5 // pred_fallthru
        _
      %p639 = scmp.le.s32.totalorder 1, %s32
      %p640 = scmp.lt.s32.totalorder %s32, 5
      %p641 = pnand %p639, %p640
      %p642 = pneg %p641
      // Predicated region
      $region81: #{_lambda_.1} parent=5 // pred_check
        _
      $region82: #{_lambda_.1} parent=5 // pred_check_branch
        %644 = sbr.rel (%p641) target = $region84
      $region83: #{_lambda_.1} parent=5 // pred_region
        %s645 = ssub.s32 %s32, 1
        %s646 = sand.u32 %s135, 1
        %s647 = scalar_lea.sflag [#allocation6], %s646
        %s648 = sand.u32 %s135, 1
        %s649 = smul.addr %s648, 192
        %s650 = scalar_lea.vmem [#allocation5], %s649
        // Predicated region
        $region85: #{_lambda_.1} parent=83 // pred_check
          %p651 = pneg %p148
        $region86: #{_lambda_.1} parent=83 // pred_check_branch
          %653 = sbr.rel (%p651) target = $region88
        $region87: #{_lambda_.1} parent=83 // pred_region
          %654 = dma.done %s647, 3072
        $region88: #{_lambda_.1} parent=83 // pred_fallthru
          _
        %s655 = sand.u32 %s37, 1
        %s656 = scalar_lea.sflag [#allocation9], %s655
        %s657 = sand.u32 %s187, 1
        %s658 = smul.addr %s657, 64
        %s659 = scalar_lea.vmem [#allocation8], %s658
        // Predicated region
        $region89: #{_lambda_.1} parent=83 // pred_check
          %p660 = pneg %p200
        $region90: #{_lambda_.1} parent=83 // pred_check_branch
          %662 = sbr.rel (%p660) target = $region92
        $region91: #{_lambda_.1} parent=83 // pred_region
          %663 = dma.done %s656, 1024
        $region92: #{_lambda_.1} parent=83 // pred_fallthru
          _
        %s664 = sand.u32 %s37, 1
        %s665 = scalar_lea.sflag [#allocation9], %s664
        %s666 = sand.u32 %s343, 1
        %s667 = smul.addr %s666, 256
        %s668 = scalar_lea.vmem [#allocation10], %s667
        // Predicated region
        $region93: #{_lambda_.1} parent=83 // pred_check
          %p669 = pneg %p356
        $region94: #{_lambda_.1} parent=83 // pred_check_branch
          %671 = sbr.rel (%p669) target = $region96
        $region95: #{_lambda_.1} parent=83 // pred_region
          %672 = dma.done %s665, 4096
        $region96: #{_lambda_.1} parent=83 // pred_fallthru
          _
        // Predicated region
        $region97: #{_lambda_.1} parent=83 // pred_check
          %p673 = pneg %p445
        $region98: #{_lambda_.1} parent=83 // pred_check_branch
          %675 = sbr.rel (%p673) target = $region100
        $region99: #{_lambda_.1} parent=83 // pred_region
          %676 = dma.done [#allocation12], 1024
        $region100: #{_lambda_.1} parent=83 // pred_fallthru
          _
        %s677 = smul.u32 4, %s41
        %p678 = scmp.lt.s32.totalorder %s677, 7
        %s679 = scalar_select %p678, %s677, 7
        %s680 = smul.addr %s679, 8
        %s681 = scalar_lea.vmem %s0, %s680
        %p682 = pneg %p70
        %p683 = pneg %p67
        %p684 = scmp.lt.s32.totalorder %s42, 1
        %s685 = scalar_select %p684, %s42, 1
        %s686 = scalar_lea.vmem %s1, %s685
        %p687 = pneg %p96
        %p688 = pneg %p93
        %p689 = scmp.lt.s32.totalorder %s42, 1
        %s690 = scalar_select %p689, %s42, 1
        %s691 = scalar_lea.vmem %s2, %s690
        %p692 = pneg %p122
        %p693 = pneg %p119
        %s694 = sand.u32 %s135, 1
        %s695 = scalar_lea.sflag [#allocation6], %s694
        %s696 = sand.u32 %s135, 1
        %s697 = smul.addr %s696, 192
        %s698 = scalar_lea.vmem [#allocation5], %s697
        %p699 = pneg %p148
        %p700 = pneg %p145
        %p701 = scmp.lt.s32.totalorder %s42, 1
        %s702 = scalar_select %p701, %s42, 1
        %s703 = smul.addr %s702, 3
        %s704 = scalar_lea.vmem %s4, %s703
        %p705 = pneg %p174
        %p706 = pneg %p171
        %s707 = sand.u32 %s37, 1
        %s708 = scalar_lea.sflag [#allocation9], %s707
        %s709 = sand.u32 %s187, 1
        %s710 = smul.addr %s709, 64
        %s711 = scalar_lea.vmem [#allocation8], %s710
        %p712 = pneg %p200
        %p713 = pneg %p197
        %p714 = scmp.lt.s32.totalorder %s42, 1
        %s715 = scalar_select %p714, %s42, 1
        %s716 = scalar_lea.vmem %s6, %s715
        %p717 = pneg %p226
        %p718 = pneg %p223
        %p719 = scmp.lt.s32.totalorder %s42, 1
        %s720 = scalar_select %p719, %s42, 1
        %s721 = scalar_lea.vmem %s7, %s720
        %p722 = pneg %p252
        %p723 = pneg %p249
        %p724 = scmp.lt.s32.totalorder %s42, 1
        %s725 = scalar_select %p724, %s42, 1
        %s726 = scalar_lea.vmem %s8, %s725
        %p727 = pneg %p278
        %p728 = pneg %p275
        %p729 = scmp.lt.s32.totalorder %s42, 1
        %s730 = scalar_select %p729, %s42, 1
        %s731 = smul.addr %s730, 64
        %s732 = smul.addr %s731, 4
        %s733 = scalar_lea.vmem %s9, %s732
        %p734 = pneg %p304
        %p735 = pneg %p301
        %p736 = scmp.lt.s32.totalorder %s42, 1
        %s737 = scalar_select %p736, %s42, 1
        %s738 = smul.addr %s737, 4
        %s739 = scalar_lea.vmem %s10, %s738
        %p740 = pneg %p330
        %p741 = pneg %p327
        %s742 = sand.u32 %s37, 1
        %s743 = scalar_lea.sflag [#allocation9], %s742
        %s744 = sand.u32 %s343, 1
        %s745 = smul.addr %s744, 256
        %s746 = scalar_lea.vmem [#allocation10], %s745
        %p747 = pneg %p356
        %p748 = pneg %p353
        %p749 = scmp.lt.s32.totalorder %s42, 1
        %s750 = scalar_select %p749, %s42, 1
        %s751 = scalar_lea.vmem %s12, %s750
        %p752 = pneg %p382
        %p753 = pneg %p379
        %p754 = pneg %p403
        %p755 = pneg %p400
        %p756 = pneg %p424
        %p757 = pneg %p421
        %p758 = pneg %p445
        %p759 = pneg %p442
        %p760 = pneg %p471
        %p761 = pneg %p468
        %s762 = sand.u32 %s458, 1
        %s763 = scalar_lea.sflag [#allocation7], %s762
        %s764 = sand.u32 %s458, 1
        %s765 = smul.addr %s764, 2
        %s766 = scalar_lea.vmem [#allocation13], %s765
        %s767 = smul.u32 4, %s41
        %p768 = scmp.lt.s32.totalorder %s767, 7
        %s769 = scalar_select %p768, %s767, 7
        %s770 = smul.addr %s769, 8
        %s771 = scalar_lea.vmem %s0, %s770
        %s772 = smul.u32 4, %s41
        %p773 = scmp.lt.s32.totalorder %s42, 1
        %s774 = scalar_select %p773, %s42, 1
        %s775 = scalar_lea.vmem %s1, %s774
        %p776 = scmp.lt.s32.totalorder %s42, 1
        %s777 = scalar_select %p776, %s42, 1
        %s778 = scalar_lea.vmem %s2, %s777
        %p779 = scmp.lt.s32.totalorder %s42, 1
        %s780 = scalar_select %p779, %s42, 1
        %s781 = smul.addr %s780, 3
        %s782 = scalar_lea.vmem %s4, %s781
        %p783 = scmp.lt.s32.totalorder %s42, 1
        %s784 = scalar_select %p783, %s42, 1
        %s785 = scalar_lea.vmem %s6, %s784
        %p786 = scmp.lt.s32.totalorder %s42, 1
        %s787 = scalar_select %p786, %s42, 1
        %s788 = scalar_lea.vmem %s7, %s787
        %p789 = scmp.lt.s32.totalorder %s42, 1
        %s790 = scalar_select %p789, %s42, 1
        %s791 = scalar_lea.vmem %s8, %s790
        %p792 = scmp.lt.s32.totalorder %s42, 1
        %s793 = scalar_select %p792, %s42, 1
        %s794 = smul.addr %s793, 64
        %s795 = smul.addr %s794, 4
        %s796 = scalar_lea.vmem %s9, %s795
        %p797 = scmp.lt.s32.totalorder %s42, 1
        %s798 = scalar_select %p797, %s42, 1
        %s799 = smul.addr %s798, 4
        %s800 = scalar_lea.vmem %s10, %s799
        %p801 = scmp.lt.s32.totalorder %s42, 1
        %s802 = scalar_select %p801, %s42, 1
        %s803 = scalar_lea.vmem %s12, %s802
        %s804 = smul.u32 2, %s41
        %p806 = scmp.eq.s32.totalorder %s42, 0
        // Predicated region
        $region101: #{_lambda_.1} parent=83 // pred_check
          %p807 = pneg %p806
        $region102: #{_lambda_.1} parent=83 // pred_check_branch
          %809 = sbr.rel (%p807) target = $region104
        $region103: #{_lambda_.1} parent=83 // pred_region
          %v810 = vld [vmem:[%s771] sm:$0xff]
          %v811 = vld [vmem:[%s771 + $0x8] sm:$0xff]
          %v812 = vld [vmem:[%s771 + $0x10] sm:$0xff]
          %v813 = vld [vmem:[%s771 + $0x18] sm:$0xff]
          %814 = vst [vmem:[#allocation2] sm:$0xff] %v810
          %815 = vst [vmem:[#allocation2 + $0x8] sm:$0xff] %v811
          %816 = vst [vmem:[#allocation2 + $0x10] sm:$0xff] %v812
          %817 = vst [vmem:[#allocation2 + $0x18] sm:$0xff] %v813
          %v818 = vlaneseq
          %v819 = vshrl.u32 %v818, 7
          %v820 = vadd.s32 %v819, 8
          %v821 = vlaneseq
          %v822 = vand.u32 %v821, 127
          %vm823 = vcmp.le.s32.totalorder %v822, %v819
          %vm824 = vcmp.le.s32.totalorder %v822, %v820
          %v825 = vsel %vm823, 0.0, -1e+30
          %v826 = vsel %vm824, 0.0, -1e+30
          %vm827 = vcmask 130048
          %828 = vst.msk [vmem:[#allocation4] sm:$0xff] %vm827, %v825
          %829 = vst.msk [vmem:[#allocation4 + $0x8] sm:$0xff] %vm827, %v826
        $region104: #{_lambda_.1} parent=83 // pred_fallthru
          _
        %v830 = vld [vmem:[#allocation2] sm:$0xff]
        %v831 = vld [vmem:[#allocation2 + $0x8] sm:$0xff]
        %v832 = vld [vmem:[#allocation2 + $0x10] sm:$0xff]
        %v833 = vld [vmem:[#allocation2 + $0x18] sm:$0xff]
        %v834 = vld [vmem:[%s775] sm:$0x1]
        %v835 = vld [vmem:[%s778] sm:$0x1]
        %836 = vadd.xlane.f32.xlu0 %v830
        %v837 = vpop.xlane.xlu0 %836
        %838 = vadd.xlane.f32.xlu0 %v831
        %v839 = vpop.xlane.xlu0 %838
        %840 = vadd.xlane.f32.xlu0 %v832
        %v841 = vpop.xlane.xlu0 %840
        %842 = vadd.xlane.f32.xlu0 %v833
        %v843 = vpop.xlane.xlu0 %842
        %v844 = vrcp.pop 128.0
        %v845 = vmul.f32 %v837, %v844
        %v846 = vmul.f32 %v839, %v844
        %v847 = vmul.f32 %v841, %v844
        %v848 = vmul.f32 %v843, %v844
        %v849 = vsub.f32 %v830, %v845
        %v850 = vsub.f32 %v831, %v846
        %v851 = vsub.f32 %v832, %v847
        %v852 = vsub.f32 %v833, %v848
        %v853 = vmul.f32 %v849, %v849
        %v854 = vmul.f32 %v850, %v850
        %v855 = vmul.f32 %v851, %v851
        %v856 = vmul.f32 %v852, %v852
        %857 = vadd.xlane.f32.xlu0 %v853
        %v858 = vpop.xlane.xlu0 %857
        %859 = vadd.xlane.f32.xlu0 %v854
        %v860 = vpop.xlane.xlu0 %859
        %861 = vadd.xlane.f32.xlu0 %v855
        %v862 = vpop.xlane.xlu0 %861
        %863 = vadd.xlane.f32.xlu0 %v856
        %v864 = vpop.xlane.xlu0 %863
        %v865 = vmul.f32 %v858, %v844
        %v866 = vmul.f32 %v860, %v844
        %v867 = vmul.f32 %v862, %v844
        %v868 = vmul.f32 %v864, %v844
        %v869 = vadd.f32 %v865, 1e-05
        %v870 = vadd.f32 %v866, 1e-05
        %v871 = vadd.f32 %v867, 1e-05
        %v872 = vadd.f32 %v868, 1e-05
        %v873 = vrsqrt.pop %v869
        %v874 = vrsqrt.pop %v870
        %v875 = vrsqrt.pop %v871
        %v876 = vrsqrt.pop %v872
        %v877 = vmul.f32 %v849, %v873
        %v878 = vmul.f32 %v850, %v874
        %v879 = vmul.f32 %v851, %v875
        %v880 = vmul.f32 %v852, %v876
        %v882 = vlaneseq
        %v883 = vshrl.u32 %v882, 7
        %v884 = vsub.s32 0, %v883
        %v885 = vrot.slane %v834, %v884
        %v887 = vmul.f32 %v877, %v885
        %v888 = vmul.f32 %v878, %v885
        %v889 = vmul.f32 %v879, %v885
        %v890 = vmul.f32 %v880, %v885
        %v892 = vlaneseq
        %v893 = vshrl.u32 %v892, 7
        %v894 = vsub.s32 0, %v893
        %v895 = vrot.slane %v835, %v894
        %v897 = vadd.f32 %v887, %v895
        %v898 = vadd.f32 %v888, %v895
        %v899 = vadd.f32 %v889, %v895
        %v900 = vadd.f32 %v890, %v895
        %v901 = vld [vmem:[%s650] sm:$0xff]
        %v902 = vld [vmem:[%s650 + $0x8] sm:$0xf]
        %v903 = vld [vmem:[%s650 + $0xc] sm:$0xff]
        %v904 = vld [vmem:[%s650 + $0x14] sm:$0xf]
        %v905 = vld [vmem:[%s650 + $0x18] sm:$0xff]
        %v906 = vld [vmem:[%s650 + $0x20] sm:$0xf]
        %v907 = vld [vmem:[%s650 + $0x24] sm:$0xff]
        %v908 = vld [vmem:[%s650 + $0x2c] sm:$0xf]
        %v909 = vld [vmem:[%s650 + $0x30] sm:$0xff]
        %v910 = vld [vmem:[%s650 + $0x38] sm:$0xf]
        %v911 = vld [vmem:[%s650 + $0x3c] sm:$0xff]
        %v912 = vld [vmem:[%s650 + $0x44] sm:$0xf]
        %v913 = vld [vmem:[%s650 + $0x48] sm:$0xff]
        %v914 = vld [vmem:[%s650 + $0x50] sm:$0xf]
        %v915 = vld [vmem:[%s650 + $0x54] sm:$0xff]
        %v916 = vld [vmem:[%s650 + $0x5c] sm:$0xf]
        %v917 = vld [vmem:[%s650 + $0x60] sm:$0xff]
        %v918 = vld [vmem:[%s650 + $0x68] sm:$0xf]
        %v919 = vld [vmem:[%s650 + $0x6c] sm:$0xff]
        %v920 = vld [vmem:[%s650 + $0x74] sm:$0xf]
        %v921 = vld [vmem:[%s650 + $0x78] sm:$0xff]
        %v922 = vld [vmem:[%s650 + $0x80] sm:$0xf]
        %v923 = vld [vmem:[%s650 + $0x84] sm:$0xff]
        %v924 = vld [vmem:[%s650 + $0x8c] sm:$0xf]
        %v925 = vld [vmem:[%s650 + $0x90] sm:$0xff]
        %v926 = vld [vmem:[%s650 + $0x98] sm:$0xf]
        %v927 = vld [vmem:[%s650 + $0x9c] sm:$0xff]
        %v928 = vld [vmem:[%s650 + $0xa4] sm:$0xf]
        %v929 = vld [vmem:[%s650 + $0xa8] sm:$0xff]
        %v930 = vld [vmem:[%s650 + $0xb0] sm:$0xf]
        %v931 = vld [vmem:[%s650 + $0xb4] sm:$0xff]
        %v932 = vld [vmem:[%s650 + $0xbc] sm:$0xf]
        %v933 = vpack.c.bf16 %v898, %v897
        %v934 = vpack.c.bf16 %v900, %v899
        %v935 = vld [vmem:[%s782] sm:$0x7]
        %v937 = vlaneseq
        %v938 = vshrl.u32 %v937, 7
        %v939 = vsub.s32 0, %v938
        %v940 = vrot.slane %v935, %v939
        %v941 = vlaneseq
        %v942 = vshrl.u32 %v941, 7
        %v943 = vsub.s32 1, %v942
        %v944 = vrot.slane %v935, %v943
        %v945 = vlaneseq
        %v946 = vshrl.u32 %v945, 7
        %v947 = vsub.s32 2, %v946
        %v948 = vrot.slane %v935, %v947
        %v984 = vunpack.c.l.b16 %v901
        %v985 = vunpack.c.h.b16 %v901
        %v986 = vunpack.c.l.b16 %v902
        %v987 = vunpack.c.l.b16 %v903
        %v988 = vunpack.c.h.b16 %v903
        %v989 = vunpack.c.l.b16 %v904
        %v990 = vunpack.c.l.b16 %v905
        %v991 = vunpack.c.h.b16 %v905
        %v992 = vunpack.c.l.b16 %v906
        %v993 = vunpack.c.l.b16 %v907
        %v994 = vunpack.c.h.b16 %v907
        %v995 = vunpack.c.l.b16 %v908
        %v996 = vunpack.c.l.b16 %v909
        %v997 = vunpack.c.h.b16 %v909
        %v998 = vunpack.c.l.b16 %v910
        %v999 = vunpack.c.l.b16 %v911
        %v1000 = vunpack.c.h.b16 %v911
        %v1001 = vunpack.c.l.b16 %v912
        %v1002 = vunpack.c.l.b16 %v913
        %v1003 = vunpack.c.h.b16 %v913
        %v1004 = vunpack.c.l.b16 %v914
        %v1005 = vunpack.c.l.b16 %v915
        %v1006 = vunpack.c.h.b16 %v915
        %v1007 = vunpack.c.l.b16 %v916
        %v1008 = vunpack.c.l.b16 %v917
        %v1009 = vunpack.c.h.b16 %v917
        %v1010 = vunpack.c.l.b16 %v918
        %v1011 = vunpack.c.l.b16 %v919
        %v1012 = vunpack.c.h.b16 %v919
        %v1013 = vunpack.c.l.b16 %v920
        %v1014 = vunpack.c.l.b16 %v921
        %v1015 = vunpack.c.h.b16 %v921
        %v1016 = vunpack.c.l.b16 %v922
        %v1017 = vunpack.c.l.b16 %v923
        %v1018 = vunpack.c.h.b16 %v923
        %v1019 = vunpack.c.l.b16 %v924
        %v1020 = vunpack.c.l.b16 %v925
        %v1021 = vunpack.c.h.b16 %v925
        %v1022 = vunpack.c.l.b16 %v926
        %v1023 = vunpack.c.l.b16 %v927
        %v1024 = vunpack.c.h.b16 %v927
        %v1025 = vunpack.c.l.b16 %v928
        %v1026 = vunpack.c.l.b16 %v929
        %v1027 = vunpack.c.h.b16 %v929
        %v1028 = vunpack.c.l.b16 %v930
        %v1029 = vunpack.c.l.b16 %v931
        %v1030 = vunpack.c.h.b16 %v931
        %v1031 = vunpack.c.l.b16 %v932
        %v1032 = vpack.c.b16 %v987, %v984
        %v1033 = vpack.c.b16 %v988, %v985
        %v1034 = vpack.c.b16 %v989, %v986
        %v1035 = vpack.c.b16 %v993, %v990
        %v1036 = vpack.c.b16 %v994, %v991
        %v1037 = vpack.c.b16 %v995, %v992
        %v1038 = vpack.c.b16 %v999, %v996
        %v1039 = vpack.c.b16 %v1000, %v997
        %v1040 = vpack.c.b16 %v1001, %v998
        %v1041 = vpack.c.b16 %v1005, %v1002
        %v1042 = vpack.c.b16 %v1006, %v1003
        %v1043 = vpack.c.b16 %v1007, %v1004
        %v1044 = vpack.c.b16 %v1011, %v1008
        %v1045 = vpack.c.b16 %v1012, %v1009
        %v1046 = vpack.c.b16 %v1013, %v1010
        %v1047 = vpack.c.b16 %v1017, %v1014
        %v1048 = vpack.c.b16 %v1018, %v1015
        %v1049 = vpack.c.b16 %v1019, %v1016
        %v1050 = vpack.c.b16 %v1023, %v1020
        %v1051 = vpack.c.b16 %v1024, %v1021
        %v1052 = vpack.c.b16 %v1025, %v1022
        %v1053 = vpack.c.b16 %v1029, %v1026
        %v1054 = vpack.c.b16 %v1030, %v1027
        %v1055 = vpack.c.b16 %v1031, %v1028
        %1080 = vmatprep.subr.bf16.mxu0 %v1054
        %1081 = vmatpush1.bf16.msra.mxu0 %v1053
        %1082 = vmatprep.subr.bf16.mxu0 %v1051
        %1083 = vmatpush1.bf16.msra.mxu0 %v1050
        %1084 = vmatprep.subr.bf16.mxu0 %v1048
        %1085 = vmatpush1.bf16.msra.mxu0 %v1047
        %1086 = vmatprep.subr.bf16.mxu0 %v1045
        %1087 = vmatpush1.bf16.msra.mxu0 %v1044
        %1088 = vmatprep.subr.bf16.mxu0 %v1042
        %1089 = vmatpush1.bf16.msra.mxu0 %v1041
        %1090 = vmatprep.subr.bf16.mxu0 %v1039
        %1091 = vmatpush1.bf16.msra.mxu0 %v1038
        %1092 = vmatprep.subr.bf16.mxu0 %v1036
        %1093 = vmatpush1.bf16.msra.mxu0 %v1035
        %1094 = vmatprep.subr.bf16.mxu0 %v1033
        %1095 = vmatpush1.bf16.msra.mxu0 %v1032
        %1096 = vmatprep.subr.bf16.mxu0 0
        %1097 = vmatpush2.bf16.msra.mxu0 0
        %1098 = vmatprep.subr.bf16.mxu0 0
        %1099 = vmatpush2.bf16.msra.mxu0 0
        %1100 = vmatprep.subr.bf16.mxu0 0
        %1101 = vmatpush2.bf16.msra.mxu0 0
        %1102 = vmatprep.subr.bf16.mxu0 0
        %1103 = vmatpush2.bf16.msra.mxu0 0
        %1104 = vmatprep.subr.bf16.mxu0 0
        %1105 = vmatpush2.bf16.msra.mxu0 0
        %1106 = vmatprep.subr.bf16.mxu0 0
        %1107 = vmatpush2.bf16.msra.mxu0 0
        %1108 = vmatprep.subr.bf16.mxu0 0
        %1109 = vmatpush2.bf16.msra.mxu0 0
        %1110 = vmatprep.subr.bf16.mxu0 0
        %1111 = vmatpush2.bf16.msra.mxu0 0
        %1112 = vmatprep.mubr.bf16.mxu0 0
        %1113 = vmatmul.mubr.bf16.gmra.mxu0 %v933
        %v1114 = vpop.f32.mrf.mxu0
        %v1115 = vadd.f32 %v940, %v1114
        %v1116 = vpop.f32.mrf.mxu0
        %v1117 = vadd.f32 %v944, %v1116
        %v1118 = vpop.f32.mrf.mxu0
        %v1119 = vadd.f32 %v940, %v1118
        %v1120 = vpop.f32.mrf.mxu0
        %v1121 = vadd.f32 %v944, %v1120
        %1122 = vmatprep.mubr.bf16.mxu0 0
        %1123 = vmatmul.mubr.bf16.gmra.mxu0 %v934
        %v1124 = vpop.f32.mrf.mxu0
        %v1125 = vadd.f32 %v940, %v1124
        %v1126 = vpop.f32.mrf.mxu0
        %v1127 = vadd.f32 %v944, %v1126
        %v1128 = vpop.f32.mrf.mxu0
        %v1129 = vadd.f32 %v940, %v1128
        %v1130 = vpop.f32.mrf.mxu0
        %v1131 = vadd.f32 %v944, %v1130
        %1132 = vdwg.mxu0
        %1133 = vmatprep.subr.bf16.mxu0 0
        %1134 = vmatpush1.bf16.msra.mxu0 %v1055
        %1135 = vmatprep.subr.bf16.mxu0 0
        %1136 = vmatpush1.bf16.msra.mxu0 %v1052
        %1137 = vmatprep.subr.bf16.mxu0 0
        %1138 = vmatpush1.bf16.msra.mxu0 %v1049
        %1139 = vmatprep.subr.bf16.mxu0 0
        %1140 = vmatpush1.bf16.msra.mxu0 %v1046
        %1141 = vmatprep.subr.bf16.mxu0 0
        %1142 = vmatpush1.bf16.msra.mxu0 %v1043
        %1143 = vmatprep.subr.bf16.mxu0 0
        %1144 = vmatpush1.bf16.msra.mxu0 %v1040
        %1145 = vmatprep.subr.bf16.mxu0 0
        %1146 = vmatpush1.bf16.msra.mxu0 %v1037
        %1147 = vmatprep.subr.bf16.mxu0 0
        %1148 = vmatpush1.bf16.msra.mxu0 %v1034
        %1149 = vmatprep.subr.bf16.mxu0 0
        %1150 = vmatpush2.bf16.msra.mxu0 0
        %1151 = vmatprep.subr.bf16.mxu0 0
        %1152 = vmatpush2.bf16.msra.mxu0 0
        %1153 = vmatprep.subr.bf16.mxu0 0
        %1154 = vmatpush2.bf16.msra.mxu0 0
        %1155 = vmatprep.subr.bf16.mxu0 0
        %1156 = vmatpush2.bf16.msra.mxu0 0
        %1157 = vmatprep.subr.bf16.mxu0 0
        %1158 = vmatpush2.bf16.msra.mxu0 0
        %1159 = vmatprep.subr.bf16.mxu0 0
        %1160 = vmatpush2.bf16.msra.mxu0 0
        %1161 = vmatprep.subr.bf16.mxu0 0
        %1162 = vmatpush2.bf16.msra.mxu0 0
        %1163 = vmatprep.subr.bf16.mxu0 0
        %1164 = vmatpush2.bf16.msra.mxu0 0
        %1165 = vmatprep.mubr.bf16.mxu0 0
        %1166 = vmatmul.mubr.bf16.gmra.mxu0 %v933
        %v1167 = vpop.f32.mrf.mxu0
        %v1168 = vadd.f32 %v948, %v1167
        %v1169 = vpop.f32.mrf.mxu0
        %v1170 = vpop.f32.mrf.mxu0
        %v1171 = vadd.f32 %v948, %v1170
        %v1172 = vpop.f32.mrf.mxu0
        %1173 = vmatprep.mubr.bf16.mxu0 0
        %1174 = vmatmul.mubr.bf16.gmra.mxu0 %v934
        %v1175 = vpop.f32.mrf.mxu0
        %v1176 = vadd.f32 %v948, %v1175
        %v1177 = vpop.f32.mrf.mxu0
        %v1178 = vpop.f32.mrf.mxu0
        %v1179 = vadd.f32 %v948, %v1178
        %v1180 = vpop.f32.mrf.mxu0
        %1181 = vdwg.mxu0
        %v1182 = vpack.c.bf16 %v1119, %v1115
        %v1183 = vpack.c.bf16 %v1121, %v1117
        %v1184 = vpack.c.bf16 %v1171, %v1168
        %v1185 = vpack.c.bf16 %v1129, %v1125
        %v1186 = vpack.c.bf16 %v1131, %v1127
        %v1187 = vpack.c.bf16 %v1179, %v1176
        %v1194 = vunpack.c.l.b16 %v1182
        %v1195 = vunpack.c.l.b16 %v1183
        %v1196 = vunpack.c.l.b16 %v1184
        %v1197 = vunpack.c.h.b16 %v1182
        %v1198 = vunpack.c.h.b16 %v1183
        %v1199 = vunpack.c.h.b16 %v1184
        %v1200 = vunpack.c.l.b16 %v1185
        %v1201 = vunpack.c.l.b16 %v1186
        %v1202 = vunpack.c.l.b16 %v1187
        %v1203 = vunpack.c.h.b16 %v1185
        %v1204 = vunpack.c.h.b16 %v1186
        %v1205 = vunpack.c.h.b16 %v1187
        %v1206 = vpack.c.b16 %v1195, %v1194
        %v1207 = vpack.c.b16 %v1196, %v1196
        %v1208 = vpack.c.b16 %v1198, %v1197
        %v1209 = vpack.c.b16 %v1199, %v1199
        %v1210 = vpack.c.b16 %v1201, %v1200
        %v1211 = vpack.c.b16 %v1202, %v1202
        %v1212 = vpack.c.b16 %v1204, %v1203
        %v1213 = vpack.c.b16 %v1205, %v1205
        %1222 = vst [vmem:[#allocation3] sm:$0xff] %v1206
        %1223 = vst [vmem:[#allocation3 + $0x8] sm:$0xf] %v1207
        %1224 = vst [vmem:[#allocation3 + $0xc] sm:$0xff] %v1208
        %1225 = vst [vmem:[#allocation3 + $0x14] sm:$0xf] %v1209
        %1226 = vst [vmem:[#allocation3 + $0x18] sm:$0xff] %v1210
        %1227 = vst [vmem:[#allocation3 + $0x20] sm:$0xf] %v1211
        %1228 = vst [vmem:[#allocation3 + $0x24] sm:$0xff] %v1212
        %1229 = vst [vmem:[#allocation3 + $0x2c] sm:$0xf] %v1213
        %v1230 = vld [vmem:[#allocation4] sm:$0xff]
        %v1231 = vld [vmem:[#allocation4 + $0x8] sm:$0xff]
        %v1232 = vld [vmem:[%s785] sm:$0x1]
        %v1233 = vld [vmem:[#allocation3] sm:$0xf]
        %v1234 = vld [vmem:[#allocation3 + $0xc] sm:$0xf]
        %v1235 = vld [vmem:[#allocation3 + $0x4] sm:$0xf]
        %v1236 = vld [vmem:[#allocation3 + $0x10] sm:$0xf]
        %v1237 = vld [vmem:[#allocation3 + $0x8] sm:$0xf]
        %v1238 = vld [vmem:[#allocation3 + $0x14] sm:$0xf]
        %v1241 = vunpack.c.l.b16 %v1233
        %v1242 = vunpack.c.l.b16 %v1234
        %v1243 = vpack.c.b16 %v1242, %v1241
        %v1246 = vunpack.c.l.b16 %v1235
        %v1247 = vunpack.c.l.b16 %v1236
        %v1248 = vpack.c.b16 %v1247, %v1246
        %vm1249 = vcmask 261120
        %v1251 = vsel %vm1249, %v1243, 0
        %v1254 = vsel %vm1249, %v1248, 0
        %1256 = vmatprep.subr.bf16.mxu0 0
        %1257 = vmatpush1.bf16.xpose.msra.mxu0 0
        %1258 = vmatprep.subr.bf16.mxu0 0
        %1259 = vmatpush1.bf16.xpose.msra.mxu0 0
        %1260 = vmatprep.subr.bf16.mxu0 0
        %1261 = vmatpush1.bf16.xpose.msra.mxu0 0
        %1262 = vmatprep.subr.bf16.mxu0 0
        %1263 = vmatpush1.bf16.xpose.msra.mxu0 0
        %1264 = vmatprep.subr.bf16.mxu0 0
        %1265 = vmatpush1.bf16.xpose.msra.mxu0 0
        %1266 = vmatprep.subr.bf16.mxu0 0
        %1267 = vmatpush1.bf16.xpose.msra.mxu0 0
        %1268 = vmatprep.subr.bf16.mxu0 0
        %1269 = vmatpush1.bf16.xpose.msra.mxu0 0
        %1270 = vmatprep.subr.bf16.mxu0 0
        %1271 = vmatpush1.bf16.xpose.msra.mxu0 %v1254
        %1272 = vmatprep.subr.bf16.mxu0 0
        %1273 = vmatpush2.bf16.xpose.msra.mxu0 0
        %1274 = vmatprep.subr.bf16.mxu0 0
        %1275 = vmatpush2.bf16.xpose.msra.mxu0 0
        %1276 = vmatprep.subr.bf16.mxu0 0
        %1277 = vmatpush2.bf16.xpose.msra.mxu0 0
        %1278 = vmatprep.subr.bf16.mxu0 0
        %1279 = vmatpush2.bf16.xpose.msra.mxu0 0
        %1280 = vmatprep.subr.bf16.mxu0 0
        %1281 = vmatpush2.bf16.xpose.msra.mxu0 0
        %1282 = vmatprep.subr.bf16.mxu0 0
        %1283 = vmatpush2.bf16.xpose.msra.mxu0 0
        %1284 = vmatprep.subr.bf16.mxu0 0
        %1285 = vmatpush2.bf16.xpose.msra.mxu0 0
        %1286 = vmatprep.subr.bf16.mxu0 0
        %1287 = vmatpush2.bf16.xpose.msra.mxu0 0
        %1288 = vmatprep.mubr.bf16.mxu0 0
        %1289 = vmatmul.mubr.bf16.gmra.mxu0 %v1251
        %v1290 = vpop.f32.mrf.mxu0
        %v1291 = vadd.f32 %v1230, %v1290
        %v1292 = vpop.f32.mrf.mxu0
        %v1293 = vpop.f32.mrf.mxu0
        %v1294 = vadd.f32 %v1231, %v1293
        %v1295 = vpop.f32.mrf.mxu0
        %1296 = vdwg.mxu0
        %vm1297 = vcmask 130048
        %v1298 = vsel %vm1297, %v1291, -inf
        %1299 = vmax.xlane.f32.xlu0 %v1298
        %v1300 = vpop.xlane.xlu0 %1299
        %v1301 = vsel %vm1297, %v1294, -inf
        %1302 = vmax.xlane.f32.xlu0 %v1301
        %v1303 = vpop.xlane.xlu0 %1302
        %v1304 = vsub.f32 %v1291, %v1300
        %v1305 = vsub.f32 %v1294, %v1303
        %v1306 = vmul.f32 %v1304, 1.442695
        %v1307 = vpow.pop %v1306
        %v1308 = vmul.f32 %v1305, 1.442695
        %v1309 = vpow.pop %v1308
        %v1310 = vsel %vm1297, %v1307, 0.0
        %1311 = vadd.xlane.f32.xlu0 %v1310
        %v1312 = vpop.xlane.xlu0 %1311
        %v1313 = vsel %vm1297, %v1309, 0.0
        %1314 = vadd.xlane.f32.xlu0 %v1313
        %v1315 = vpop.xlane.xlu0 %1314
        %v1316 = vrcp.pop %v1312
        %v1317 = vrcp.pop %v1315
        %v1318 = vmul.f32 %v1307, %v1316
        %v1319 = vmul.f32 %v1309, %v1317
        %v1320 = vpack.c.bf16 %v1319, %v1318
        %v1323 = vunpack.c.l.b16 %v1237
        %v1324 = vunpack.c.l.b16 %v1238
        %v1325 = vpack.c.b16 %v1324, %v1323
        %v1328 = vsel %vm1297, %v1320, 0
        %1330 = vmatprep.subr.bf16.mxu0 0
        %1331 = vmatpush1.bf16.msra.mxu0 0
        %1332 = vmatprep.subr.bf16.mxu0 0
        %1333 = vmatpush1.bf16.msra.mxu0 0
        %1334 = vmatprep.subr.bf16.mxu0 0
        %1335 = vmatpush1.bf16.msra.mxu0 0
        %1336 = vmatprep.subr.bf16.mxu0 0
        %1337 = vmatpush1.bf16.msra.mxu0 0
        %1338 = vmatprep.subr.bf16.mxu0 0
        %1339 = vmatpush1.bf16.msra.mxu0 0
        %1340 = vmatprep.subr.bf16.mxu0 0
        %1341 = vmatpush1.bf16.msra.mxu0 0
        %1342 = vmatprep.subr.bf16.mxu0 0
        %1343 = vmatpush1.bf16.msra.mxu0 0
        %1344 = vmatprep.subr.bf16.mxu0 0
        %1345 = vmatpush1.bf16.msra.mxu0 %v1325
        %1346 = vmatprep.subr.bf16.mxu0 0
        %1347 = vmatpush2.bf16.msra.mxu0 0
        %1348 = vmatprep.subr.bf16.mxu0 0
        %1349 = vmatpush2.bf16.msra.mxu0 0
        %1350 = vmatprep.subr.bf16.mxu0 0
        %1351 = vmatpush2.bf16.msra.mxu0 0
        %1352 = vmatprep.subr.bf16.mxu0 0
        %1353 = vmatpush2.bf16.msra.mxu0 0
        %1354 = vmatprep.subr.bf16.mxu0 0
        %1355 = vmatpush2.bf16.msra.mxu0 0
        %1356 = vmatprep.subr.bf16.mxu0 0
        %1357 = vmatpush2.bf16.msra.mxu0 0
        %1358 = vmatprep.subr.bf16.mxu0 0
        %1359 = vmatpush2.bf16.msra.mxu0 0
        %1360 = vmatprep.subr.bf16.mxu0 0
        %1361 = vmatpush2.bf16.msra.mxu0 0
        %1362 = vmatprep.mubr.bf16.mxu0 0
        %1363 = vmatmul.mubr.bf16.gmra.mxu0 %v1328
        %v1364 = vpop.f32.mrf.mxu0
        %v1365 = vadd.f32 0.0, %v1364
        %v1366 = vpop.f32.mrf.mxu0
        %v1367 = vpop.f32.mrf.mxu0
        %v1368 = vadd.f32 0.0, %v1367
        %v1369 = vpop.f32.mrf.mxu0
        %1370 = vdwg.mxu0
        %v1371 = vld [vmem:[%s659] sm:$0xf]
        %v1372 = vld [vmem:[%s659 + $0x4] sm:$0xf]
        %v1373 = vld [vmem:[%s659 + $0x8] sm:$0xf]
        %v1374 = vld [vmem:[%s659 + $0xc] sm:$0xf]
        %v1375 = vpack.c.bf16 %v1368, %v1365
        %1376 = vrot.lane.b32.xlu0 %v1243, 96
        %v1377 = vpop.permute.xlu0 %1376
        %1378 = vrot.lane.b32.xlu0 %v1248, 96
        %v1379 = vpop.permute.xlu0 %1378
        %v1381 = vsel %vm1249, %v1377, 0
        %v1384 = vsel %vm1249, %v1379, 0
        %1386 = vmatprep.subr.bf16.mxu0 0
        %1387 = vmatpush1.bf16.xpose.msra.mxu0 0
        %1388 = vmatprep.subr.bf16.mxu0 0
        %1389 = vmatpush1.bf16.xpose.msra.mxu0 0
        %1390 = vmatprep.subr.bf16.mxu0 0
        %1391 = vmatpush1.bf16.xpose.msra.mxu0 0
        %1392 = vmatprep.subr.bf16.mxu0 0
        %1393 = vmatpush1.bf16.xpose.msra.mxu0 0
        %1394 = vmatprep.subr.bf16.mxu0 0
        %1395 = vmatpush1.bf16.xpose.msra.mxu0 0
        %1396 = vmatprep.subr.bf16.mxu0 0
        %1397 = vmatpush1.bf16.xpose.msra.mxu0 0
        %1398 = vmatprep.subr.bf16.mxu0 0
        %1399 = vmatpush1.bf16.xpose.msra.mxu0 0
        %1400 = vmatprep.subr.bf16.mxu0 0
        %1401 = vmatpush1.bf16.xpose.msra.mxu0 %v1384
        %1402 = vmatprep.subr.bf16.mxu0 0
        %1403 = vmatpush2.bf16.xpose.msra.mxu0 0
        %1404 = vmatprep.subr.bf16.mxu0 0
        %1405 = vmatpush2.bf16.xpose.msra.mxu0 0
        %1406 = vmatprep.subr.bf16.mxu0 0
        %1407 = vmatpush2.bf16.xpose.msra.mxu0 0
        %1408 = vmatprep.subr.bf16.mxu0 0
        %1409 = vmatpush2.bf16.xpose.msra.mxu0 0
        %1410 = vmatprep.subr.bf16.mxu0 0
        %1411 = vmatpush2.bf16.xpose.msra.mxu0 0
        %1412 = vmatprep.subr.bf16.mxu0 0
        %1413 = vmatpush2.bf16.xpose.msra.mxu0 0
        %1414 = vmatprep.subr.bf16.mxu0 0
        %1415 = vmatpush2.bf16.xpose.msra.mxu0 0
        %1416 = vmatprep.subr.bf16.mxu0 0
        %1417 = vmatpush2.bf16.xpose.msra.mxu0 0
        %1418 = vmatprep.mubr.bf16.mxu0 0
        %1419 = vmatmul.mubr.bf16.gmra.mxu0 %v1381
        %v1420 = vpop.f32.mrf.mxu0
        %v1421 = vadd.f32 %v1230, %v1420
        %v1422 = vpop.f32.mrf.mxu0
        %v1423 = vpop.f32.mrf.mxu0
        %v1424 = vadd.f32 %v1231, %v1423
        %v1425 = vpop.f32.mrf.mxu0
        %1426 = vdwg.mxu0
        %v1427 = vsel %vm1297, %v1421, -inf
        %1428 = vmax.xlane.f32.xlu0 %v1427
        %v1429 = vpop.xlane.xlu0 %1428
        %v1430 = vsel %vm1297, %v1424, -inf
        %1431 = vmax.xlane.f32.xlu0 %v1430
        %v1432 = vpop.xlane.xlu0 %1431
        %v1433 = vsub.f32 %v1421, %v1429
        %v1434 = vsub.f32 %v1424, %v1432
        %v1435 = vmul.f32 %v1433, 1.442695
        %v1436 = vpow.pop %v1435
        %v1437 = vmul.f32 %v1434, 1.442695
        %v1438 = vpow.pop %v1437
        %v1439 = vsel %vm1297, %v1436, 0.0
        %1440 = vadd.xlane.f32.xlu0 %v1439
        %v1441 = vpop.xlane.xlu0 %1440
        %v1442 = vsel %vm1297, %v1438, 0.0
        %1443 = vadd.xlane.f32.xlu0 %v1442
        %v1444 = vpop.xlane.xlu0 %1443
        %v1445 = vrcp.pop %v1441
        %v1446 = vrcp.pop %v1444
        %v1447 = vmul.f32 %v1436, %v1445
        %v1448 = vmul.f32 %v1438, %v1446
        %v1449 = vpack.c.bf16 %v1448, %v1447
        %1450 = vrot.lane.b32.xlu0 %v1325, 96
        %v1451 = vpop.permute.xlu0 %1450
        %v1454 = vsel %vm1297, %v1449, 0
        %1456 = vmatprep.subr.bf16.mxu0 0
        %1457 = vmatpush1.bf16.msra.mxu0 0
        %1458 = vmatprep.subr.bf16.mxu0 0
        %1459 = vmatpush1.bf16.msra.mxu0 0
        %1460 = vmatprep.subr.bf16.mxu0 0
        %1461 = vmatpush1.bf16.msra.mxu0 0
        %1462 = vmatprep.subr.bf16.mxu0 0
        %1463 = vmatpush1.bf16.msra.mxu0 0
        %1464 = vmatprep.subr.bf16.mxu0 0
        %1465 = vmatpush1.bf16.msra.mxu0 0
        %1466 = vmatprep.subr.bf16.mxu0 0
        %1467 = vmatpush1.bf16.msra.mxu0 0
        %1468 = vmatprep.subr.bf16.mxu0 0
        %1469 = vmatpush1.bf16.msra.mxu0 0
        %1470 = vmatprep.subr.bf16.mxu0 0
        %1471 = vmatpush1.bf16.msra.mxu0 %v1451
        %1472 = vmatprep.subr.bf16.mxu0 0
        %1473 = vmatpush2.bf16.msra.mxu0 0
        %1474 = vmatprep.subr.bf16.mxu0 0
        %1475 = vmatpush2.bf16.msra.mxu0 0
        %1476 = vmatprep.subr.bf16.mxu0 0
        %1477 = vmatpush2.bf16.msra.mxu0 0
        %1478 = vmatprep.subr.bf16.mxu0 0
        %1479 = vmatpush2.bf16.msra.mxu0 0
        %1480 = vmatprep.subr.bf16.mxu0 0
        %1481 = vmatpush2.bf16.msra.mxu0 0
        %1482 = vmatprep.subr.bf16.mxu0 0
        %1483 = vmatpush2.bf16.msra.mxu0 0
        %1484 = vmatprep.subr.bf16.mxu0 0
        %1485 = vmatpush2.bf16.msra.mxu0 0
        %1486 = vmatprep.subr.bf16.mxu0 0
        %1487 = vmatpush2.bf16.msra.mxu0 0
        %1488 = vmatprep.mubr.bf16.mxu0 0
        %1489 = vmatmul.mubr.bf16.gmra.mxu0 %v1454
        %v1490 = vpop.f32.mrf.mxu0
        %v1491 = vadd.f32 0.0, %v1490
        %v1492 = vpop.f32.mrf.mxu0
        %v1493 = vpop.f32.mrf.mxu0
        %v1494 = vadd.f32 0.0, %v1493
        %v1495 = vpop.f32.mrf.mxu0
        %1496 = vdwg.mxu0
        %v1497 = vld [vmem:[%s659 + $0x10] sm:$0xf]
        %v1498 = vld [vmem:[%s659 + $0x14] sm:$0xf]
        %v1499 = vld [vmem:[%s659 + $0x18] sm:$0xf]
        %v1500 = vld [vmem:[%s659 + $0x1c] sm:$0xf]
        %v1501 = vpack.c.bf16 %v1494, %v1491
        %v1506 = vunpack.c.l.b16 %v1497
        %v1507 = vunpack.c.l.b16 %v1498
        %v1508 = vunpack.c.l.b16 %v1499
        %v1509 = vunpack.c.l.b16 %v1500
        %v1510 = vpack.c.b16 %v1507, %v1506
        %v1511 = vpack.c.b16 %v1509, %v1508
        %v1515 = vsel %vm1249, %v1501, 0
        %1517 = vmatprep.subr.bf16.mxu0 0
        %1518 = vmatpush1.bf16.msra.mxu0 0
        %1519 = vmatprep.subr.bf16.mxu0 0
        %1520 = vmatpush1.bf16.msra.mxu0 0
        %1521 = vmatprep.subr.bf16.mxu0 0
        %1522 = vmatpush1.bf16.msra.mxu0 0
        %1523 = vmatprep.subr.bf16.mxu0 0
        %1524 = vmatpush1.bf16.msra.mxu0 0
        %1525 = vmatprep.subr.bf16.mxu0 0
        %1526 = vmatpush1.bf16.msra.mxu0 0
        %1527 = vmatprep.subr.bf16.mxu0 0
        %1528 = vmatpush1.bf16.msra.mxu0 0
        %1529 = vmatprep.subr.bf16.mxu0 0
        %1530 = vmatpush1.bf16.msra.mxu0 %v1511
        %1531 = vmatprep.subr.bf16.mxu0 0
        %1532 = vmatpush1.bf16.msra.mxu0 %v1510
        %1533 = vmatprep.subr.bf16.mxu0 0
        %1534 = vmatpush2.bf16.msra.mxu0 0
        %1535 = vmatprep.subr.bf16.mxu0 0
        %1536 = vmatpush2.bf16.msra.mxu0 0
        %1537 = vmatprep.subr.bf16.mxu0 0
        %1538 = vmatpush2.bf16.msra.mxu0 0
        %1539 = vmatprep.subr.bf16.mxu0 0
        %1540 = vmatpush2.bf16.msra.mxu0 0
        %1541 = vmatprep.subr.bf16.mxu0 0
        %1542 = vmatpush2.bf16.msra.mxu0 0
        %1543 = vmatprep.subr.bf16.mxu0 0
        %1544 = vmatpush2.bf16.msra.mxu0 0
        %1545 = vmatprep.subr.bf16.mxu0 0
        %1546 = vmatpush2.bf16.msra.mxu0 0
        %1547 = vmatprep.subr.bf16.mxu0 0
        %1548 = vmatpush2.bf16.msra.mxu0 0
        %1549 = vmatprep.mubr.bf16.mxu0 0
        %1550 = vmatmul.mubr.bf16.gmra.mxu0 %v1515
        %v1551 = vpop.f32.mrf.mxu0
        %v1552 = vadd.f32 0.0, %v1551
        %v1553 = vpop.f32.mrf.mxu0
        %v1554 = vpop.f32.mrf.mxu0
        %v1555 = vadd.f32 0.0, %v1554
        %v1556 = vpop.f32.mrf.mxu0
        %1557 = vdwg.mxu0
        %v1562 = vunpack.c.l.b16 %v1371
        %v1563 = vunpack.c.l.b16 %v1372
        %v1564 = vunpack.c.l.b16 %v1373
        %v1565 = vunpack.c.l.b16 %v1374
        %v1566 = vpack.c.b16 %v1563, %v1562
        %v1567 = vpack.c.b16 %v1565, %v1564
        %v1571 = vsel %vm1249, %v1375, 0
        %1573 = vmatprep.subr.bf16.mxu0 0
        %1574 = vmatpush1.bf16.msra.mxu0 0
        %1575 = vmatprep.subr.bf16.mxu0 0
        %1576 = vmatpush1.bf16.msra.mxu0 0
        %1577 = vmatprep.subr.bf16.mxu0 0
        %1578 = vmatpush1.bf16.msra.mxu0 0
        %1579 = vmatprep.subr.bf16.mxu0 0
        %1580 = vmatpush1.bf16.msra.mxu0 0
        %1581 = vmatprep.subr.bf16.mxu0 0
        %1582 = vmatpush1.bf16.msra.mxu0 0
        %1583 = vmatprep.subr.bf16.mxu0 0
        %1584 = vmatpush1.bf16.msra.mxu0 0
        %1585 = vmatprep.subr.bf16.mxu0 0
        %1586 = vmatpush1.bf16.msra.mxu0 %v1567
        %1587 = vmatprep.subr.bf16.mxu0 0
        %1588 = vmatpush1.bf16.msra.mxu0 %v1566
        %1589 = vmatprep.subr.bf16.mxu0 0
        %1590 = vmatpush2.bf16.msra.mxu0 0
        %1591 = vmatprep.subr.bf16.mxu0 0
        %1592 = vmatpush2.bf16.msra.mxu0 0
        %1593 = vmatprep.subr.bf16.mxu0 0
        %1594 = vmatpush2.bf16.msra.mxu0 0
        %1595 = vmatprep.subr.bf16.mxu0 0
        %1596 = vmatpush2.bf16.msra.mxu0 0
        %1597 = vmatprep.subr.bf16.mxu0 0
        %1598 = vmatpush2.bf16.msra.mxu0 0
        %1599 = vmatprep.subr.bf16.mxu0 0
        %1600 = vmatpush2.bf16.msra.mxu0 0
        %1601 = vmatprep.subr.bf16.mxu0 0
        %1602 = vmatpush2.bf16.msra.mxu0 0
        %1603 = vmatprep.subr.bf16.mxu0 0
        %1604 = vmatpush2.bf16.msra.mxu0 0
        %1605 = vmatprep.mubr.bf16.mxu0 0
        %1606 = vmatmul.mubr.bf16.gmra.mxu0 %v1571
        %v1607 = vpop.f32.mrf.mxu0
        %v1608 = vadd.f32 %v1552, %v1607
        %v1609 = vpop.f32.mrf.mxu0
        %v1610 = vpop.f32.mrf.mxu0
        %v1611 = vadd.f32 %v1555, %v1610
        %v1612 = vpop.f32.mrf.mxu0
        %1613 = vdwg.mxu0
        %1614 = vrot.lane.b32.xlu0 %v1243, 64
        %v1615 = vpop.permute.xlu0 %1614
        %1616 = vrot.lane.b32.xlu0 %v1248, 64
        %v1617 = vpop.permute.xlu0 %1616
        %v1619 = vsel %vm1249, %v1615, 0
        %v1622 = vsel %vm1249, %v1617, 0
        %1624 = vmatprep.subr.bf16.mxu0 0
        %1625 = vmatpush1.bf16.xpose.msra.mxu0 0
        %1626 = vmatprep.subr.bf16.mxu0 0
        %1627 = vmatpush1.bf16.xpose.msra.mxu0 0
        %1628 = vmatprep.subr.bf16.mxu0 0
        %1629 = vmatpush1.bf16.xpose.msra.mxu0 0
        %1630 = vmatprep.subr.bf16.mxu0 0
        %1631 = vmatpush1.bf16.xpose.msra.mxu0 0
        %1632 = vmatprep.subr.bf16.mxu0 0
        %1633 = vmatpush1.bf16.xpose.msra.mxu0 0
        %1634 = vmatprep.subr.bf16.mxu0 0
        %1635 = vmatpush1.bf16.xpose.msra.mxu0 0
        %1636 = vmatprep.subr.bf16.mxu0 0
        %1637 = vmatpush1.bf16.xpose.msra.mxu0 0
        %1638 = vmatprep.subr.bf16.mxu0 0
        %1639 = vmatpush1.bf16.xpose.msra.mxu0 %v1622
        %1640 = vmatprep.subr.bf16.mxu0 0
        %1641 = vmatpush2.bf16.xpose.msra.mxu0 0
        %1642 = vmatprep.subr.bf16.mxu0 0
        %1643 = vmatpush2.bf16.xpose.msra.mxu0 0
        %1644 = vmatprep.subr.bf16.mxu0 0
        %1645 = vmatpush2.bf16.xpose.msra.mxu0 0
        %1646 = vmatprep.subr.bf16.mxu0 0
        %1647 = vmatpush2.bf16.xpose.msra.mxu0 0
        %1648 = vmatprep.subr.bf16.mxu0 0
        %1649 = vmatpush2.bf16.xpose.msra.mxu0 0
        %1650 = vmatprep.subr.bf16.mxu0 0
        %1651 = vmatpush2.bf16.xpose.msra.mxu0 0
        %1652 = vmatprep.subr.bf16.mxu0 0
        %1653 = vmatpush2.bf16.xpose.msra.mxu0 0
        %1654 = vmatprep.subr.bf16.mxu0 0
        %1655 = vmatpush2.bf16.xpose.msra.mxu0 0
        %1656 = vmatprep.mubr.bf16.mxu0 0
        %1657 = vmatmul.mubr.bf16.gmra.mxu0 %v1619
        %v1658 = vpop.f32.mrf.mxu0
        %v1659 = vadd.f32 %v1230, %v1658
        %v1660 = vpop.f32.mrf.mxu0
        %v1661 = vpop.f32.mrf.mxu0
        %v1662 = vadd.f32 %v1231, %v1661
        %v1663 = vpop.f32.mrf.mxu0
        %1664 = vdwg.mxu0
        %v1665 = vsel %vm1297, %v1659, -inf
        %1666 = vmax.xlane.f32.xlu0 %v1665
        %v1667 = vpop.xlane.xlu0 %1666
        %v1668 = vsel %vm1297, %v1662, -inf
        %1669 = vmax.xlane.f32.xlu0 %v1668
        %v1670 = vpop.xlane.xlu0 %1669
        %v1671 = vsub.f32 %v1659, %v1667
        %v1672 = vsub.f32 %v1662, %v1670
        %v1673 = vmul.f32 %v1671, 1.442695
        %v1674 = vpow.pop %v1673
        %v1675 = vmul.f32 %v1672, 1.442695
        %v1676 = vpow.pop %v1675
        %v1677 = vsel %vm1297, %v1674, 0.0
        %1678 = vadd.xlane.f32.xlu0 %v1677
        %v1679 = vpop.xlane.xlu0 %1678
        %v1680 = vsel %vm1297, %v1676, 0.0
        %1681 = vadd.xlane.f32.xlu0 %v1680
        %v1682 = vpop.xlane.xlu0 %1681
        %v1683 = vrcp.pop %v1679
        %v1684 = vrcp.pop %v1682
        %v1685 = vmul.f32 %v1674, %v1683
        %v1686 = vmul.f32 %v1676, %v1684
        %v1687 = vpack.c.bf16 %v1686, %v1685
        %1688 = vrot.lane.b32.xlu0 %v1325, 64
        %v1689 = vpop.permute.xlu0 %1688
        %v1692 = vsel %vm1297, %v1687, 0
        %1694 = vmatprep.subr.bf16.mxu0 0
        %1695 = vmatpush1.bf16.msra.mxu0 0
        %1696 = vmatprep.subr.bf16.mxu0 0
        %1697 = vmatpush1.bf16.msra.mxu0 0
        %1698 = vmatprep.subr.bf16.mxu0 0
        %1699 = vmatpush1.bf16.msra.mxu0 0
        %1700 = vmatprep.subr.bf16.mxu0 0
        %1701 = vmatpush1.bf16.msra.mxu0 0
        %1702 = vmatprep.subr.bf16.mxu0 0
        %1703 = vmatpush1.bf16.msra.mxu0 0
        %1704 = vmatprep.subr.bf16.mxu0 0
        %1705 = vmatpush1.bf16.msra.mxu0 0
        %1706 = vmatprep.subr.bf16.mxu0 0
        %1707 = vmatpush1.bf16.msra.mxu0 0
        %1708 = vmatprep.subr.bf16.mxu0 0
        %1709 = vmatpush1.bf16.msra.mxu0 %v1689
        %1710 = vmatprep.subr.bf16.mxu0 0
        %1711 = vmatpush2.bf16.msra.mxu0 0
        %1712 = vmatprep.subr.bf16.mxu0 0
        %1713 = vmatpush2.bf16.msra.mxu0 0
        %1714 = vmatprep.subr.bf16.mxu0 0
        %1715 = vmatpush2.bf16.msra.mxu0 0
        %1716 = vmatprep.subr.bf16.mxu0 0
        %1717 = vmatpush2.bf16.msra.mxu0 0
        %1718 = vmatprep.subr.bf16.mxu0 0
        %1719 = vmatpush2.bf16.msra.mxu0 0
        %1720 = vmatprep.subr.bf16.mxu0 0
        %1721 = vmatpush2.bf16.msra.mxu0 0
        %1722 = vmatprep.subr.bf16.mxu0 0
        %1723 = vmatpush2.bf16.msra.mxu0 0
        %1724 = vmatprep.subr.bf16.mxu0 0
        %1725 = vmatpush2.bf16.msra.mxu0 0
        %1726 = vmatprep.mubr.bf16.mxu0 0
        %1727 = vmatmul.mubr.bf16.gmra.mxu0 %v1692
        %v1728 = vpop.f32.mrf.mxu0
        %v1729 = vadd.f32 0.0, %v1728
        %v1730 = vpop.f32.mrf.mxu0
        %v1731 = vpop.f32.mrf.mxu0
        %v1732 = vadd.f32 0.0, %v1731
        %v1733 = vpop.f32.mrf.mxu0
        %1734 = vdwg.mxu0
        %v1735 = vld [vmem:[%s659 + $0x20] sm:$0xf]
        %v1736 = vld [vmem:[%s659 + $0x24] sm:$0xf]
        %v1737 = vld [vmem:[%s659 + $0x28] sm:$0xf]
        %v1738 = vld [vmem:[%s659 + $0x2c] sm:$0xf]
        %v1739 = vpack.c.bf16 %v1732, %v1729
        %v1744 = vunpack.c.l.b16 %v1735
        %v1745 = vunpack.c.l.b16 %v1736
        %v1746 = vunpack.c.l.b16 %v1737
        %v1747 = vunpack.c.l.b16 %v1738
        %v1748 = vpack.c.b16 %v1745, %v1744
        %v1749 = vpack.c.b16 %v1747, %v1746
        %v1753 = vsel %vm1249, %v1739, 0
        %1755 = vmatprep.subr.bf16.mxu0 0
        %1756 = vmatpush1.bf16.msra.mxu0 0
        %1757 = vmatprep.subr.bf16.mxu0 0
        %1758 = vmatpush1.bf16.msra.mxu0 0
        %1759 = vmatprep.subr.bf16.mxu0 0
        %1760 = vmatpush1.bf16.msra.mxu0 0
        %1761 = vmatprep.subr.bf16.mxu0 0
        %1762 = vmatpush1.bf16.msra.mxu0 0
        %1763 = vmatprep.subr.bf16.mxu0 0
        %1764 = vmatpush1.bf16.msra.mxu0 0
        %1765 = vmatprep.subr.bf16.mxu0 0
        %1766 = vmatpush1.bf16.msra.mxu0 0
        %1767 = vmatprep.subr.bf16.mxu0 0
        %1768 = vmatpush1.bf16.msra.mxu0 %v1749
        %1769 = vmatprep.subr.bf16.mxu0 0
        %1770 = vmatpush1.bf16.msra.mxu0 %v1748
        %1771 = vmatprep.subr.bf16.mxu0 0
        %1772 = vmatpush2.bf16.msra.mxu0 0
        %1773 = vmatprep.subr.bf16.mxu0 0
        %1774 = vmatpush2.bf16.msra.mxu0 0
        %1775 = vmatprep.subr.bf16.mxu0 0
        %1776 = vmatpush2.bf16.msra.mxu0 0
        %1777 = vmatprep.subr.bf16.mxu0 0
        %1778 = vmatpush2.bf16.msra.mxu0 0
        %1779 = vmatprep.subr.bf16.mxu0 0
        %1780 = vmatpush2.bf16.msra.mxu0 0
        %1781 = vmatprep.subr.bf16.mxu0 0
        %1782 = vmatpush2.bf16.msra.mxu0 0
        %1783 = vmatprep.subr.bf16.mxu0 0
        %1784 = vmatpush2.bf16.msra.mxu0 0
        %1785 = vmatprep.subr.bf16.mxu0 0
        %1786 = vmatpush2.bf16.msra.mxu0 0
        %1787 = vmatprep.mubr.bf16.mxu0 0
        %1788 = vmatmul.mubr.bf16.gmra.mxu0 %v1753
        %v1789 = vpop.f32.mrf.mxu0
        %v1790 = vadd.f32 0.0, %v1789
        %v1791 = vpop.f32.mrf.mxu0
        %v1792 = vpop.f32.mrf.mxu0
        %v1793 = vadd.f32 0.0, %v1792
        %v1794 = vpop.f32.mrf.mxu0
        %1795 = vdwg.mxu0
        %v1796 = vadd.f32 %v1608, %v1790
        %v1797 = vadd.f32 %v1611, %v1793
        %1798 = vrot.lane.b32.xlu0 %v1243, 32
        %v1799 = vpop.permute.xlu0 %1798
        %1800 = vrot.lane.b32.xlu0 %v1248, 32
        %v1801 = vpop.permute.xlu0 %1800
        %v1803 = vsel %vm1249, %v1799, 0
        %v1806 = vsel %vm1249, %v1801, 0
        %1808 = vmatprep.subr.bf16.mxu0 0
        %1809 = vmatpush1.bf16.xpose.msra.mxu0 0
        %1810 = vmatprep.subr.bf16.mxu0 0
        %1811 = vmatpush1.bf16.xpose.msra.mxu0 0
        %1812 = vmatprep.subr.bf16.mxu0 0
        %1813 = vmatpush1.bf16.xpose.msra.mxu0 0
        %1814 = vmatprep.subr.bf16.mxu0 0
        %1815 = vmatpush1.bf16.xpose.msra.mxu0 0
        %1816 = vmatprep.subr.bf16.mxu0 0
        %1817 = vmatpush1.bf16.xpose.msra.mxu0 0
        %1818 = vmatprep.subr.bf16.mxu0 0
        %1819 = vmatpush1.bf16.xpose.msra.mxu0 0
        %1820 = vmatprep.subr.bf16.mxu0 0
        %1821 = vmatpush1.bf16.xpose.msra.mxu0 0
        %1822 = vmatprep.subr.bf16.mxu0 0
        %1823 = vmatpush1.bf16.xpose.msra.mxu0 %v1806
        %1824 = vmatprep.subr.bf16.mxu0 0
        %1825 = vmatpush2.bf16.xpose.msra.mxu0 0
        %1826 = vmatprep.subr.bf16.mxu0 0
        %1827 = vmatpush2.bf16.xpose.msra.mxu0 0
        %1828 = vmatprep.subr.bf16.mxu0 0
        %1829 = vmatpush2.bf16.xpose.msra.mxu0 0
        %1830 = vmatprep.subr.bf16.mxu0 0
        %1831 = vmatpush2.bf16.xpose.msra.mxu0 0
        %1832 = vmatprep.subr.bf16.mxu0 0
        %1833 = vmatpush2.bf16.xpose.msra.mxu0 0
        %1834 = vmatprep.subr.bf16.mxu0 0
        %1835 = vmatpush2.bf16.xpose.msra.mxu0 0
        %1836 = vmatprep.subr.bf16.mxu0 0
        %1837 = vmatpush2.bf16.xpose.msra.mxu0 0
        %1838 = vmatprep.subr.bf16.mxu0 0
        %1839 = vmatpush2.bf16.xpose.msra.mxu0 0
        %1840 = vmatprep.mubr.bf16.mxu0 0
        %1841 = vmatmul.mubr.bf16.gmra.mxu0 %v1803
        %v1842 = vpop.f32.mrf.mxu0
        %v1843 = vadd.f32 %v1230, %v1842
        %v1844 = vpop.f32.mrf.mxu0
        %v1845 = vpop.f32.mrf.mxu0
        %v1846 = vadd.f32 %v1231, %v1845
        %v1847 = vpop.f32.mrf.mxu0
        %1848 = vdwg.mxu0
        %v1849 = vsel %vm1297, %v1843, -inf
        %1850 = vmax.xlane.f32.xlu0 %v1849
        %v1851 = vpop.xlane.xlu0 %1850
        %v1852 = vsel %vm1297, %v1846, -inf
        %1853 = vmax.xlane.f32.xlu0 %v1852
        %v1854 = vpop.xlane.xlu0 %1853
        %v1855 = vsub.f32 %v1843, %v1851
        %v1856 = vsub.f32 %v1846, %v1854
        %v1857 = vmul.f32 %v1855, 1.442695
        %v1858 = vpow.pop %v1857
        %v1859 = vmul.f32 %v1856, 1.442695
        %v1860 = vpow.pop %v1859
        %v1861 = vsel %vm1297, %v1858, 0.0
        %1862 = vadd.xlane.f32.xlu0 %v1861
        %v1863 = vpop.xlane.xlu0 %1862
        %v1864 = vsel %vm1297, %v1860, 0.0
        %1865 = vadd.xlane.f32.xlu0 %v1864
        %v1866 = vpop.xlane.xlu0 %1865
        %v1867 = vrcp.pop %v1863
        %v1868 = vrcp.pop %v1866
        %v1869 = vmul.f32 %v1858, %v1867
        %v1870 = vmul.f32 %v1860, %v1868
        %v1871 = vpack.c.bf16 %v1870, %v1869
        %1872 = vrot.lane.b32.xlu0 %v1325, 32
        %v1873 = vpop.permute.xlu0 %1872
        %v1876 = vsel %vm1297, %v1871, 0
        %1878 = vmatprep.subr.bf16.mxu0 0
        %1879 = vmatpush1.bf16.msra.mxu0 0
        %1880 = vmatprep.subr.bf16.mxu0 0
        %1881 = vmatpush1.bf16.msra.mxu0 0
        %1882 = vmatprep.subr.bf16.mxu0 0
        %1883 = vmatpush1.bf16.msra.mxu0 0
        %1884 = vmatprep.subr.bf16.mxu0 0
        %1885 = vmatpush1.bf16.msra.mxu0 0
        %1886 = vmatprep.subr.bf16.mxu0 0
        %1887 = vmatpush1.bf16.msra.mxu0 0
        %1888 = vmatprep.subr.bf16.mxu0 0
        %1889 = vmatpush1.bf16.msra.mxu0 0
        %1890 = vmatprep.subr.bf16.mxu0 0
        %1891 = vmatpush1.bf16.msra.mxu0 0
        %1892 = vmatprep.subr.bf16.mxu0 0
        %1893 = vmatpush1.bf16.msra.mxu0 %v1873
        %1894 = vmatprep.subr.bf16.mxu0 0
        %1895 = vmatpush2.bf16.msra.mxu0 0
        %1896 = vmatprep.subr.bf16.mxu0 0
        %1897 = vmatpush2.bf16.msra.mxu0 0
        %1898 = vmatprep.subr.bf16.mxu0 0
        %1899 = vmatpush2.bf16.msra.mxu0 0
        %1900 = vmatprep.subr.bf16.mxu0 0
        %1901 = vmatpush2.bf16.msra.mxu0 0
        %1902 = vmatprep.subr.bf16.mxu0 0
        %1903 = vmatpush2.bf16.msra.mxu0 0
        %1904 = vmatprep.subr.bf16.mxu0 0
        %1905 = vmatpush2.bf16.msra.mxu0 0
        %1906 = vmatprep.subr.bf16.mxu0 0
        %1907 = vmatpush2.bf16.msra.mxu0 0
        %1908 = vmatprep.subr.bf16.mxu0 0
        %1909 = vmatpush2.bf16.msra.mxu0 0
        %1910 = vmatprep.mubr.bf16.mxu0 0
        %1911 = vmatmul.mubr.bf16.gmra.mxu0 %v1876
        %v1912 = vpop.f32.mrf.mxu0
        %v1913 = vadd.f32 0.0, %v1912
        %v1914 = vpop.f32.mrf.mxu0
        %v1915 = vpop.f32.mrf.mxu0
        %v1916 = vadd.f32 0.0, %v1915
        %v1917 = vpop.f32.mrf.mxu0
        %1918 = vdwg.mxu0
        %v1919 = vld [vmem:[%s659 + $0x30] sm:$0xf]
        %v1920 = vld [vmem:[%s659 + $0x34] sm:$0xf]
        %v1921 = vld [vmem:[%s659 + $0x38] sm:$0xf]
        %v1922 = vld [vmem:[%s659 + $0x3c] sm:$0xf]
        %v1923 = vpack.c.bf16 %v1916, %v1913
        %v1928 = vunpack.c.l.b16 %v1919
        %v1929 = vunpack.c.l.b16 %v1920
        %v1930 = vunpack.c.l.b16 %v1921
        %v1931 = vunpack.c.l.b16 %v1922
        %v1932 = vpack.c.b16 %v1929, %v1928
        %v1933 = vpack.c.b16 %v1931, %v1930
        %v1937 = vsel %vm1249, %v1923, 0
        %1939 = vmatprep.subr.bf16.mxu0 0
        %1940 = vmatpush1.bf16.msra.mxu0 0
        %1941 = vmatprep.subr.bf16.mxu0 0
        %1942 = vmatpush1.bf16.msra.mxu0 0
        %1943 = vmatprep.subr.bf16.mxu0 0
        %1944 = vmatpush1.bf16.msra.mxu0 0
        %1945 = vmatprep.subr.bf16.mxu0 0
        %1946 = vmatpush1.bf16.msra.mxu0 0
        %1947 = vmatprep.subr.bf16.mxu0 0
        %1948 = vmatpush1.bf16.msra.mxu0 0
        %1949 = vmatprep.subr.bf16.mxu0 0
        %1950 = vmatpush1.bf16.msra.mxu0 0
        %1951 = vmatprep.subr.bf16.mxu0 0
        %1952 = vmatpush1.bf16.msra.mxu0 %v1933
        %1953 = vmatprep.subr.bf16.mxu0 0
        %1954 = vmatpush1.bf16.msra.mxu0 %v1932
        %1955 = vmatprep.subr.bf16.mxu0 0
        %1956 = vmatpush2.bf16.msra.mxu0 0
        %1957 = vmatprep.subr.bf16.mxu0 0
        %1958 = vmatpush2.bf16.msra.mxu0 0
        %1959 = vmatprep.subr.bf16.mxu0 0
        %1960 = vmatpush2.bf16.msra.mxu0 0
        %1961 = vmatprep.subr.bf16.mxu0 0
        %1962 = vmatpush2.bf16.msra.mxu0 0
        %1963 = vmatprep.subr.bf16.mxu0 0
        %1964 = vmatpush2.bf16.msra.mxu0 0
        %1965 = vmatprep.subr.bf16.mxu0 0
        %1966 = vmatpush2.bf16.msra.mxu0 0
        %1967 = vmatprep.subr.bf16.mxu0 0
        %1968 = vmatpush2.bf16.msra.mxu0 0
        %1969 = vmatprep.subr.bf16.mxu0 0
        %1970 = vmatpush2.bf16.msra.mxu0 0
        %1971 = vmatprep.mubr.bf16.mxu0 0
        %1972 = vmatmul.mubr.bf16.gmra.mxu0 %v1937
        %v1973 = vpop.f32.mrf.mxu0
        %v1974 = vadd.f32 0.0, %v1973
        %v1975 = vpop.f32.mrf.mxu0
        %v1976 = vpop.f32.mrf.mxu0
        %v1977 = vadd.f32 0.0, %v1976
        %v1978 = vpop.f32.mrf.mxu0
        %1979 = vdwg.mxu0
        %v1980 = vadd.f32 %v1796, %v1974
        %v1981 = vadd.f32 %v1797, %v1977
        %v1982 = vadd.f32 %v830, %v1980
        %v1983 = vadd.f32 %v831, %v1981
        %v1985 = vlaneseq
        %v1986 = vshrl.u32 %v1985, 7
        %v1987 = vsub.s32 0, %v1986
        %v1988 = vrot.slane %v1232, %v1987
        %v1990 = vadd.f32 %v1982, %v1988
        %v1991 = vadd.f32 %v1983, %v1988
        %1992 = vst [vmem:[#allocation2] sm:$0xff] %v1990
        %1993 = vst [vmem:[#allocation2 + $0x8] sm:$0xff] %v1991
        %v1994 = vld [vmem:[#allocation3 + $0x18] sm:$0xf]
        %v1995 = vld [vmem:[#allocation3 + $0x24] sm:$0xf]
        %v1996 = vld [vmem:[#allocation3 + $0x1c] sm:$0xf]
        %v1997 = vld [vmem:[#allocation3 + $0x28] sm:$0xf]
        %v1998 = vld [vmem:[#allocation3 + $0x20] sm:$0xf]
        %v1999 = vld [vmem:[#allocation3 + $0x2c] sm:$0xf]
        %v2002 = vunpack.c.l.b16 %v1994
        %v2003 = vunpack.c.l.b16 %v1995
        %v2004 = vpack.c.b16 %v2003, %v2002
        %v2007 = vunpack.c.l.b16 %v1996
        %v2008 = vunpack.c.l.b16 %v1997
        %v2009 = vpack.c.b16 %v2008, %v2007
        %v2011 = vsel %vm1249, %v2004, 0
        %v2014 = vsel %vm1249, %v2009, 0
        %2016 = vmatprep.subr.bf16.mxu0 0
        %2017 = vmatpush1.bf16.xpose.msra.mxu0 0
        %2018 = vmatprep.subr.bf16.mxu0 0
        %2019 = vmatpush1.bf16.xpose.msra.mxu0 0
        %2020 = vmatprep.subr.bf16.mxu0 0
        %2021 = vmatpush1.bf16.xpose.msra.mxu0 0
        %2022 = vmatprep.subr.bf16.mxu0 0
        %2023 = vmatpush1.bf16.xpose.msra.mxu0 0
        %2024 = vmatprep.subr.bf16.mxu0 0
        %2025 = vmatpush1.bf16.xpose.msra.mxu0 0
        %2026 = vmatprep.subr.bf16.mxu0 0
        %2027 = vmatpush1.bf16.xpose.msra.mxu0 0
        %2028 = vmatprep.subr.bf16.mxu0 0
        %2029 = vmatpush1.bf16.xpose.msra.mxu0 0
        %2030 = vmatprep.subr.bf16.mxu0 0
        %2031 = vmatpush1.bf16.xpose.msra.mxu0 %v2014
        %2032 = vmatprep.subr.bf16.mxu0 0
        %2033 = vmatpush2.bf16.xpose.msra.mxu0 0
        %2034 = vmatprep.subr.bf16.mxu0 0
        %2035 = vmatpush2.bf16.xpose.msra.mxu0 0
        %2036 = vmatprep.subr.bf16.mxu0 0
        %2037 = vmatpush2.bf16.xpose.msra.mxu0 0
        %2038 = vmatprep.subr.bf16.mxu0 0
        %2039 = vmatpush2.bf16.xpose.msra.mxu0 0
        %2040 = vmatprep.subr.bf16.mxu0 0
        %2041 = vmatpush2.bf16.xpose.msra.mxu0 0
        %2042 = vmatprep.subr.bf16.mxu0 0
        %2043 = vmatpush2.bf16.xpose.msra.mxu0 0
        %2044 = vmatprep.subr.bf16.mxu0 0
        %2045 = vmatpush2.bf16.xpose.msra.mxu0 0
        %2046 = vmatprep.subr.bf16.mxu0 0
        %2047 = vmatpush2.bf16.xpose.msra.mxu0 0
        %2048 = vmatprep.mubr.bf16.mxu0 0
        %2049 = vmatmul.mubr.bf16.gmra.mxu0 %v2011
        %v2050 = vpop.f32.mrf.mxu0
        %v2051 = vadd.f32 %v1230, %v2050
        %v2052 = vpop.f32.mrf.mxu0
        %v2053 = vpop.f32.mrf.mxu0
        %v2054 = vadd.f32 %v1231, %v2053
        %v2055 = vpop.f32.mrf.mxu0
        %2056 = vdwg.mxu0
        %v2057 = vsel %vm1297, %v2051, -inf
        %2058 = vmax.xlane.f32.xlu0 %v2057
        %v2059 = vpop.xlane.xlu0 %2058
        %v2060 = vsel %vm1297, %v2054, -inf
        %2061 = vmax.xlane.f32.xlu0 %v2060
        %v2062 = vpop.xlane.xlu0 %2061
        %v2063 = vsub.f32 %v2051, %v2059
        %v2064 = vsub.f32 %v2054, %v2062
        %v2065 = vmul.f32 %v2063, 1.442695
        %v2066 = vpow.pop %v2065
        %v2067 = vmul.f32 %v2064, 1.442695
        %v2068 = vpow.pop %v2067
        %v2069 = vsel %vm1297, %v2066, 0.0
        %2070 = vadd.xlane.f32.xlu0 %v2069
        %v2071 = vpop.xlane.xlu0 %2070
        %v2072 = vsel %vm1297, %v2068, 0.0
        %2073 = vadd.xlane.f32.xlu0 %v2072
        %v2074 = vpop.xlane.xlu0 %2073
        %v2075 = vrcp.pop %v2071
        %v2076 = vrcp.pop %v2074
        %v2077 = vmul.f32 %v2066, %v2075
        %v2078 = vmul.f32 %v2068, %v2076
        %v2079 = vpack.c.bf16 %v2078, %v2077
        %v2082 = vunpack.c.l.b16 %v1998
        %v2083 = vunpack.c.l.b16 %v1999
        %v2084 = vpack.c.b16 %v2083, %v2082
        %v2087 = vsel %vm1297, %v2079, 0
        %2089 = vmatprep.subr.bf16.mxu0 0
        %2090 = vmatpush1.bf16.msra.mxu0 0
        %2091 = vmatprep.subr.bf16.mxu0 0
        %2092 = vmatpush1.bf16.msra.mxu0 0
        %2093 = vmatprep.subr.bf16.mxu0 0
        %2094 = vmatpush1.bf16.msra.mxu0 0
        %2095 = vmatprep.subr.bf16.mxu0 0
        %2096 = vmatpush1.bf16.msra.mxu0 0
        %2097 = vmatprep.subr.bf16.mxu0 0
        %2098 = vmatpush1.bf16.msra.mxu0 0
        %2099 = vmatprep.subr.bf16.mxu0 0
        %2100 = vmatpush1.bf16.msra.mxu0 0
        %2101 = vmatprep.subr.bf16.mxu0 0
        %2102 = vmatpush1.bf16.msra.mxu0 0
        %2103 = vmatprep.subr.bf16.mxu0 0
        %2104 = vmatpush1.bf16.msra.mxu0 %v2084
        %2105 = vmatprep.subr.bf16.mxu0 0
        %2106 = vmatpush2.bf16.msra.mxu0 0
        %2107 = vmatprep.subr.bf16.mxu0 0
        %2108 = vmatpush2.bf16.msra.mxu0 0
        %2109 = vmatprep.subr.bf16.mxu0 0
        %2110 = vmatpush2.bf16.msra.mxu0 0
        %2111 = vmatprep.subr.bf16.mxu0 0
        %2112 = vmatpush2.bf16.msra.mxu0 0
        %2113 = vmatprep.subr.bf16.mxu0 0
        %2114 = vmatpush2.bf16.msra.mxu0 0
        %2115 = vmatprep.subr.bf16.mxu0 0
        %2116 = vmatpush2.bf16.msra.mxu0 0
        %2117 = vmatprep.subr.bf16.mxu0 0
        %2118 = vmatpush2.bf16.msra.mxu0 0
        %2119 = vmatprep.subr.bf16.mxu0 0
        %2120 = vmatpush2.bf16.msra.mxu0 0
        %2121 = vmatprep.mubr.bf16.mxu0 0
        %2122 = vmatmul.mubr.bf16.gmra.mxu0 %v2087
        %v2123 = vpop.f32.mrf.mxu0
        %v2124 = vadd.f32 0.0, %v2123
        %v2125 = vpop.f32.mrf.mxu0
        %v2126 = vpop.f32.mrf.mxu0
        %v2127 = vadd.f32 0.0, %v2126
        %v2128 = vpop.f32.mrf.mxu0
        %2129 = vdwg.mxu0
        %v2130 = vld [vmem:[%s659] sm:$0xf]
        %v2131 = vld [vmem:[%s659 + $0x4] sm:$0xf]
        %v2132 = vld [vmem:[%s659 + $0x8] sm:$0xf]
        %v2133 = vld [vmem:[%s659 + $0xc] sm:$0xf]
        %v2134 = vpack.c.bf16 %v2127, %v2124
        %2135 = vrot.lane.b32.xlu0 %v2004, 96
        %v2136 = vpop.permute.xlu0 %2135
        %2137 = vrot.lane.b32.xlu0 %v2009, 96
        %v2138 = vpop.permute.xlu0 %2137
        %v2140 = vsel %vm1249, %v2136, 0
        %v2143 = vsel %vm1249, %v2138, 0
        %2145 = vmatprep.subr.bf16.mxu0 0
        %2146 = vmatpush1.bf16.xpose.msra.mxu0 0
        %2147 = vmatprep.subr.bf16.mxu0 0
        %2148 = vmatpush1.bf16.xpose.msra.mxu0 0
        %2149 = vmatprep.subr.bf16.mxu0 0
        %2150 = vmatpush1.bf16.xpose.msra.mxu0 0
        %2151 = vmatprep.subr.bf16.mxu0 0
        %2152 = vmatpush1.bf16.xpose.msra.mxu0 0
        %2153 = vmatprep.subr.bf16.mxu0 0
        %2154 = vmatpush1.bf16.xpose.msra.mxu0 0
        %2155 = vmatprep.subr.bf16.mxu0 0
        %2156 = vmatpush1.bf16.xpose.msra.mxu0 0
        %2157 = vmatprep.subr.bf16.mxu0 0
        %2158 = vmatpush1.bf16.xpose.msra.mxu0 0
        %2159 = vmatprep.subr.bf16.mxu0 0
        %2160 = vmatpush1.bf16.xpose.msra.mxu0 %v2143
        %2161 = vmatprep.subr.bf16.mxu0 0
        %2162 = vmatpush2.bf16.xpose.msra.mxu0 0
        %2163 = vmatprep.subr.bf16.mxu0 0
        %2164 = vmatpush2.bf16.xpose.msra.mxu0 0
        %2165 = vmatprep.subr.bf16.mxu0 0
        %2166 = vmatpush2.bf16.xpose.msra.mxu0 0
        %2167 = vmatprep.subr.bf16.mxu0 0
        %2168 = vmatpush2.bf16.xpose.msra.mxu0 0
        %2169 = vmatprep.subr.bf16.mxu0 0
        %2170 = vmatpush2.bf16.xpose.msra.mxu0 0
        %2171 = vmatprep.subr.bf16.mxu0 0
        %2172 = vmatpush2.bf16.xpose.msra.mxu0 0
        %2173 = vmatprep.subr.bf16.mxu0 0
        %2174 = vmatpush2.bf16.xpose.msra.mxu0 0
        %2175 = vmatprep.subr.bf16.mxu0 0
        %2176 = vmatpush2.bf16.xpose.msra.mxu0 0
        %2177 = vmatprep.mubr.bf16.mxu0 0
        %2178 = vmatmul.mubr.bf16.gmra.mxu0 %v2140
        %v2179 = vpop.f32.mrf.mxu0
        %v2180 = vadd.f32 %v1230, %v2179
        %v2181 = vpop.f32.mrf.mxu0
        %v2182 = vpop.f32.mrf.mxu0
        %v2183 = vadd.f32 %v1231, %v2182
        %v2184 = vpop.f32.mrf.mxu0
        %2185 = vdwg.mxu0
        %v2186 = vsel %vm1297, %v2180, -inf
        %2187 = vmax.xlane.f32.xlu0 %v2186
        %v2188 = vpop.xlane.xlu0 %2187
        %v2189 = vsel %vm1297, %v2183, -inf
        %2190 = vmax.xlane.f32.xlu0 %v2189
        %v2191 = vpop.xlane.xlu0 %2190
        %v2192 = vsub.f32 %v2180, %v2188
        %v2193 = vsub.f32 %v2183, %v2191
        %v2194 = vmul.f32 %v2192, 1.442695
        %v2195 = vpow.pop %v2194
        %v2196 = vmul.f32 %v2193, 1.442695
        %v2197 = vpow.pop %v2196
        %v2198 = vsel %vm1297, %v2195, 0.0
        %2199 = vadd.xlane.f32.xlu0 %v2198
        %v2200 = vpop.xlane.xlu0 %2199
        %v2201 = vsel %vm1297, %v2197, 0.0
        %2202 = vadd.xlane.f32.xlu0 %v2201
        %v2203 = vpop.xlane.xlu0 %2202
        %v2204 = vrcp.pop %v2200
        %v2205 = vrcp.pop %v2203
        %v2206 = vmul.f32 %v2195, %v2204
        %v2207 = vmul.f32 %v2197, %v2205
        %v2208 = vpack.c.bf16 %v2207, %v2206
        %2209 = vrot.lane.b32.xlu0 %v2084, 96
        %v2210 = vpop.permute.xlu0 %2209
        %v2213 = vsel %vm1297, %v2208, 0
        %2215 = vmatprep.subr.bf16.mxu0 0
        %2216 = vmatpush1.bf16.msra.mxu0 0
        %2217 = vmatprep.subr.bf16.mxu0 0
        %2218 = vmatpush1.bf16.msra.mxu0 0
        %2219 = vmatprep.subr.bf16.mxu0 0
        %2220 = vmatpush1.bf16.msra.mxu0 0
        %2221 = vmatprep.subr.bf16.mxu0 0
        %2222 = vmatpush1.bf16.msra.mxu0 0
        %2223 = vmatprep.subr.bf16.mxu0 0
        %2224 = vmatpush1.bf16.msra.mxu0 0
        %2225 = vmatprep.subr.bf16.mxu0 0
        %2226 = vmatpush1.bf16.msra.mxu0 0
        %2227 = vmatprep.subr.bf16.mxu0 0
        %2228 = vmatpush1.bf16.msra.mxu0 0
        %2229 = vmatprep.subr.bf16.mxu0 0
        %2230 = vmatpush1.bf16.msra.mxu0 %v2210
        %2231 = vmatprep.subr.bf16.mxu0 0
        %2232 = vmatpush2.bf16.msra.mxu0 0
        %2233 = vmatprep.subr.bf16.mxu0 0
        %2234 = vmatpush2.bf16.msra.mxu0 0
        %2235 = vmatprep.subr.bf16.mxu0 0
        %2236 = vmatpush2.bf16.msra.mxu0 0
        %2237 = vmatprep.subr.bf16.mxu0 0
        %2238 = vmatpush2.bf16.msra.mxu0 0
        %2239 = vmatprep.subr.bf16.mxu0 0
        %2240 = vmatpush2.bf16.msra.mxu0 0
        %2241 = vmatprep.subr.bf16.mxu0 0
        %2242 = vmatpush2.bf16.msra.mxu0 0
        %2243 = vmatprep.subr.bf16.mxu0 0
        %2244 = vmatpush2.bf16.msra.mxu0 0
        %2245 = vmatprep.subr.bf16.mxu0 0
        %2246 = vmatpush2.bf16.msra.mxu0 0
        %2247 = vmatprep.mubr.bf16.mxu0 0
        %2248 = vmatmul.mubr.bf16.gmra.mxu0 %v2213
        %v2249 = vpop.f32.mrf.mxu0
        %v2250 = vadd.f32 0.0, %v2249
        %v2251 = vpop.f32.mrf.mxu0
        %v2252 = vpop.f32.mrf.mxu0
        %v2253 = vadd.f32 0.0, %v2252
        %v2254 = vpop.f32.mrf.mxu0
        %2255 = vdwg.mxu0
        %v2256 = vld [vmem:[%s659 + $0x10] sm:$0xf]
        %v2257 = vld [vmem:[%s659 + $0x14] sm:$0xf]
        %v2258 = vld [vmem:[%s659 + $0x18] sm:$0xf]
        %v2259 = vld [vmem:[%s659 + $0x1c] sm:$0xf]
        %v2260 = vpack.c.bf16 %v2253, %v2250
        %v2265 = vunpack.c.l.b16 %v2256
        %v2266 = vunpack.c.l.b16 %v2257
        %v2267 = vunpack.c.l.b16 %v2258
        %v2268 = vunpack.c.l.b16 %v2259
        %v2269 = vpack.c.b16 %v2266, %v2265
        %v2270 = vpack.c.b16 %v2268, %v2267
        %v2274 = vsel %vm1249, %v2260, 0
        %2276 = vmatprep.subr.bf16.mxu0 0
        %2277 = vmatpush1.bf16.msra.mxu0 0
        %2278 = vmatprep.subr.bf16.mxu0 0
        %2279 = vmatpush1.bf16.msra.mxu0 0
        %2280 = vmatprep.subr.bf16.mxu0 0
        %2281 = vmatpush1.bf16.msra.mxu0 0
        %2282 = vmatprep.subr.bf16.mxu0 0
        %2283 = vmatpush1.bf16.msra.mxu0 0
        %2284 = vmatprep.subr.bf16.mxu0 0
        %2285 = vmatpush1.bf16.msra.mxu0 0
        %2286 = vmatprep.subr.bf16.mxu0 0
        %2287 = vmatpush1.bf16.msra.mxu0 0
        %2288 = vmatprep.subr.bf16.mxu0 0
        %2289 = vmatpush1.bf16.msra.mxu0 %v2270
        %2290 = vmatprep.subr.bf16.mxu0 0
        %2291 = vmatpush1.bf16.msra.mxu0 %v2269
        %2292 = vmatprep.subr.bf16.mxu0 0
        %2293 = vmatpush2.bf16.msra.mxu0 0
        %2294 = vmatprep.subr.bf16.mxu0 0
        %2295 = vmatpush2.bf16.msra.mxu0 0
        %2296 = vmatprep.subr.bf16.mxu0 0
        %2297 = vmatpush2.bf16.msra.mxu0 0
        %2298 = vmatprep.subr.bf16.mxu0 0
        %2299 = vmatpush2.bf16.msra.mxu0 0
        %2300 = vmatprep.subr.bf16.mxu0 0
        %2301 = vmatpush2.bf16.msra.mxu0 0
        %2302 = vmatprep.subr.bf16.mxu0 0
        %2303 = vmatpush2.bf16.msra.mxu0 0
        %2304 = vmatprep.subr.bf16.mxu0 0
        %2305 = vmatpush2.bf16.msra.mxu0 0
        %2306 = vmatprep.subr.bf16.mxu0 0
        %2307 = vmatpush2.bf16.msra.mxu0 0
        %2308 = vmatprep.mubr.bf16.mxu0 0
        %2309 = vmatmul.mubr.bf16.gmra.mxu0 %v2274
        %v2310 = vpop.f32.mrf.mxu0
        %v2311 = vadd.f32 0.0, %v2310
        %v2312 = vpop.f32.mrf.mxu0
        %v2313 = vpop.f32.mrf.mxu0
        %v2314 = vadd.f32 0.0, %v2313
        %v2315 = vpop.f32.mrf.mxu0
        %2316 = vdwg.mxu0
        %v2321 = vunpack.c.l.b16 %v2130
        %v2322 = vunpack.c.l.b16 %v2131
        %v2323 = vunpack.c.l.b16 %v2132
        %v2324 = vunpack.c.l.b16 %v2133
        %v2325 = vpack.c.b16 %v2322, %v2321
        %v2326 = vpack.c.b16 %v2324, %v2323
        %v2330 = vsel %vm1249, %v2134, 0
        %2332 = vmatprep.subr.bf16.mxu0 0
        %2333 = vmatpush1.bf16.msra.mxu0 0
        %2334 = vmatprep.subr.bf16.mxu0 0
        %2335 = vmatpush1.bf16.msra.mxu0 0
        %2336 = vmatprep.subr.bf16.mxu0 0
        %2337 = vmatpush1.bf16.msra.mxu0 0
        %2338 = vmatprep.subr.bf16.mxu0 0
        %2339 = vmatpush1.bf16.msra.mxu0 0
        %2340 = vmatprep.subr.bf16.mxu0 0
        %2341 = vmatpush1.bf16.msra.mxu0 0
        %2342 = vmatprep.subr.bf16.mxu0 0
        %2343 = vmatpush1.bf16.msra.mxu0 0
        %2344 = vmatprep.subr.bf16.mxu0 0
        %2345 = vmatpush1.bf16.msra.mxu0 %v2326
        %2346 = vmatprep.subr.bf16.mxu0 0
        %2347 = vmatpush1.bf16.msra.mxu0 %v2325
        %2348 = vmatprep.subr.bf16.mxu0 0
        %2349 = vmatpush2.bf16.msra.mxu0 0
        %2350 = vmatprep.subr.bf16.mxu0 0
        %2351 = vmatpush2.bf16.msra.mxu0 0
        %2352 = vmatprep.subr.bf16.mxu0 0
        %2353 = vmatpush2.bf16.msra.mxu0 0
        %2354 = vmatprep.subr.bf16.mxu0 0
        %2355 = vmatpush2.bf16.msra.mxu0 0
        %2356 = vmatprep.subr.bf16.mxu0 0
        %2357 = vmatpush2.bf16.msra.mxu0 0
        %2358 = vmatprep.subr.bf16.mxu0 0
        %2359 = vmatpush2.bf16.msra.mxu0 0
        %2360 = vmatprep.subr.bf16.mxu0 0
        %2361 = vmatpush2.bf16.msra.mxu0 0
        %2362 = vmatprep.subr.bf16.mxu0 0
        %2363 = vmatpush2.bf16.msra.mxu0 0
        %2364 = vmatprep.mubr.bf16.mxu0 0
        %2365 = vmatmul.mubr.bf16.gmra.mxu0 %v2330
        %v2366 = vpop.f32.mrf.mxu0
        %v2367 = vadd.f32 %v2311, %v2366
        %v2368 = vpop.f32.mrf.mxu0
        %v2369 = vpop.f32.mrf.mxu0
        %v2370 = vadd.f32 %v2314, %v2369
        %v2371 = vpop.f32.mrf.mxu0
        %2372 = vdwg.mxu0
        %2373 = vrot.lane.b32.xlu0 %v2004, 64
        %v2374 = vpop.permute.xlu0 %2373
        %2375 = vrot.lane.b32.xlu0 %v2009, 64
        %v2376 = vpop.permute.xlu0 %2375
        %v2378 = vsel %vm1249, %v2374, 0
        %v2381 = vsel %vm1249, %v2376, 0
        %2383 = vmatprep.subr.bf16.mxu0 0
        %2384 = vmatpush1.bf16.xpose.msra.mxu0 0
        %2385 = vmatprep.subr.bf16.mxu0 0
        %2386 = vmatpush1.bf16.xpose.msra.mxu0 0
        %2387 = vmatprep.subr.bf16.mxu0 0
        %2388 = vmatpush1.bf16.xpose.msra.mxu0 0
        %2389 = vmatprep.subr.bf16.mxu0 0
        %2390 = vmatpush1.bf16.xpose.msra.mxu0 0
        %2391 = vmatprep.subr.bf16.mxu0 0
        %2392 = vmatpush1.bf16.xpose.msra.mxu0 0
        %2393 = vmatprep.subr.bf16.mxu0 0
        %2394 = vmatpush1.bf16.xpose.msra.mxu0 0
        %2395 = vmatprep.subr.bf16.mxu0 0
        %2396 = vmatpush1.bf16.xpose.msra.mxu0 0
        %2397 = vmatprep.subr.bf16.mxu0 0
        %2398 = vmatpush1.bf16.xpose.msra.mxu0 %v2381
        %2399 = vmatprep.subr.bf16.mxu0 0
        %2400 = vmatpush2.bf16.xpose.msra.mxu0 0
        %2401 = vmatprep.subr.bf16.mxu0 0
        %2402 = vmatpush2.bf16.xpose.msra.mxu0 0
        %2403 = vmatprep.subr.bf16.mxu0 0
        %2404 = vmatpush2.bf16.xpose.msra.mxu0 0
        %2405 = vmatprep.subr.bf16.mxu0 0
        %2406 = vmatpush2.bf16.xpose.msra.mxu0 0
        %2407 = vmatprep.subr.bf16.mxu0 0
        %2408 = vmatpush2.bf16.xpose.msra.mxu0 0
        %2409 = vmatprep.subr.bf16.mxu0 0
        %2410 = vmatpush2.bf16.xpose.msra.mxu0 0
        %2411 = vmatprep.subr.bf16.mxu0 0
        %2412 = vmatpush2.bf16.xpose.msra.mxu0 0
        %2413 = vmatprep.subr.bf16.mxu0 0
        %2414 = vmatpush2.bf16.xpose.msra.mxu0 0
        %2415 = vmatprep.mubr.bf16.mxu0 0
        %2416 = vmatmul.mubr.bf16.gmra.mxu0 %v2378
        %v2417 = vpop.f32.mrf.mxu0
        %v2418 = vadd.f32 %v1230, %v2417
        %v2419 = vpop.f32.mrf.mxu0
        %v2420 = vpop.f32.mrf.mxu0
        %v2421 = vadd.f32 %v1231, %v2420
        %v2422 = vpop.f32.mrf.mxu0
        %2423 = vdwg.mxu0
        %v2424 = vsel %vm1297, %v2418, -inf
        %2425 = vmax.xlane.f32.xlu0 %v2424
        %v2426 = vpop.xlane.xlu0 %2425
        %v2427 = vsel %vm1297, %v2421, -inf
        %2428 = vmax.xlane.f32.xlu0 %v2427
        %v2429 = vpop.xlane.xlu0 %2428
        %v2430 = vsub.f32 %v2418, %v2426
        %v2431 = vsub.f32 %v2421, %v2429
        %v2432 = vmul.f32 %v2430, 1.442695
        %v2433 = vpow.pop %v2432
        %v2434 = vmul.f32 %v2431, 1.442695
        %v2435 = vpow.pop %v2434
        %v2436 = vsel %vm1297, %v2433, 0.0
        %2437 = vadd.xlane.f32.xlu0 %v2436
        %v2438 = vpop.xlane.xlu0 %2437
        %v2439 = vsel %vm1297, %v2435, 0.0
        %2440 = vadd.xlane.f32.xlu0 %v2439
        %v2441 = vpop.xlane.xlu0 %2440
        %v2442 = vrcp.pop %v2438
        %v2443 = vrcp.pop %v2441
        %v2444 = vmul.f32 %v2433, %v2442
        %v2445 = vmul.f32 %v2435, %v2443
        %v2446 = vpack.c.bf16 %v2445, %v2444
        %2447 = vrot.lane.b32.xlu0 %v2084, 64
        %v2448 = vpop.permute.xlu0 %2447
        %v2451 = vsel %vm1297, %v2446, 0
        %2453 = vmatprep.subr.bf16.mxu0 0
        %2454 = vmatpush1.bf16.msra.mxu0 0
        %2455 = vmatprep.subr.bf16.mxu0 0
        %2456 = vmatpush1.bf16.msra.mxu0 0
        %2457 = vmatprep.subr.bf16.mxu0 0
        %2458 = vmatpush1.bf16.msra.mxu0 0
        %2459 = vmatprep.subr.bf16.mxu0 0
        %2460 = vmatpush1.bf16.msra.mxu0 0
        %2461 = vmatprep.subr.bf16.mxu0 0
        %2462 = vmatpush1.bf16.msra.mxu0 0
        %2463 = vmatprep.subr.bf16.mxu0 0
        %2464 = vmatpush1.bf16.msra.mxu0 0
        %2465 = vmatprep.subr.bf16.mxu0 0
        %2466 = vmatpush1.bf16.msra.mxu0 0
        %2467 = vmatprep.subr.bf16.mxu0 0
        %2468 = vmatpush1.bf16.msra.mxu0 %v2448
        %2469 = vmatprep.subr.bf16.mxu0 0
        %2470 = vmatpush2.bf16.msra.mxu0 0
        %2471 = vmatprep.subr.bf16.mxu0 0
        %2472 = vmatpush2.bf16.msra.mxu0 0
        %2473 = vmatprep.subr.bf16.mxu0 0
        %2474 = vmatpush2.bf16.msra.mxu0 0
        %2475 = vmatprep.subr.bf16.mxu0 0
        %2476 = vmatpush2.bf16.msra.mxu0 0
        %2477 = vmatprep.subr.bf16.mxu0 0
        %2478 = vmatpush2.bf16.msra.mxu0 0
        %2479 = vmatprep.subr.bf16.mxu0 0
        %2480 = vmatpush2.bf16.msra.mxu0 0
        %2481 = vmatprep.subr.bf16.mxu0 0
        %2482 = vmatpush2.bf16.msra.mxu0 0
        %2483 = vmatprep.subr.bf16.mxu0 0
        %2484 = vmatpush2.bf16.msra.mxu0 0
        %2485 = vmatprep.mubr.bf16.mxu0 0
        %2486 = vmatmul.mubr.bf16.gmra.mxu0 %v2451
        %v2487 = vpop.f32.mrf.mxu0
        %v2488 = vadd.f32 0.0, %v2487
        %v2489 = vpop.f32.mrf.mxu0
        %v2490 = vpop.f32.mrf.mxu0
        %v2491 = vadd.f32 0.0, %v2490
        %v2492 = vpop.f32.mrf.mxu0
        %2493 = vdwg.mxu0
        %v2494 = vld [vmem:[%s659 + $0x20] sm:$0xf]
        %v2495 = vld [vmem:[%s659 + $0x24] sm:$0xf]
        %v2496 = vld [vmem:[%s659 + $0x28] sm:$0xf]
        %v2497 = vld [vmem:[%s659 + $0x2c] sm:$0xf]
        %v2498 = vpack.c.bf16 %v2491, %v2488
        %v2503 = vunpack.c.l.b16 %v2494
        %v2504 = vunpack.c.l.b16 %v2495
        %v2505 = vunpack.c.l.b16 %v2496
        %v2506 = vunpack.c.l.b16 %v2497
        %v2507 = vpack.c.b16 %v2504, %v2503
        %v2508 = vpack.c.b16 %v2506, %v2505
        %v2512 = vsel %vm1249, %v2498, 0
        %2514 = vmatprep.subr.bf16.mxu0 0
        %2515 = vmatpush1.bf16.msra.mxu0 0
        %2516 = vmatprep.subr.bf16.mxu0 0
        %2517 = vmatpush1.bf16.msra.mxu0 0
        %2518 = vmatprep.subr.bf16.mxu0 0
        %2519 = vmatpush1.bf16.msra.mxu0 0
        %2520 = vmatprep.subr.bf16.mxu0 0
        %2521 = vmatpush1.bf16.msra.mxu0 0
        %2522 = vmatprep.subr.bf16.mxu0 0
        %2523 = vmatpush1.bf16.msra.mxu0 0
        %2524 = vmatprep.subr.bf16.mxu0 0
        %2525 = vmatpush1.bf16.msra.mxu0 0
        %2526 = vmatprep.subr.bf16.mxu0 0
        %2527 = vmatpush1.bf16.msra.mxu0 %v2508
        %2528 = vmatprep.subr.bf16.mxu0 0
        %2529 = vmatpush1.bf16.msra.mxu0 %v2507
        %2530 = vmatprep.subr.bf16.mxu0 0
        %2531 = vmatpush2.bf16.msra.mxu0 0
        %2532 = vmatprep.subr.bf16.mxu0 0
        %2533 = vmatpush2.bf16.msra.mxu0 0
        %2534 = vmatprep.subr.bf16.mxu0 0
        %2535 = vmatpush2.bf16.msra.mxu0 0
        %2536 = vmatprep.subr.bf16.mxu0 0
        %2537 = vmatpush2.bf16.msra.mxu0 0
        %2538 = vmatprep.subr.bf16.mxu0 0
        %2539 = vmatpush2.bf16.msra.mxu0 0
        %2540 = vmatprep.subr.bf16.mxu0 0
        %2541 = vmatpush2.bf16.msra.mxu0 0
        %2542 = vmatprep.subr.bf16.mxu0 0
        %2543 = vmatpush2.bf16.msra.mxu0 0
        %2544 = vmatprep.subr.bf16.mxu0 0
        %2545 = vmatpush2.bf16.msra.mxu0 0
        %2546 = vmatprep.mubr.bf16.mxu0 0
        %2547 = vmatmul.mubr.bf16.gmra.mxu0 %v2512
        %v2548 = vpop.f32.mrf.mxu0
        %v2549 = vadd.f32 0.0, %v2548
        %v2550 = vpop.f32.mrf.mxu0
        %v2551 = vpop.f32.mrf.mxu0
        %v2552 = vadd.f32 0.0, %v2551
        %v2553 = vpop.f32.mrf.mxu0
        %2554 = vdwg.mxu0
        %v2555 = vadd.f32 %v2367, %v2549
        %v2556 = vadd.f32 %v2370, %v2552
        %2557 = vrot.lane.b32.xlu0 %v2004, 32
        %v2558 = vpop.permute.xlu0 %2557
        %2559 = vrot.lane.b32.xlu0 %v2009, 32
        %v2560 = vpop.permute.xlu0 %2559
        %v2562 = vsel %vm1249, %v2558, 0
        %v2565 = vsel %vm1249, %v2560, 0
        %2567 = vmatprep.subr.bf16.mxu0 0
        %2568 = vmatpush1.bf16.xpose.msra.mxu0 0
        %2569 = vmatprep.subr.bf16.mxu0 0
        %2570 = vmatpush1.bf16.xpose.msra.mxu0 0
        %2571 = vmatprep.subr.bf16.mxu0 0
        %2572 = vmatpush1.bf16.xpose.msra.mxu0 0
        %2573 = vmatprep.subr.bf16.mxu0 0
        %2574 = vmatpush1.bf16.xpose.msra.mxu0 0
        %2575 = vmatprep.subr.bf16.mxu0 0
        %2576 = vmatpush1.bf16.xpose.msra.mxu0 0
        %2577 = vmatprep.subr.bf16.mxu0 0
        %2578 = vmatpush1.bf16.xpose.msra.mxu0 0
        %2579 = vmatprep.subr.bf16.mxu0 0
        %2580 = vmatpush1.bf16.xpose.msra.mxu0 0
        %2581 = vmatprep.subr.bf16.mxu0 0
        %2582 = vmatpush1.bf16.xpose.msra.mxu0 %v2565
        %2583 = vmatprep.subr.bf16.mxu0 0
        %2584 = vmatpush2.bf16.xpose.msra.mxu0 0
        %2585 = vmatprep.subr.bf16.mxu0 0
        %2586 = vmatpush2.bf16.xpose.msra.mxu0 0
        %2587 = vmatprep.subr.bf16.mxu0 0
        %2588 = vmatpush2.bf16.xpose.msra.mxu0 0
        %2589 = vmatprep.subr.bf16.mxu0 0
        %2590 = vmatpush2.bf16.xpose.msra.mxu0 0
        %2591 = vmatprep.subr.bf16.mxu0 0
        %2592 = vmatpush2.bf16.xpose.msra.mxu0 0
        %2593 = vmatprep.subr.bf16.mxu0 0
        %2594 = vmatpush2.bf16.xpose.msra.mxu0 0
        %2595 = vmatprep.subr.bf16.mxu0 0
        %2596 = vmatpush2.bf16.xpose.msra.mxu0 0
        %2597 = vmatprep.subr.bf16.mxu0 0
        %2598 = vmatpush2.bf16.xpose.msra.mxu0 0
        %2599 = vmatprep.mubr.bf16.mxu0 0
        %2600 = vmatmul.mubr.bf16.gmra.mxu0 %v2562
        %v2601 = vpop.f32.mrf.mxu0
        %v2602 = vadd.f32 %v1230, %v2601
        %v2603 = vpop.f32.mrf.mxu0
        %v2604 = vpop.f32.mrf.mxu0
        %v2605 = vadd.f32 %v1231, %v2604
        %v2606 = vpop.f32.mrf.mxu0
        %2607 = vdwg.mxu0
        %v2608 = vsel %vm1297, %v2602, -inf
        %2609 = vmax.xlane.f32.xlu0 %v2608
        %v2610 = vpop.xlane.xlu0 %2609
        %v2611 = vsel %vm1297, %v2605, -inf
        %2612 = vmax.xlane.f32.xlu0 %v2611
        %v2613 = vpop.xlane.xlu0 %2612
        %v2614 = vsub.f32 %v2602, %v2610
        %v2615 = vsub.f32 %v2605, %v2613
        %v2616 = vmul.f32 %v2614, 1.442695
        %v2617 = vpow.pop %v2616
        %v2618 = vmul.f32 %v2615, 1.442695
        %v2619 = vpow.pop %v2618
        %v2620 = vsel %vm1297, %v2617, 0.0
        %2621 = vadd.xlane.f32.xlu0 %v2620
        %v2622 = vpop.xlane.xlu0 %2621
        %v2623 = vsel %vm1297, %v2619, 0.0
        %2624 = vadd.xlane.f32.xlu0 %v2623
        %v2625 = vpop.xlane.xlu0 %2624
        %v2626 = vrcp.pop %v2622
        %v2627 = vrcp.pop %v2625
        %v2628 = vmul.f32 %v2617, %v2626
        %v2629 = vmul.f32 %v2619, %v2627
        %v2630 = vpack.c.bf16 %v2629, %v2628
        %2631 = vrot.lane.b32.xlu0 %v2084, 32
        %v2632 = vpop.permute.xlu0 %2631
        %v2635 = vsel %vm1297, %v2630, 0
        %2637 = vmatprep.subr.bf16.mxu0 0
        %2638 = vmatpush1.bf16.msra.mxu0 0
        %2639 = vmatprep.subr.bf16.mxu0 0
        %2640 = vmatpush1.bf16.msra.mxu0 0
        %2641 = vmatprep.subr.bf16.mxu0 0
        %2642 = vmatpush1.bf16.msra.mxu0 0
        %2643 = vmatprep.subr.bf16.mxu0 0
        %2644 = vmatpush1.bf16.msra.mxu0 0
        %2645 = vmatprep.subr.bf16.mxu0 0
        %2646 = vmatpush1.bf16.msra.mxu0 0
        %2647 = vmatprep.subr.bf16.mxu0 0
        %2648 = vmatpush1.bf16.msra.mxu0 0
        %2649 = vmatprep.subr.bf16.mxu0 0
        %2650 = vmatpush1.bf16.msra.mxu0 0
        %2651 = vmatprep.subr.bf16.mxu0 0
        %2652 = vmatpush1.bf16.msra.mxu0 %v2632
        %2653 = vmatprep.subr.bf16.mxu0 0
        %2654 = vmatpush2.bf16.msra.mxu0 0
        %2655 = vmatprep.subr.bf16.mxu0 0
        %2656 = vmatpush2.bf16.msra.mxu0 0
        %2657 = vmatprep.subr.bf16.mxu0 0
        %2658 = vmatpush2.bf16.msra.mxu0 0
        %2659 = vmatprep.subr.bf16.mxu0 0
        %2660 = vmatpush2.bf16.msra.mxu0 0
        %2661 = vmatprep.subr.bf16.mxu0 0
        %2662 = vmatpush2.bf16.msra.mxu0 0
        %2663 = vmatprep.subr.bf16.mxu0 0
        %2664 = vmatpush2.bf16.msra.mxu0 0
        %2665 = vmatprep.subr.bf16.mxu0 0
        %2666 = vmatpush2.bf16.msra.mxu0 0
        %2667 = vmatprep.subr.bf16.mxu0 0
        %2668 = vmatpush2.bf16.msra.mxu0 0
        %2669 = vmatprep.mubr.bf16.mxu0 0
        %2670 = vmatmul.mubr.bf16.gmra.mxu0 %v2635
        %v2671 = vpop.f32.mrf.mxu0
        %v2672 = vadd.f32 0.0, %v2671
        %v2673 = vpop.f32.mrf.mxu0
        %v2674 = vpop.f32.mrf.mxu0
        %v2675 = vadd.f32 0.0, %v2674
        %v2676 = vpop.f32.mrf.mxu0
        %2677 = vdwg.mxu0
        %v2678 = vld [vmem:[%s659 + $0x30] sm:$0xf]
        %v2679 = vld [vmem:[%s659 + $0x34] sm:$0xf]
        %v2680 = vld [vmem:[%s659 + $0x38] sm:$0xf]
        %v2681 = vld [vmem:[%s659 + $0x3c] sm:$0xf]
        %v2682 = vpack.c.bf16 %v2675, %v2672
        %v2687 = vunpack.c.l.b16 %v2678
        %v2688 = vunpack.c.l.b16 %v2679
        %v2689 = vunpack.c.l.b16 %v2680
        %v2690 = vunpack.c.l.b16 %v2681
        %v2691 = vpack.c.b16 %v2688, %v2687
        %v2692 = vpack.c.b16 %v2690, %v2689
        %v2696 = vsel %vm1249, %v2682, 0
        %2698 = vmatprep.subr.bf16.mxu0 0
        %2699 = vmatpush1.bf16.msra.mxu0 0
        %2700 = vmatprep.subr.bf16.mxu0 0
        %2701 = vmatpush1.bf16.msra.mxu0 0
        %2702 = vmatprep.subr.bf16.mxu0 0
        %2703 = vmatpush1.bf16.msra.mxu0 0
        %2704 = vmatprep.subr.bf16.mxu0 0
        %2705 = vmatpush1.bf16.msra.mxu0 0
        %2706 = vmatprep.subr.bf16.mxu0 0
        %2707 = vmatpush1.bf16.msra.mxu0 0
        %2708 = vmatprep.subr.bf16.mxu0 0
        %2709 = vmatpush1.bf16.msra.mxu0 0
        %2710 = vmatprep.subr.bf16.mxu0 0
        %2711 = vmatpush1.bf16.msra.mxu0 %v2692
        %2712 = vmatprep.subr.bf16.mxu0 0
        %2713 = vmatpush1.bf16.msra.mxu0 %v2691
        %2714 = vmatprep.subr.bf16.mxu0 0
        %2715 = vmatpush2.bf16.msra.mxu0 0
        %2716 = vmatprep.subr.bf16.mxu0 0
        %2717 = vmatpush2.bf16.msra.mxu0 0
        %2718 = vmatprep.subr.bf16.mxu0 0
        %2719 = vmatpush2.bf16.msra.mxu0 0
        %2720 = vmatprep.subr.bf16.mxu0 0
        %2721 = vmatpush2.bf16.msra.mxu0 0
        %2722 = vmatprep.subr.bf16.mxu0 0
        %2723 = vmatpush2.bf16.msra.mxu0 0
        %2724 = vmatprep.subr.bf16.mxu0 0
        %2725 = vmatpush2.bf16.msra.mxu0 0
        %2726 = vmatprep.subr.bf16.mxu0 0
        %2727 = vmatpush2.bf16.msra.mxu0 0
        %2728 = vmatprep.subr.bf16.mxu0 0
        %2729 = vmatpush2.bf16.msra.mxu0 0
        %2730 = vmatprep.mubr.bf16.mxu0 0
        %2731 = vmatmul.mubr.bf16.gmra.mxu0 %v2696
        %v2732 = vpop.f32.mrf.mxu0
        %v2733 = vadd.f32 0.0, %v2732
        %v2734 = vpop.f32.mrf.mxu0
        %v2735 = vpop.f32.mrf.mxu0
        %v2736 = vadd.f32 0.0, %v2735
        %v2737 = vpop.f32.mrf.mxu0
        %2738 = vdwg.mxu0
        %v2739 = vadd.f32 %v2555, %v2733
        %v2740 = vadd.f32 %v2556, %v2736
        %v2741 = vadd.f32 %v832, %v2739
        %v2742 = vadd.f32 %v833, %v2740
        %v2743 = vadd.f32 %v2741, %v1988
        %v2744 = vadd.f32 %v2742, %v1988
        %2745 = vst [vmem:[#allocation2 + $0x10] sm:$0xff] %v2743
        %2746 = vst [vmem:[#allocation2 + $0x18] sm:$0xff] %v2744
        %v2747 = vld [vmem:[#allocation2] sm:$0xff]
        %v2748 = vld [vmem:[#allocation2 + $0x8] sm:$0xff]
        %v2749 = vld [vmem:[#allocation2 + $0x10] sm:$0xff]
        %v2750 = vld [vmem:[#allocation2 + $0x18] sm:$0xff]
        %v2751 = vld [vmem:[%s788] sm:$0x1]
        %v2752 = vld [vmem:[%s791] sm:$0x1]
        %2753 = vadd.xlane.f32.xlu0 %v2747
        %v2754 = vpop.xlane.xlu0 %2753
        %2755 = vadd.xlane.f32.xlu0 %v2748
        %v2756 = vpop.xlane.xlu0 %2755
        %2757 = vadd.xlane.f32.xlu0 %v2749
        %v2758 = vpop.xlane.xlu0 %2757
        %2759 = vadd.xlane.f32.xlu0 %v2750
        %v2760 = vpop.xlane.xlu0 %2759
        %v2761 = vmul.f32 %v2754, %v844
        %v2762 = vmul.f32 %v2756, %v844
        %v2763 = vmul.f32 %v2758, %v844
        %v2764 = vmul.f32 %v2760, %v844
        %v2765 = vsub.f32 %v2747, %v2761
        %v2766 = vsub.f32 %v2748, %v2762
        %v2767 = vsub.f32 %v2749, %v2763
        %v2768 = vsub.f32 %v2750, %v2764
        %v2769 = vmul.f32 %v2765, %v2765
        %v2770 = vmul.f32 %v2766, %v2766
        %v2771 = vmul.f32 %v2767, %v2767
        %v2772 = vmul.f32 %v2768, %v2768
        %2773 = vadd.xlane.f32.xlu0 %v2769
        %v2774 = vpop.xlane.xlu0 %2773
        %2775 = vadd.xlane.f32.xlu0 %v2770
        %v2776 = vpop.xlane.xlu0 %2775
        %2777 = vadd.xlane.f32.xlu0 %v2771
        %v2778 = vpop.xlane.xlu0 %2777
        %2779 = vadd.xlane.f32.xlu0 %v2772
        %v2780 = vpop.xlane.xlu0 %2779
        %v2781 = vmul.f32 %v2774, %v844
        %v2782 = vmul.f32 %v2776, %v844
        %v2783 = vmul.f32 %v2778, %v844
        %v2784 = vmul.f32 %v2780, %v844
        %v2785 = vadd.f32 %v2781, 1e-05
        %v2786 = vadd.f32 %v2782, 1e-05
        %v2787 = vadd.f32 %v2783, 1e-05
        %v2788 = vadd.f32 %v2784, 1e-05
        %v2789 = vrsqrt.pop %v2785
        %v2790 = vrsqrt.pop %v2786
        %v2791 = vrsqrt.pop %v2787
        %v2792 = vrsqrt.pop %v2788
        %v2793 = vmul.f32 %v2765, %v2789
        %v2794 = vmul.f32 %v2766, %v2790
        %v2795 = vmul.f32 %v2767, %v2791
        %v2796 = vmul.f32 %v2768, %v2792
        %v2798 = vlaneseq
        %v2799 = vshrl.u32 %v2798, 7
        %v2800 = vsub.s32 0, %v2799
        %v2801 = vrot.slane %v2751, %v2800
        %v2803 = vmul.f32 %v2793, %v2801
        %v2804 = vmul.f32 %v2794, %v2801
        %v2805 = vmul.f32 %v2795, %v2801
        %v2806 = vmul.f32 %v2796, %v2801
        %v2808 = vlaneseq
        %v2809 = vshrl.u32 %v2808, 7
        %v2810 = vsub.s32 0, %v2809
        %v2811 = vrot.slane %v2752, %v2810
        %v2813 = vadd.f32 %v2803, %v2811
        %v2814 = vadd.f32 %v2804, %v2811
        %v2815 = vadd.f32 %v2805, %v2811
        %v2816 = vadd.f32 %v2806, %v2811
        %v2817 = vld [vmem:[%s796] sm:$0xff]
        %v2818 = vld [vmem:[%s796 + $0x8] sm:$0xff]
        %v2819 = vld [vmem:[%s796 + $0x10] sm:$0xff]
        %v2820 = vld [vmem:[%s796 + $0x18] sm:$0xff]
        %v2821 = vld [vmem:[%s796 + $0x20] sm:$0xff]
        %v2822 = vld [vmem:[%s796 + $0x28] sm:$0xff]
        %v2823 = vld [vmem:[%s796 + $0x30] sm:$0xff]
        %v2824 = vld [vmem:[%s796 + $0x38] sm:$0xff]
        %v2825 = vld [vmem:[%s796 + $0x40] sm:$0xff]
        %v2826 = vld [vmem:[%s796 + $0x48] sm:$0xff]
        %v2827 = vld [vmem:[%s796 + $0x50] sm:$0xff]
        %v2828 = vld [vmem:[%s796 + $0x58] sm:$0xff]
        %v2829 = vld [vmem:[%s796 + $0x60] sm:$0xff]
        %v2830 = vld [vmem:[%s796 + $0x68] sm:$0xff]
        %v2831 = vld [vmem:[%s796 + $0x70] sm:$0xff]
        %v2832 = vld [vmem:[%s796 + $0x78] sm:$0xff]
        %v2833 = vld [vmem:[%s796 + $0x80] sm:$0xff]
        %v2834 = vld [vmem:[%s796 + $0x88] sm:$0xff]
        %v2835 = vld [vmem:[%s796 + $0x90] sm:$0xff]
        %v2836 = vld [vmem:[%s796 + $0x98] sm:$0xff]
        %v2837 = vld [vmem:[%s796 + $0xa0] sm:$0xff]
        %v2838 = vld [vmem:[%s796 + $0xa8] sm:$0xff]
        %v2839 = vld [vmem:[%s796 + $0xb0] sm:$0xff]
        %v2840 = vld [vmem:[%s796 + $0xb8] sm:$0xff]
        %v2841 = vld [vmem:[%s796 + $0xc0] sm:$0xff]
        %v2842 = vld [vmem:[%s796 + $0xc8] sm:$0xff]
        %v2843 = vld [vmem:[%s796 + $0xd0] sm:$0xff]
        %v2844 = vld [vmem:[%s796 + $0xd8] sm:$0xff]
        %v2845 = vld [vmem:[%s796 + $0xe0] sm:$0xff]
        %v2846 = vld [vmem:[%s796 + $0xe8] sm:$0xff]
        %v2847 = vld [vmem:[%s796 + $0xf0] sm:$0xff]
        %v2848 = vld [vmem:[%s796 + $0xf8] sm:$0xff]
        %v2849 = vpack.c.bf16 %v2814, %v2813
        %v2850 = vpack.c.bf16 %v2816, %v2815
        %v2851 = vld [vmem:[%s800] sm:$0xf]
        %v2853 = vlaneseq
        %v2854 = vshrl.u32 %v2853, 7
        %v2855 = vsub.s32 0, %v2854
        %v2856 = vrot.slane %v2851, %v2855
        %v2857 = vlaneseq
        %v2858 = vshrl.u32 %v2857, 7
        %v2859 = vsub.s32 1, %v2858
        %v2860 = vrot.slane %v2851, %v2859
        %v2861 = vlaneseq
        %v2862 = vshrl.u32 %v2861, 7
        %v2863 = vsub.s32 2, %v2862
        %v2864 = vrot.slane %v2851, %v2863
        %v2865 = vlaneseq
        %v2866 = vshrl.u32 %v2865, 7
        %v2867 = vsub.s32 3, %v2866
        %v2868 = vrot.slane %v2851, %v2867
        %v2905 = vunpack.c.l.b16 %v2817
        %v2906 = vunpack.c.h.b16 %v2817
        %v2907 = vunpack.c.l.b16 %v2818
        %v2908 = vunpack.c.h.b16 %v2818
        %v2909 = vunpack.c.l.b16 %v2819
        %v2910 = vunpack.c.h.b16 %v2819
        %v2911 = vunpack.c.l.b16 %v2820
        %v2912 = vunpack.c.h.b16 %v2820
        %v2913 = vunpack.c.l.b16 %v2821
        %v2914 = vunpack.c.h.b16 %v2821
        %v2915 = vunpack.c.l.b16 %v2822
        %v2916 = vunpack.c.h.b16 %v2822
        %v2917 = vunpack.c.l.b16 %v2823
        %v2918 = vunpack.c.h.b16 %v2823
        %v2919 = vunpack.c.l.b16 %v2824
        %v2920 = vunpack.c.h.b16 %v2824
        %v2921 = vunpack.c.l.b16 %v2825
        %v2922 = vunpack.c.h.b16 %v2825
        %v2923 = vunpack.c.l.b16 %v2826
        %v2924 = vunpack.c.h.b16 %v2826
        %v2925 = vunpack.c.l.b16 %v2827
        %v2926 = vunpack.c.h.b16 %v2827
        %v2927 = vunpack.c.l.b16 %v2828
        %v2928 = vunpack.c.h.b16 %v2828
        %v2929 = vunpack.c.l.b16 %v2829
        %v2930 = vunpack.c.h.b16 %v2829
        %v2931 = vunpack.c.l.b16 %v2830
        %v2932 = vunpack.c.h.b16 %v2830
        %v2933 = vunpack.c.l.b16 %v2831
        %v2934 = vunpack.c.h.b16 %v2831
        %v2935 = vunpack.c.l.b16 %v2832
        %v2936 = vunpack.c.h.b16 %v2832
        %v2937 = vunpack.c.l.b16 %v2833
        %v2938 = vunpack.c.h.b16 %v2833
        %v2939 = vunpack.c.l.b16 %v2834
        %v2940 = vunpack.c.h.b16 %v2834
        %v2941 = vunpack.c.l.b16 %v2835
        %v2942 = vunpack.c.h.b16 %v2835
        %v2943 = vunpack.c.l.b16 %v2836
        %v2944 = vunpack.c.h.b16 %v2836
        %v2945 = vunpack.c.l.b16 %v2837
        %v2946 = vunpack.c.h.b16 %v2837
        %v2947 = vunpack.c.l.b16 %v2838
        %v2948 = vunpack.c.h.b16 %v2838
        %v2949 = vunpack.c.l.b16 %v2839
        %v2950 = vunpack.c.h.b16 %v2839
        %v2951 = vunpack.c.l.b16 %v2840
        %v2952 = vunpack.c.h.b16 %v2840
        %v2953 = vunpack.c.l.b16 %v2841
        %v2954 = vunpack.c.h.b16 %v2841
        %v2955 = vunpack.c.l.b16 %v2842
        %v2956 = vunpack.c.h.b16 %v2842
        %v2957 = vunpack.c.l.b16 %v2843
        %v2958 = vunpack.c.h.b16 %v2843
        %v2959 = vunpack.c.l.b16 %v2844
        %v2960 = vunpack.c.h.b16 %v2844
        %v2961 = vunpack.c.l.b16 %v2845
        %v2962 = vunpack.c.h.b16 %v2845
        %v2963 = vunpack.c.l.b16 %v2846
        %v2964 = vunpack.c.h.b16 %v2846
        %v2965 = vunpack.c.l.b16 %v2847
        %v2966 = vunpack.c.h.b16 %v2847
        %v2967 = vunpack.c.l.b16 %v2848
        %v2968 = vunpack.c.h.b16 %v2848
        %v2969 = vpack.c.b16 %v2909, %v2905
        %v2970 = vpack.c.b16 %v2910, %v2906
        %v2971 = vpack.c.b16 %v2911, %v2907
        %v2972 = vpack.c.b16 %v2912, %v2908
        %v2973 = vpack.c.b16 %v2917, %v2913
        %v2974 = vpack.c.b16 %v2918, %v2914
        %v2975 = vpack.c.b16 %v2919, %v2915
        %v2976 = vpack.c.b16 %v2920, %v2916
        %v2977 = vpack.c.b16 %v2925, %v2921
        %v2978 = vpack.c.b16 %v2926, %v2922
        %v2979 = vpack.c.b16 %v2927, %v2923
        %v2980 = vpack.c.b16 %v2928, %v2924
        %v2981 = vpack.c.b16 %v2933, %v2929
        %v2982 = vpack.c.b16 %v2934, %v2930
        %v2983 = vpack.c.b16 %v2935, %v2931
        %v2984 = vpack.c.b16 %v2936, %v2932
        %v2985 = vpack.c.b16 %v2941, %v2937
        %v2986 = vpack.c.b16 %v2942, %v2938
        %v2987 = vpack.c.b16 %v2943, %v2939
        %v2988 = vpack.c.b16 %v2944, %v2940
        %v2989 = vpack.c.b16 %v2949, %v2945
        %v2990 = vpack.c.b16 %v2950, %v2946
        %v2991 = vpack.c.b16 %v2951, %v2947
        %v2992 = vpack.c.b16 %v2952, %v2948
        %v2993 = vpack.c.b16 %v2957, %v2953
        %v2994 = vpack.c.b16 %v2958, %v2954
        %v2995 = vpack.c.b16 %v2959, %v2955
        %v2996 = vpack.c.b16 %v2960, %v2956
        %v2997 = vpack.c.b16 %v2965, %v2961
        %v2998 = vpack.c.b16 %v2966, %v2962
        %v2999 = vpack.c.b16 %v2967, %v2963
        %v3000 = vpack.c.b16 %v2968, %v2964
        %3033 = vmatprep.subr.bf16.mxu0 %v2998
        %3034 = vmatpush1.bf16.msra.mxu0 %v2997
        %3035 = vmatprep.subr.bf16.mxu0 %v2994
        %3036 = vmatpush1.bf16.msra.mxu0 %v2993
        %3037 = vmatprep.subr.bf16.mxu0 %v2990
        %3038 = vmatpush1.bf16.msra.mxu0 %v2989
        %3039 = vmatprep.subr.bf16.mxu0 %v2986
        %3040 = vmatpush1.bf16.msra.mxu0 %v2985
        %3041 = vmatprep.subr.bf16.mxu0 %v2982
        %3042 = vmatpush1.bf16.msra.mxu0 %v2981
        %3043 = vmatprep.subr.bf16.mxu0 %v2978
        %3044 = vmatpush1.bf16.msra.mxu0 %v2977
        %3045 = vmatprep.subr.bf16.mxu0 %v2974
        %3046 = vmatpush1.bf16.msra.mxu0 %v2973
        %3047 = vmatprep.subr.bf16.mxu0 %v2970
        %3048 = vmatpush1.bf16.msra.mxu0 %v2969
        %3049 = vmatprep.subr.bf16.mxu0 0
        %3050 = vmatpush2.bf16.msra.mxu0 0
        %3051 = vmatprep.subr.bf16.mxu0 0
        %3052 = vmatpush2.bf16.msra.mxu0 0
        %3053 = vmatprep.subr.bf16.mxu0 0
        %3054 = vmatpush2.bf16.msra.mxu0 0
        %3055 = vmatprep.subr.bf16.mxu0 0
        %3056 = vmatpush2.bf16.msra.mxu0 0
        %3057 = vmatprep.subr.bf16.mxu0 0
        %3058 = vmatpush2.bf16.msra.mxu0 0
        %3059 = vmatprep.subr.bf16.mxu0 0
        %3060 = vmatpush2.bf16.msra.mxu0 0
        %3061 = vmatprep.subr.bf16.mxu0 0
        %3062 = vmatpush2.bf16.msra.mxu0 0
        %3063 = vmatprep.subr.bf16.mxu0 0
        %3064 = vmatpush2.bf16.msra.mxu0 0
        %3065 = vmatprep.mubr.bf16.mxu0 0
        %3066 = vmatmul.mubr.bf16.gmra.mxu0 %v2849
        %v3067 = vpop.f32.mrf.mxu0
        %v3068 = vadd.f32 %v2856, %v3067
        %v3069 = vpop.f32.mrf.mxu0
        %v3070 = vadd.f32 %v2860, %v3069
        %v3071 = vpop.f32.mrf.mxu0
        %v3072 = vadd.f32 %v2856, %v3071
        %v3073 = vpop.f32.mrf.mxu0
        %v3074 = vadd.f32 %v2860, %v3073
        %3075 = vmatprep.mubr.bf16.mxu0 0
        %3076 = vmatmul.mubr.bf16.gmra.mxu0 %v2850
        %v3077 = vpop.f32.mrf.mxu0
        %v3078 = vadd.f32 %v2856, %v3077
        %v3079 = vpop.f32.mrf.mxu0
        %v3080 = vadd.f32 %v2860, %v3079
        %v3081 = vpop.f32.mrf.mxu0
        %v3082 = vadd.f32 %v2856, %v3081
        %v3083 = vpop.f32.mrf.mxu0
        %v3084 = vadd.f32 %v2860, %v3083
        %3085 = vdwg.mxu0
        %3086 = vmatprep.subr.bf16.mxu0 %v3000
        %3087 = vmatpush1.bf16.msra.mxu0 %v2999
        %3088 = vmatprep.subr.bf16.mxu0 %v2996
        %3089 = vmatpush1.bf16.msra.mxu0 %v2995
        %3090 = vmatprep.subr.bf16.mxu0 %v2992
        %3091 = vmatpush1.bf16.msra.mxu0 %v2991
        %3092 = vmatprep.subr.bf16.mxu0 %v2988
        %3093 = vmatpush1.bf16.msra.mxu0 %v2987
        %3094 = vmatprep.subr.bf16.mxu0 %v2984
        %3095 = vmatpush1.bf16.msra.mxu0 %v2983
        %3096 = vmatprep.subr.bf16.mxu0 %v2980
        %3097 = vmatpush1.bf16.msra.mxu0 %v2979
        %3098 = vmatprep.subr.bf16.mxu0 %v2976
        %3099 = vmatpush1.bf16.msra.mxu0 %v2975
        %3100 = vmatprep.subr.bf16.mxu0 %v2972
        %3101 = vmatpush1.bf16.msra.mxu0 %v2971
        %3102 = vmatprep.subr.bf16.mxu0 0
        %3103 = vmatpush2.bf16.msra.mxu0 0
        %3104 = vmatprep.subr.bf16.mxu0 0
        %3105 = vmatpush2.bf16.msra.mxu0 0
        %3106 = vmatprep.subr.bf16.mxu0 0
        %3107 = vmatpush2.bf16.msra.mxu0 0
        %3108 = vmatprep.subr.bf16.mxu0 0
        %3109 = vmatpush2.bf16.msra.mxu0 0
        %3110 = vmatprep.subr.bf16.mxu0 0
        %3111 = vmatpush2.bf16.msra.mxu0 0
        %3112 = vmatprep.subr.bf16.mxu0 0
        %3113 = vmatpush2.bf16.msra.mxu0 0
        %3114 = vmatprep.subr.bf16.mxu0 0
        %3115 = vmatpush2.bf16.msra.mxu0 0
        %3116 = vmatprep.subr.bf16.mxu0 0
        %3117 = vmatpush2.bf16.msra.mxu0 0
        %3118 = vmatprep.mubr.bf16.mxu0 0
        %3119 = vmatmul.mubr.bf16.gmra.mxu0 %v2849
        %v3120 = vpop.f32.mrf.mxu0
        %v3121 = vadd.f32 %v2864, %v3120
        %v3122 = vpop.f32.mrf.mxu0
        %v3123 = vadd.f32 %v2868, %v3122
        %v3124 = vpop.f32.mrf.mxu0
        %v3125 = vadd.f32 %v2864, %v3124
        %v3126 = vpop.f32.mrf.mxu0
        %v3127 = vadd.f32 %v2868, %v3126
        %3128 = vmatprep.mubr.bf16.mxu0 0
        %3129 = vmatmul.mubr.bf16.gmra.mxu0 %v2850
        %v3130 = vpop.f32.mrf.mxu0
        %v3131 = vadd.f32 %v2864, %v3130
        %v3132 = vpop.f32.mrf.mxu0
        %v3133 = vadd.f32 %v2868, %v3132
        %v3134 = vpop.f32.mrf.mxu0
        %v3135 = vadd.f32 %v2864, %v3134
        %v3136 = vpop.f32.mrf.mxu0
        %v3137 = vadd.f32 %v2868, %v3136
        %3138 = vdwg.mxu0
        %v3139 = vmul.f32 %v3068, 0.5
        %v3140 = vmul.f32 %v3070, 0.5
        %v3141 = vmul.f32 %v3121, 0.5
        %v3142 = vmul.f32 %v3123, 0.5
        %v3143 = vmul.f32 %v3072, 0.5
        %v3144 = vmul.f32 %v3074, 0.5
        %v3145 = vmul.f32 %v3125, 0.5
        %v3146 = vmul.f32 %v3127, 0.5
        %v3147 = vmul.f32 %v3078, 0.5
        %v3148 = vmul.f32 %v3080, 0.5
        %v3149 = vmul.f32 %v3131, 0.5
        %v3150 = vmul.f32 %v3133, 0.5
        %v3151 = vmul.f32 %v3082, 0.5
        %v3152 = vmul.f32 %v3084, 0.5
        %v3153 = vmul.f32 %v3135, 0.5
        %v3154 = vmul.f32 %v3137, 0.5
        %v3155 = vmul.f32 %v3068, 0.044715
        %v3156 = vmul.f32 %v3070, 0.044715
        %v3157 = vmul.f32 %v3121, 0.044715
        %v3158 = vmul.f32 %v3123, 0.044715
        %v3159 = vmul.f32 %v3072, 0.044715
        %v3160 = vmul.f32 %v3074, 0.044715
        %v3161 = vmul.f32 %v3125, 0.044715
        %v3162 = vmul.f32 %v3127, 0.044715
        %v3163 = vmul.f32 %v3078, 0.044715
        %v3164 = vmul.f32 %v3080, 0.044715
        %v3165 = vmul.f32 %v3131, 0.044715
        %v3166 = vmul.f32 %v3133, 0.044715
        %v3167 = vmul.f32 %v3082, 0.044715
        %v3168 = vmul.f32 %v3084, 0.044715
        %v3169 = vmul.f32 %v3135, 0.044715
        %v3170 = vmul.f32 %v3137, 0.044715
        %v3171 = vmul.f32 %v3155, %v3068
        %v3172 = vmul.f32 %v3156, %v3070
        %v3173 = vmul.f32 %v3157, %v3121
        %v3174 = vmul.f32 %v3158, %v3123
        %v3175 = vmul.f32 %v3159, %v3072
        %v3176 = vmul.f32 %v3160, %v3074
        %v3177 = vmul.f32 %v3161, %v3125
        %v3178 = vmul.f32 %v3162, %v3127
        %v3179 = vmul.f32 %v3163, %v3078
        %v3180 = vmul.f32 %v3164, %v3080
        %v3181 = vmul.f32 %v3165, %v3131
        %v3182 = vmul.f32 %v3166, %v3133
        %v3183 = vmul.f32 %v3167, %v3082
        %v3184 = vmul.f32 %v3168, %v3084
        %v3185 = vmul.f32 %v3169, %v3135
        %v3186 = vmul.f32 %v3170, %v3137
        %v3187 = vmul.f32 %v3171, %v3068
        %v3188 = vmul.f32 %v3172, %v3070
        %v3189 = vmul.f32 %v3173, %v3121
        %v3190 = vmul.f32 %v3174, %v3123
        %v3191 = vmul.f32 %v3175, %v3072
        %v3192 = vmul.f32 %v3176, %v3074
        %v3193 = vmul.f32 %v3177, %v3125
        %v3194 = vmul.f32 %v3178, %v3127
        %v3195 = vmul.f32 %v3179, %v3078
        %v3196 = vmul.f32 %v3180, %v3080
        %v3197 = vmul.f32 %v3181, %v3131
        %v3198 = vmul.f32 %v3182, %v3133
        %v3199 = vmul.f32 %v3183, %v3082
        %v3200 = vmul.f32 %v3184, %v3084
        %v3201 = vmul.f32 %v3185, %v3135
        %v3202 = vmul.f32 %v3186, %v3137
        %v3203 = vadd.f32 %v3068, %v3187
        %v3204 = vadd.f32 %v3070, %v3188
        %v3205 = vadd.f32 %v3121, %v3189
        %v3206 = vadd.f32 %v3123, %v3190
        %v3207 = vadd.f32 %v3072, %v3191
        %v3208 = vadd.f32 %v3074, %v3192
        %v3209 = vadd.f32 %v3125, %v3193
        %v3210 = vadd.f32 %v3127, %v3194
        %v3211 = vadd.f32 %v3078, %v3195
        %v3212 = vadd.f32 %v3080, %v3196
        %v3213 = vadd.f32 %v3131, %v3197
        %v3214 = vadd.f32 %v3133, %v3198
        %v3215 = vadd.f32 %v3082, %v3199
        %v3216 = vadd.f32 %v3084, %v3200
        %v3217 = vadd.f32 %v3135, %v3201
        %v3218 = vadd.f32 %v3137, %v3202
        %v3219 = vmul.f32 %v3203, 0.7978846
        %v3220 = vmul.f32 %v3204, 0.7978846
        %v3221 = vmul.f32 %v3205, 0.7978846
        %v3222 = vmul.f32 %v3206, 0.7978846
        %v3223 = vmul.f32 %v3207, 0.7978846
        %v3224 = vmul.f32 %v3208, 0.7978846
        %v3225 = vmul.f32 %v3209, 0.7978846
        %v3226 = vmul.f32 %v3210, 0.7978846
        %v3227 = vmul.f32 %v3211, 0.7978846
        %v3228 = vmul.f32 %v3212, 0.7978846
        %v3229 = vmul.f32 %v3213, 0.7978846
        %v3230 = vmul.f32 %v3214, 0.7978846
        %v3231 = vmul.f32 %v3215, 0.7978846
        %v3232 = vmul.f32 %v3216, 0.7978846
        %v3233 = vmul.f32 %v3217, 0.7978846
        %v3234 = vmul.f32 %v3218, 0.7978846
        %v3235 = vtanh.pop %v3219
        %v3236 = vtanh.pop %v3220
        %v3237 = vtanh.pop %v3221
        %v3238 = vtanh.pop %v3222
        %v3239 = vtanh.pop %v3223
        %v3240 = vtanh.pop %v3224
        %v3241 = vtanh.pop %v3225
        %v3242 = vtanh.pop %v3226
        %v3243 = vtanh.pop %v3227
        %v3244 = vtanh.pop %v3228
        %v3245 = vtanh.pop %v3229
        %v3246 = vtanh.pop %v3230
        %v3247 = vtanh.pop %v3231
        %v3248 = vtanh.pop %v3232
        %v3249 = vtanh.pop %v3233
        %v3250 = vtanh.pop %v3234
        %v3251 = vadd.f32 %v3235, 1.0
        %v3252 = vadd.f32 %v3236, 1.0
        %v3253 = vadd.f32 %v3237, 1.0
        %v3254 = vadd.f32 %v3238, 1.0
        %v3255 = vadd.f32 %v3239, 1.0
        %v3256 = vadd.f32 %v3240, 1.0
        %v3257 = vadd.f32 %v3241, 1.0
        %v3258 = vadd.f32 %v3242, 1.0
        %v3259 = vadd.f32 %v3243, 1.0
        %v3260 = vadd.f32 %v3244, 1.0
        %v3261 = vadd.f32 %v3245, 1.0
        %v3262 = vadd.f32 %v3246, 1.0
        %v3263 = vadd.f32 %v3247, 1.0
        %v3264 = vadd.f32 %v3248, 1.0
        %v3265 = vadd.f32 %v3249, 1.0
        %v3266 = vadd.f32 %v3250, 1.0
        %v3267 = vmul.f32 %v3139, %v3251
        %v3268 = vmul.f32 %v3140, %v3252
        %v3269 = vmul.f32 %v3141, %v3253
        %v3270 = vmul.f32 %v3142, %v3254
        %v3271 = vmul.f32 %v3143, %v3255
        %v3272 = vmul.f32 %v3144, %v3256
        %v3273 = vmul.f32 %v3145, %v3257
        %v3274 = vmul.f32 %v3146, %v3258
        %v3275 = vmul.f32 %v3147, %v3259
        %v3276 = vmul.f32 %v3148, %v3260
        %v3277 = vmul.f32 %v3149, %v3261
        %v3278 = vmul.f32 %v3150, %v3262
        %v3279 = vmul.f32 %v3151, %v3263
        %v3280 = vmul.f32 %v3152, %v3264
        %v3281 = vmul.f32 %v3153, %v3265
        %v3282 = vmul.f32 %v3154, %v3266
        %v3283 = vld [vmem:[%s668] sm:$0xf]
        %v3284 = vld [vmem:[%s668 + $0x4] sm:$0xf]
        %v3285 = vld [vmem:[%s668 + $0x8] sm:$0xf]
        %v3286 = vld [vmem:[%s668 + $0xc] sm:$0xf]
        %v3287 = vld [vmem:[%s668 + $0x10] sm:$0xf]
        %v3288 = vld [vmem:[%s668 + $0x14] sm:$0xf]
        %v3289 = vld [vmem:[%s668 + $0x18] sm:$0xf]
        %v3290 = vld [vmem:[%s668 + $0x1c] sm:$0xf]
        %v3291 = vld [vmem:[%s668 + $0x20] sm:$0xf]
        %v3292 = vld [vmem:[%s668 + $0x24] sm:$0xf]
        %v3293 = vld [vmem:[%s668 + $0x28] sm:$0xf]
        %v3294 = vld [vmem:[%s668 + $0x2c] sm:$0xf]
        %v3295 = vld [vmem:[%s668 + $0x30] sm:$0xf]
        %v3296 = vld [vmem:[%s668 + $0x34] sm:$0xf]
        %v3297 = vld [vmem:[%s668 + $0x38] sm:$0xf]
        %v3298 = vld [vmem:[%s668 + $0x3c] sm:$0xf]
        %v3299 = vld [vmem:[%s668 + $0x40] sm:$0xf]
        %v3300 = vld [vmem:[%s668 + $0x44] sm:$0xf]
        %v3301 = vld [vmem:[%s668 + $0x48] sm:$0xf]
        %v3302 = vld [vmem:[%s668 + $0x4c] sm:$0xf]
        %v3303 = vld [vmem:[%s668 + $0x50] sm:$0xf]
        %v3304 = vld [vmem:[%s668 + $0x54] sm:$0xf]
        %v3305 = vld [vmem:[%s668 + $0x58] sm:$0xf]
        %v3306 = vld [vmem:[%s668 + $0x5c] sm:$0xf]
        %v3307 = vld [vmem:[%s668 + $0x60] sm:$0xf]
        %v3308 = vld [vmem:[%s668 + $0x64] sm:$0xf]
        %v3309 = vld [vmem:[%s668 + $0x68] sm:$0xf]
        %v3310 = vld [vmem:[%s668 + $0x6c] sm:$0xf]
        %v3311 = vld [vmem:[%s668 + $0x70] sm:$0xf]
        %v3312 = vld [vmem:[%s668 + $0x74] sm:$0xf]
        %v3313 = vld [vmem:[%s668 + $0x78] sm:$0xf]
        %v3314 = vld [vmem:[%s668 + $0x7c] sm:$0xf]
        %v3315 = vld [vmem:[%s668 + $0x80] sm:$0xf]
        %v3316 = vld [vmem:[%s668 + $0x84] sm:$0xf]
        %v3317 = vld [vmem:[%s668 + $0x88] sm:$0xf]
        %v3318 = vld [vmem:[%s668 + $0x8c] sm:$0xf]
        %v3319 = vld [vmem:[%s668 + $0x90] sm:$0xf]
        %v3320 = vld [vmem:[%s668 + $0x94] sm:$0xf]
        %v3321 = vld [vmem:[%s668 + $0x98] sm:$0xf]
        %v3322 = vld [vmem:[%s668 + $0x9c] sm:$0xf]
        %v3323 = vld [vmem:[%s668 + $0xa0] sm:$0xf]
        %v3324 = vld [vmem:[%s668 + $0xa4] sm:$0xf]
        %v3325 = vld [vmem:[%s668 + $0xa8] sm:$0xf]
        %v3326 = vld [vmem:[%s668 + $0xac] sm:$0xf]
        %v3327 = vld [vmem:[%s668 + $0xb0] sm:$0xf]
        %v3328 = vld [vmem:[%s668 + $0xb4] sm:$0xf]
        %v3329 = vld [vmem:[%s668 + $0xb8] sm:$0xf]
        %v3330 = vld [vmem:[%s668 + $0xbc] sm:$0xf]
        %v3331 = vld [vmem:[%s668 + $0xc0] sm:$0xf]
        %v3332 = vld [vmem:[%s668 + $0xc4] sm:$0xf]
        %v3333 = vld [vmem:[%s668 + $0xc8] sm:$0xf]
        %v3334 = vld [vmem:[%s668 + $0xcc] sm:$0xf]
        %v3335 = vld [vmem:[%s668 + $0xd0] sm:$0xf]
        %v3336 = vld [vmem:[%s668 + $0xd4] sm:$0xf]
        %v3337 = vld [vmem:[%s668 + $0xd8] sm:$0xf]
        %v3338 = vld [vmem:[%s668 + $0xdc] sm:$0xf]
        %v3339 = vld [vmem:[%s668 + $0xe0] sm:$0xf]
        %v3340 = vld [vmem:[%s668 + $0xe4] sm:$0xf]
        %v3341 = vld [vmem:[%s668 + $0xe8] sm:$0xf]
        %v3342 = vld [vmem:[%s668 + $0xec] sm:$0xf]
        %v3343 = vld [vmem:[%s668 + $0xf0] sm:$0xf]
        %v3344 = vld [vmem:[%s668 + $0xf4] sm:$0xf]
        %v3345 = vld [vmem:[%s668 + $0xf8] sm:$0xf]
        %v3346 = vld [vmem:[%s668 + $0xfc] sm:$0xf]
        %v3347 = vpack.c.bf16 %v3271, %v3267
        %v3348 = vpack.c.bf16 %v3272, %v3268
        %v3349 = vpack.c.bf16 %v3273, %v3269
        %v3350 = vpack.c.bf16 %v3274, %v3270
        %v3351 = vpack.c.bf16 %v3279, %v3275
        %v3352 = vpack.c.bf16 %v3280, %v3276
        %v3353 = vpack.c.bf16 %v3281, %v3277
        %v3354 = vpack.c.bf16 %v3282, %v3278
        %v3355 = vld [vmem:[%s803] sm:$0x1]
        %v3357 = vlaneseq
        %v3358 = vshrl.u32 %v3357, 7
        %v3359 = vsub.s32 0, %v3358
        %v3360 = vrot.slane %v3355, %v3359
        %v3426 = vunpack.c.l.b16 %v3283
        %v3427 = vunpack.c.l.b16 %v3284
        %v3428 = vunpack.c.l.b16 %v3285
        %v3429 = vunpack.c.l.b16 %v3286
        %v3430 = vunpack.c.l.b16 %v3287
        %v3431 = vunpack.c.l.b16 %v3288
        %v3432 = vunpack.c.l.b16 %v3289
        %v3433 = vunpack.c.l.b16 %v3290
        %v3434 = vunpack.c.l.b16 %v3291
        %v3435 = vunpack.c.l.b16 %v3292
        %v3436 = vunpack.c.l.b16 %v3293
        %v3437 = vunpack.c.l.b16 %v3294
        %v3438 = vunpack.c.l.b16 %v3295
        %v3439 = vunpack.c.l.b16 %v3296
        %v3440 = vunpack.c.l.b16 %v3297
        %v3441 = vunpack.c.l.b16 %v3298
        %v3442 = vunpack.c.l.b16 %v3299
        %v3443 = vunpack.c.l.b16 %v3300
        %v3444 = vunpack.c.l.b16 %v3301
        %v3445 = vunpack.c.l.b16 %v3302
        %v3446 = vunpack.c.l.b16 %v3303
        %v3447 = vunpack.c.l.b16 %v3304
        %v3448 = vunpack.c.l.b16 %v3305
        %v3449 = vunpack.c.l.b16 %v3306
        %v3450 = vunpack.c.l.b16 %v3307
        %v3451 = vunpack.c.l.b16 %v3308
        %v3452 = vunpack.c.l.b16 %v3309
        %v3453 = vunpack.c.l.b16 %v3310
        %v3454 = vunpack.c.l.b16 %v3311
        %v3455 = vunpack.c.l.b16 %v3312
        %v3456 = vunpack.c.l.b16 %v3313
        %v3457 = vunpack.c.l.b16 %v3314
        %v3458 = vunpack.c.l.b16 %v3315
        %v3459 = vunpack.c.l.b16 %v3316
        %v3460 = vunpack.c.l.b16 %v3317
        %v3461 = vunpack.c.l.b16 %v3318
        %v3462 = vunpack.c.l.b16 %v3319
        %v3463 = vunpack.c.l.b16 %v3320
        %v3464 = vunpack.c.l.b16 %v3321
        %v3465 = vunpack.c.l.b16 %v3322
        %v3466 = vunpack.c.l.b16 %v3323
        %v3467 = vunpack.c.l.b16 %v3324
        %v3468 = vunpack.c.l.b16 %v3325
        %v3469 = vunpack.c.l.b16 %v3326
        %v3470 = vunpack.c.l.b16 %v3327
        %v3471 = vunpack.c.l.b16 %v3328
        %v3472 = vunpack.c.l.b16 %v3329
        %v3473 = vunpack.c.l.b16 %v3330
        %v3474 = vunpack.c.l.b16 %v3331
        %v3475 = vunpack.c.l.b16 %v3332
        %v3476 = vunpack.c.l.b16 %v3333
        %v3477 = vunpack.c.l.b16 %v3334
        %v3478 = vunpack.c.l.b16 %v3335
        %v3479 = vunpack.c.l.b16 %v3336
        %v3480 = vunpack.c.l.b16 %v3337
        %v3481 = vunpack.c.l.b16 %v3338
        %v3482 = vunpack.c.l.b16 %v3339
        %v3483 = vunpack.c.l.b16 %v3340
        %v3484 = vunpack.c.l.b16 %v3341
        %v3485 = vunpack.c.l.b16 %v3342
        %v3486 = vunpack.c.l.b16 %v3343
        %v3487 = vunpack.c.l.b16 %v3344
        %v3488 = vunpack.c.l.b16 %v3345
        %v3489 = vunpack.c.l.b16 %v3346
        %v3490 = vpack.c.b16 %v3427, %v3426
        %v3491 = vpack.c.b16 %v3429, %v3428
        %v3492 = vpack.c.b16 %v3431, %v3430
        %v3493 = vpack.c.b16 %v3433, %v3432
        %v3494 = vpack.c.b16 %v3435, %v3434
        %v3495 = vpack.c.b16 %v3437, %v3436
        %v3496 = vpack.c.b16 %v3439, %v3438
        %v3497 = vpack.c.b16 %v3441, %v3440
        %v3498 = vpack.c.b16 %v3443, %v3442
        %v3499 = vpack.c.b16 %v3445, %v3444
        %v3500 = vpack.c.b16 %v3447, %v3446
        %v3501 = vpack.c.b16 %v3449, %v3448
        %v3502 = vpack.c.b16 %v3451, %v3450
        %v3503 = vpack.c.b16 %v3453, %v3452
        %v3504 = vpack.c.b16 %v3455, %v3454
        %v3505 = vpack.c.b16 %v3457, %v3456
        %v3506 = vpack.c.b16 %v3459, %v3458
        %v3507 = vpack.c.b16 %v3461, %v3460
        %v3508 = vpack.c.b16 %v3463, %v3462
        %v3509 = vpack.c.b16 %v3465, %v3464
        %v3510 = vpack.c.b16 %v3467, %v3466
        %v3511 = vpack.c.b16 %v3469, %v3468
        %v3512 = vpack.c.b16 %v3471, %v3470
        %v3513 = vpack.c.b16 %v3473, %v3472
        %v3514 = vpack.c.b16 %v3475, %v3474
        %v3515 = vpack.c.b16 %v3477, %v3476
        %v3516 = vpack.c.b16 %v3479, %v3478
        %v3517 = vpack.c.b16 %v3481, %v3480
        %v3518 = vpack.c.b16 %v3483, %v3482
        %v3519 = vpack.c.b16 %v3485, %v3484
        %v3520 = vpack.c.b16 %v3487, %v3486
        %v3521 = vpack.c.b16 %v3489, %v3488
        %3554 = vmatprep.subr.bf16.mxu0 0
        %3555 = vmatpush1.bf16.msra.mxu0 %v3497
        %3556 = vmatprep.subr.bf16.mxu0 0
        %3557 = vmatpush1.bf16.msra.mxu0 %v3496
        %3558 = vmatprep.subr.bf16.mxu0 0
        %3559 = vmatpush1.bf16.msra.mxu0 %v3495
        %3560 = vmatprep.subr.bf16.mxu0 0
        %3561 = vmatpush1.bf16.msra.mxu0 %v3494
        %3562 = vmatprep.subr.bf16.mxu0 0
        %3563 = vmatpush1.bf16.msra.mxu0 %v3493
        %3564 = vmatprep.subr.bf16.mxu0 0
        %3565 = vmatpush1.bf16.msra.mxu0 %v3492
        %3566 = vmatprep.subr.bf16.mxu0 0
        %3567 = vmatpush1.bf16.msra.mxu0 %v3491
        %3568 = vmatprep.subr.bf16.mxu0 0
        %3569 = vmatpush1.bf16.msra.mxu0 %v3490
        %3570 = vmatprep.subr.bf16.mxu0 0
        %3571 = vmatpush2.bf16.msra.mxu0 %v3505
        %3572 = vmatprep.subr.bf16.mxu0 0
        %3573 = vmatpush2.bf16.msra.mxu0 %v3504
        %3574 = vmatprep.subr.bf16.mxu0 0
        %3575 = vmatpush2.bf16.msra.mxu0 %v3503
        %3576 = vmatprep.subr.bf16.mxu0 0
        %3577 = vmatpush2.bf16.msra.mxu0 %v3502
        %3578 = vmatprep.subr.bf16.mxu0 0
        %3579 = vmatpush2.bf16.msra.mxu0 %v3501
        %3580 = vmatprep.subr.bf16.mxu0 0
        %3581 = vmatpush2.bf16.msra.mxu0 %v3500
        %3582 = vmatprep.subr.bf16.mxu0 0
        %3583 = vmatpush2.bf16.msra.mxu0 %v3499
        %3584 = vmatprep.subr.bf16.mxu0 0
        %3585 = vmatpush2.bf16.msra.mxu0 %v3498
        %3586 = vmatprep.mubr.bf16.mxu0 %v3348
        %3587 = vmatmul.mubr.bf16.gmra.mxu0 %v3347
        %v3588 = vpop.f32.mrf.mxu0
        %v3589 = vadd.f32 %v3360, %v3588
        %v3590 = vpop.f32.mrf.mxu0
        %v3591 = vpop.f32.mrf.mxu0
        %v3592 = vadd.f32 %v3360, %v3591
        %v3593 = vpop.f32.mrf.mxu0
        %3594 = vmatprep.mubr.bf16.mxu0 %v3352
        %3595 = vmatmul.mubr.bf16.gmra.mxu0 %v3351
        %v3596 = vpop.f32.mrf.mxu0
        %v3597 = vadd.f32 %v3360, %v3596
        %v3598 = vpop.f32.mrf.mxu0
        %v3599 = vpop.f32.mrf.mxu0
        %v3600 = vadd.f32 %v3360, %v3599
        %v3601 = vpop.f32.mrf.mxu0
        %3602 = vdwg.mxu0
        %3603 = vmatprep.subr.bf16.mxu0 0
        %3604 = vmatpush1.bf16.msra.mxu0 %v3513
        %3605 = vmatprep.subr.bf16.mxu0 0
        %3606 = vmatpush1.bf16.msra.mxu0 %v3512
        %3607 = vmatprep.subr.bf16.mxu0 0
        %3608 = vmatpush1.bf16.msra.mxu0 %v3511
        %3609 = vmatprep.subr.bf16.mxu0 0
        %3610 = vmatpush1.bf16.msra.mxu0 %v3510
        %3611 = vmatprep.subr.bf16.mxu0 0
        %3612 = vmatpush1.bf16.msra.mxu0 %v3509
        %3613 = vmatprep.subr.bf16.mxu0 0
        %3614 = vmatpush1.bf16.msra.mxu0 %v3508
        %3615 = vmatprep.subr.bf16.mxu0 0
        %3616 = vmatpush1.bf16.msra.mxu0 %v3507
        %3617 = vmatprep.subr.bf16.mxu0 0
        %3618 = vmatpush1.bf16.msra.mxu0 %v3506
        %3619 = vmatprep.subr.bf16.mxu0 0
        %3620 = vmatpush2.bf16.msra.mxu0 %v3521
        %3621 = vmatprep.subr.bf16.mxu0 0
        %3622 = vmatpush2.bf16.msra.mxu0 %v3520
        %3623 = vmatprep.subr.bf16.mxu0 0
        %3624 = vmatpush2.bf16.msra.mxu0 %v3519
        %3625 = vmatprep.subr.bf16.mxu0 0
        %3626 = vmatpush2.bf16.msra.mxu0 %v3518
        %3627 = vmatprep.subr.bf16.mxu0 0
        %3628 = vmatpush2.bf16.msra.mxu0 %v3517
        %3629 = vmatprep.subr.bf16.mxu0 0
        %3630 = vmatpush2.bf16.msra.mxu0 %v3516
        %3631 = vmatprep.subr.bf16.mxu0 0
        %3632 = vmatpush2.bf16.msra.mxu0 %v3515
        %3633 = vmatprep.subr.bf16.mxu0 0
        %3634 = vmatpush2.bf16.msra.mxu0 %v3514
        %3635 = vmatprep.mubr.bf16.mxu0 %v3350
        %3636 = vmatmul.mubr.bf16.gmra.mxu0 %v3349
        %v3637 = vpop.f32.mrf.mxu0
        %v3638 = vadd.f32 %v3589, %v3637
        %v3639 = vpop.f32.mrf.mxu0
        %v3640 = vpop.f32.mrf.mxu0
        %v3641 = vadd.f32 %v3592, %v3640
        %v3642 = vpop.f32.mrf.mxu0
        %3643 = vmatprep.mubr.bf16.mxu0 %v3354
        %3644 = vmatmul.mubr.bf16.gmra.mxu0 %v3353
        %v3645 = vpop.f32.mrf.mxu0
        %v3646 = vadd.f32 %v3597, %v3645
        %v3647 = vpop.f32.mrf.mxu0
        %v3648 = vpop.f32.mrf.mxu0
        %v3649 = vadd.f32 %v3600, %v3648
        %v3650 = vpop.f32.mrf.mxu0
        %3651 = vdwg.mxu0
        %v3652 = vadd.f32 %v2747, %v3638
        %v3653 = vadd.f32 %v2748, %v3641
        %v3654 = vadd.f32 %v2749, %v3646
        %v3655 = vadd.f32 %v2750, %v3649
        %p3656 = scmp.lt.s32.totalorder %s42, 1
        // Predicated region
        $region105: #{_lambda_.1} parent=83 // pred_check
          %p3657 = pneg %p3656
        $region106: #{_lambda_.1} parent=83 // pred_check_branch
          %3659 = sbr.rel (%p3657) target = $region108
        $region107: #{_lambda_.1} parent=83 // pred_region
          %3660 = vst [vmem:[#allocation2] sm:$0xff] %v3652
          %3661 = vst [vmem:[#allocation2 + $0x8] sm:$0xff] %v3653
          %3662 = vst [vmem:[#allocation2 + $0x10] sm:$0xff] %v3654
          %3663 = vst [vmem:[#allocation2 + $0x18] sm:$0xff] %v3655
        $region108: #{_lambda_.1} parent=83 // pred_fallthru
          _
        %p3664 = scmp.eq.s32.totalorder %s42, 1
        // Predicated region
        $region109: #{_lambda_.1} parent=83 // pred_check
          %p3665 = pneg %p3664
        $region110: #{_lambda_.1} parent=83 // pred_check_branch
          %3667 = sbr.rel (%p3665) target = $region112
        $region111: #{_lambda_.1} parent=83 // pred_region
          %v3668 = vld [vmem:[%s13] sm:$0x1]
          %v3669 = vld [vmem:[%s14] sm:$0x1]
          %vm3670 = vcmask 1040384
          %v3671 = vsel %vm3670, %v3653, 0.0
          %3672 = vadd.xlane.f32.xlu0 %v3671
          %v3673 = vpop.xlane.xlu0 %3672
          %v3674 = vmul.f32 %v3673, %v844
          %v3675 = vsub.f32 %v3653, %v3674
          %v3676 = vmul.f32 %v3675, %v3675
          %v3677 = vsel %vm3670, %v3676, 0.0
          %3678 = vadd.xlane.f32.xlu0 %v3677
          %v3679 = vpop.xlane.xlu0 %3678
          %v3680 = vmul.f32 %v3679, %v844
          %v3681 = vadd.f32 %v3680, 1e-05
          %v3682 = vrsqrt.pop %v3681
          %v3683 = vmul.f32 %v3675, %v3682
          %v3684 = vmul.f32 %v3683, %v3668
          %v3685 = vadd.f32 %v3684, %v3669
          %v3686 = vld [vmem:[#allocation11] sm:$0xf]
          %v3687 = vld [vmem:[#allocation11 + $0x4] sm:$0xf]
          %v3688 = vld [vmem:[#allocation11 + $0x8] sm:$0xf]
          %v3689 = vld [vmem:[#allocation11 + $0xc] sm:$0xf]
          %v3690 = vld [vmem:[#allocation11 + $0x10] sm:$0xf]
          %v3691 = vld [vmem:[#allocation11 + $0x14] sm:$0xf]
          %v3692 = vld [vmem:[#allocation11 + $0x18] sm:$0xf]
          %v3693 = vld [vmem:[#allocation11 + $0x1c] sm:$0xf]
          %v3694 = vld [vmem:[#allocation11 + $0x20] sm:$0xf]
          %v3695 = vld [vmem:[#allocation11 + $0x24] sm:$0xf]
          %v3696 = vld [vmem:[#allocation11 + $0x28] sm:$0xf]
          %v3697 = vld [vmem:[#allocation11 + $0x2c] sm:$0xf]
          %v3698 = vld [vmem:[#allocation11 + $0x30] sm:$0xf]
          %v3699 = vld [vmem:[#allocation11 + $0x34] sm:$0xf]
          %v3700 = vld [vmem:[#allocation11 + $0x38] sm:$0xf]
          %v3701 = vld [vmem:[#allocation11 + $0x3c] sm:$0xf]
          %v3702 = vpack.c.bf16 %v3685, %v3685
          %v3719 = vunpack.c.l.b16 %v3686
          %v3720 = vunpack.c.l.b16 %v3687
          %v3721 = vunpack.c.l.b16 %v3688
          %v3722 = vunpack.c.l.b16 %v3689
          %v3723 = vunpack.c.l.b16 %v3690
          %v3724 = vunpack.c.l.b16 %v3691
          %v3725 = vunpack.c.l.b16 %v3692
          %v3726 = vunpack.c.l.b16 %v3693
          %v3727 = vunpack.c.l.b16 %v3694
          %v3728 = vunpack.c.l.b16 %v3695
          %v3729 = vunpack.c.l.b16 %v3696
          %v3730 = vunpack.c.l.b16 %v3697
          %v3731 = vunpack.c.l.b16 %v3698
          %v3732 = vunpack.c.l.b16 %v3699
          %v3733 = vunpack.c.l.b16 %v3700
          %v3734 = vunpack.c.l.b16 %v3701
          %v3735 = vpack.c.b16 %v3720, %v3719
          %v3736 = vpack.c.b16 %v3722, %v3721
          %v3737 = vpack.c.b16 %v3724, %v3723
          %v3738 = vpack.c.b16 %v3726, %v3725
          %v3739 = vpack.c.b16 %v3728, %v3727
          %v3740 = vpack.c.b16 %v3730, %v3729
          %v3741 = vpack.c.b16 %v3732, %v3731
          %v3742 = vpack.c.b16 %v3734, %v3733
          %3751 = vmatprep.subr.bf16.mxu0 0
          %3752 = vmatpush1.bf16.msra.mxu0 %v3742
          %3753 = vmatprep.subr.bf16.mxu0 0
          %3754 = vmatpush1.bf16.msra.mxu0 %v3741
          %3755 = vmatprep.subr.bf16.mxu0 0
          %3756 = vmatpush1.bf16.msra.mxu0 %v3740
          %3757 = vmatprep.subr.bf16.mxu0 0
          %3758 = vmatpush1.bf16.msra.mxu0 %v3739
          %3759 = vmatprep.subr.bf16.mxu0 0
          %3760 = vmatpush1.bf16.msra.mxu0 %v3738
          %3761 = vmatprep.subr.bf16.mxu0 0
          %3762 = vmatpush1.bf16.msra.mxu0 %v3737
          %3763 = vmatprep.subr.bf16.mxu0 0
          %3764 = vmatpush1.bf16.msra.mxu0 %v3736
          %3765 = vmatprep.subr.bf16.mxu0 0
          %3766 = vmatpush1.bf16.msra.mxu0 %v3735
          %3767 = vmatprep.subr.bf16.mxu0 0
          %3768 = vmatpush2.bf16.msra.mxu0 0
          %3769 = vmatprep.subr.bf16.mxu0 0
          %3770 = vmatpush2.bf16.msra.mxu0 0
          %3771 = vmatprep.subr.bf16.mxu0 0
          %3772 = vmatpush2.bf16.msra.mxu0 0
          %3773 = vmatprep.subr.bf16.mxu0 0
          %3774 = vmatpush2.bf16.msra.mxu0 0
          %3775 = vmatprep.subr.bf16.mxu0 0
          %3776 = vmatpush2.bf16.msra.mxu0 0
          %3777 = vmatprep.subr.bf16.mxu0 0
          %3778 = vmatpush2.bf16.msra.mxu0 0
          %3779 = vmatprep.subr.bf16.mxu0 0
          %3780 = vmatpush2.bf16.msra.mxu0 0
          %3781 = vmatprep.subr.bf16.mxu0 0
          %3782 = vmatpush2.bf16.msra.mxu0 0
          %3783 = vmatprep.mubr.bf16.mxu0 0
          %3784 = vmatmul.mubr.bf16.gmra.mxu0 %v3702
          %v3785 = vpop.f32.mrf.mxu0
          %v3786 = vadd.f32 0.0, %v3785
          %v3787 = vpop.f32.mrf.mxu0
          %v3788 = vpop.f32.mrf.mxu0
          %v3789 = vpop.f32.mrf.mxu0
          %3790 = vdwg.mxu0
          %v3791 = vmul.f32 %v3786, %v3786
          %vm3792 = vcmask 516096
          %v3793 = vsel %vm3792, %v3791, 0.0
          %3794 = vadd.xlane.f32.xlu0 %v3793
          %v3795 = vpop.xlane.xlu0 %3794
          %v3796 = vadd.f32 %v3795, 1e-12
          %v3797 = vrsqrt.pop %v3796
          %v3798 = vmul.f32 %v3786, %v3797
          %3799 = vst.msk [vmem:[%s766] sm:$0x1] %vm3792, %v3798
          %v3800 = vld [vmem:[%s13] sm:$0x1]
          %v3801 = vld [vmem:[%s14] sm:$0x1]
          %v3802 = vsel %vm3670, %v3655, 0.0
          %3803 = vadd.xlane.f32.xlu0 %v3802
          %v3804 = vpop.xlane.xlu0 %3803
          %v3805 = vmul.f32 %v3804, %v844
          %v3806 = vsub.f32 %v3655, %v3805
          %v3807 = vmul.f32 %v3806, %v3806
          %v3808 = vsel %vm3670, %v3807, 0.0
          %3809 = vadd.xlane.f32.xlu0 %v3808
          %v3810 = vpop.xlane.xlu0 %3809
          %v3811 = vmul.f32 %v3810, %v844
          %v3812 = vadd.f32 %v3811, 1e-05
          %v3813 = vrsqrt.pop %v3812
          %v3814 = vmul.f32 %v3806, %v3813
          %v3815 = vmul.f32 %v3814, %v3800
          %v3816 = vadd.f32 %v3815, %v3801
          %v3817 = vld [vmem:[#allocation11] sm:$0xf]
          %v3818 = vld [vmem:[#allocation11 + $0x4] sm:$0xf]
          %v3819 = vld [vmem:[#allocation11 + $0x8] sm:$0xf]
          %v3820 = vld [vmem:[#allocation11 + $0xc] sm:$0xf]
          %v3821 = vld [vmem:[#allocation11 + $0x10] sm:$0xf]
          %v3822 = vld [vmem:[#allocation11 + $0x14] sm:$0xf]
          %v3823 = vld [vmem:[#allocation11 + $0x18] sm:$0xf]
          %v3824 = vld [vmem:[#allocation11 + $0x1c] sm:$0xf]
          %v3825 = vld [vmem:[#allocation11 + $0x20] sm:$0xf]
          %v3826 = vld [vmem:[#allocation11 + $0x24] sm:$0xf]
          %v3827 = vld [vmem:[#allocation11 + $0x28] sm:$0xf]
          %v3828 = vld [vmem:[#allocation11 + $0x2c] sm:$0xf]
          %v3829 = vld [vmem:[#allocation11 + $0x30] sm:$0xf]
          %v3830 = vld [vmem:[#allocation11 + $0x34] sm:$0xf]
          %v3831 = vld [vmem:[#allocation11 + $0x38] sm:$0xf]
          %v3832 = vld [vmem:[#allocation11 + $0x3c] sm:$0xf]
          %v3833 = vpack.c.bf16 %v3816, %v3816
          %v3850 = vunpack.c.l.b16 %v3817
          %v3851 = vunpack.c.l.b16 %v3818
          %v3852 = vunpack.c.l.b16 %v3819
          %v3853 = vunpack.c.l.b16 %v3820
          %v3854 = vunpack.c.l.b16 %v3821
          %v3855 = vunpack.c.l.b16 %v3822
          %v3856 = vunpack.c.l.b16 %v3823
          %v3857 = vunpack.c.l.b16 %v3824
          %v3858 = vunpack.c.l.b16 %v3825
          %v3859 = vunpack.c.l.b16 %v3826
          %v3860 = vunpack.c.l.b16 %v3827
          %v3861 = vunpack.c.l.b16 %v3828
          %v3862 = vunpack.c.l.b16 %v3829
          %v3863 = vunpack.c.l.b16 %v3830
          %v3864 = vunpack.c.l.b16 %v3831
          %v3865 = vunpack.c.l.b16 %v3832
          %v3866 = vpack.c.b16 %v3851, %v3850
          %v3867 = vpack.c.b16 %v3853, %v3852
          %v3868 = vpack.c.b16 %v3855, %v3854
          %v3869 = vpack.c.b16 %v3857, %v3856
          %v3870 = vpack.c.b16 %v3859, %v3858
          %v3871 = vpack.c.b16 %v3861, %v3860
          %v3872 = vpack.c.b16 %v3863, %v3862
          %v3873 = vpack.c.b16 %v3865, %v3864
          %3882 = vmatprep.subr.bf16.mxu0 0
          %3883 = vmatpush1.bf16.msra.mxu0 %v3873
          %3884 = vmatprep.subr.bf16.mxu0 0
          %3885 = vmatpush1.bf16.msra.mxu0 %v3872
          %3886 = vmatprep.subr.bf16.mxu0 0
          %3887 = vmatpush1.bf16.msra.mxu0 %v3871
          %3888 = vmatprep.subr.bf16.mxu0 0
          %3889 = vmatpush1.bf16.msra.mxu0 %v3870
          %3890 = vmatprep.subr.bf16.mxu0 0
          %3891 = vmatpush1.bf16.msra.mxu0 %v3869
          %3892 = vmatprep.subr.bf16.mxu0 0
          %3893 = vmatpush1.bf16.msra.mxu0 %v3868
          %3894 = vmatprep.subr.bf16.mxu0 0
          %3895 = vmatpush1.bf16.msra.mxu0 %v3867
          %3896 = vmatprep.subr.bf16.mxu0 0
          %3897 = vmatpush1.bf16.msra.mxu0 %v3866
          %3898 = vmatprep.subr.bf16.mxu0 0
          %3899 = vmatpush2.bf16.msra.mxu0 0
          %3900 = vmatprep.subr.bf16.mxu0 0
          %3901 = vmatpush2.bf16.msra.mxu0 0
          %3902 = vmatprep.subr.bf16.mxu0 0
          %3903 = vmatpush2.bf16.msra.mxu0 0
          %3904 = vmatprep.subr.bf16.mxu0 0
          %3905 = vmatpush2.bf16.msra.mxu0 0
          %3906 = vmatprep.subr.bf16.mxu0 0
          %3907 = vmatpush2.bf16.msra.mxu0 0
          %3908 = vmatprep.subr.bf16.mxu0 0
          %3909 = vmatpush2.bf16.msra.mxu0 0
          %3910 = vmatprep.subr.bf16.mxu0 0
          %3911 = vmatpush2.bf16.msra.mxu0 0
          %3912 = vmatprep.subr.bf16.mxu0 0
          %3913 = vmatpush2.bf16.msra.mxu0 0
          %3914 = vmatprep.mubr.bf16.mxu0 0
          %3915 = vmatmul.mubr.bf16.gmra.mxu0 %v3833
          %v3916 = vpop.f32.mrf.mxu0
          %v3917 = vadd.f32 0.0, %v3916
          %v3918 = vpop.f32.mrf.mxu0
          %v3919 = vpop.f32.mrf.mxu0
          %v3920 = vpop.f32.mrf.mxu0
          %3921 = vdwg.mxu0
          %v3922 = vmul.f32 %v3917, %v3917
          %v3923 = vsel %vm3792, %v3922, 0.0
          %3924 = vadd.xlane.f32.xlu0 %v3923
          %v3925 = vpop.xlane.xlu0 %3924
          %v3926 = vadd.f32 %v3925, 1e-12
          %v3927 = vrsqrt.pop %v3926
          %v3928 = vmul.f32 %v3917, %v3927
          %s3929 = scalar_lea.vmem %s766, 1 [#allocation13]
          %3930 = vst.msk [vmem:[%s3929] sm:$0x1] %vm3792, %v3928
        $region112: #{_lambda_.1} parent=83 // pred_fallthru
          _
        %s3931 = sand.u32 %s458, 1
        %s3932 = scalar_lea.sflag [#allocation7], %s3931
        %s3933 = sand.u32 %s458, 1
        %s3934 = smul.addr %s3933, 2
        %s3935 = scalar_lea.vmem [#allocation13], %s3934
        // Predicated region
        $region113: #{_lambda_.1} parent=83 // pred_check
          %p3936 = pneg %p468
        $region114: #{_lambda_.1} parent=83 // pred_check_branch
          %3938 = sbr.rel (%p3936) target = $region116
        $region115: #{_lambda_.1} parent=83 // pred_region
          %s3939 = smul.u32 2, %s41
          %s3941 = ssub.s32 32, 32
          %3942 = vsyncadd %s3932, %s3941
          %s3943 = smul.addr %s3939, 16
          %s3944 = scalar_lea.hbm %s16, %s3943
          %s3945 = sshll.u32 %s3935, 4
          %s3946 = int_to_ptr.vmem [resolvable:$true] %s3945
          %3951 = dma.vmem_to_hbm [thread:$0]  %s3946, 32, %s3944, %s3932, 16, 16, 1
        $region116: #{_lambda_.1} parent=83 // pred_fallthru
          _
      $region84: #{_lambda_.1} parent=5 // pred_fallthru
        _
      %p3952 = scmp.le.s32.totalorder 2, %s32
      // Predicated region
      $region117: #{_lambda_.1} parent=5 // pred_check
        %p3953 = pneg %p3952
      $region118: #{_lambda_.1} parent=5 // pred_check_branch
        %3955 = sbr.rel (%p3953) target = $region120
      $region119: #{_lambda_.1} parent=5 // pred_region
        %s3956 = ssub.s32 %s32, 2
        // Predicated region
        $region121: #{_lambda_.1} parent=119 // pred_check
          %p3957 = pneg %p474
        $region122: #{_lambda_.1} parent=119 // pred_check_branch
          %3959 = sbr.rel (%p3957) target = $region124
        $region123: #{_lambda_.1} parent=119 // pred_region
          %s3960 = sand.u32 %s459, 1
          %s3961 = scalar_lea.sflag [#allocation7], %s3960
          %s3962 = sand.u32 %s459, 1
          %s3963 = smul.addr %s3962, 2
          %s3964 = scalar_lea.vmem [#allocation13], %s3963
          %3965 = dma.done %s3961, 32
        $region124: #{_lambda_.1} parent=119 // pred_fallthru
          _
      $region120: #{_lambda_.1} parent=5 // pred_fallthru
        _
    $region6: #{_lambda_.1} parent=1 // loop_footer
      %s36 = sadd.s32 1, %s32
    $region7: #{_lambda_.1} parent=1 // loop_footer_branch
      %31 = sbr.rel target = $region3
    $region8: #{_lambda_.1} parent=1 // loop_exit
      _
    %3966 = vsyncpa [#allocation6], 1
    %s3967 = scalar_lea.sflag [#allocation6], 1
    %3968 = vsyncpa %s3967, 1
    %3969 = vsyncpa [#allocation9], 1
    %s3970 = scalar_lea.sflag [#allocation9], 1
    %3971 = vsyncpa %s3970, 1
    %3972 = vsyncpa [#allocation12], 1
    %3973 = vsyncpa [#allocation7], 1
    %s3974 = scalar_lea.sflag [#allocation7], 1
    %3975 = vsyncpa %s3974, 1

</llo_original>
